<compile_context>
chip_gen: v7x
topology: tpu7x:2x2x1
jax: 0.10.0
libtpu: 0.0.40
codegen_flags: <defaults>
</compile_context>

<pallas_src>
import jax
import jax.numpy as jnp
from jax import lax
from jax.experimental import pallas as pl
from jax.experimental.pallas import tpu as pltpu


def _decoder_kernel(
    # hoisted teacher-forced per-step tensors
    xg_i_ref, xg_f_ref, xg_g_ref, xg_o_ref,        # (T_dec, B, H) prenet->gate pre-acts
    drop_att_ref, drop_dec_ref,                    # (T_dec, B, H) inverted-dropout masks
    # encoder-side tensors
    memory_ref, pm_ref, maskadd_ref,               # (B,T,E), (B,T,A), (B,T)
    # attention-LSTM recurrent weights (per-gate)
    w_ctx_a_ref, w_hh_a_ref, b_a_ref,              # (4,E,H), (4,H,H), (4,1,H)
    # attention projection weights (location linear folded into conv taps)
    w_q_ref, w_v_ref, w_loc0_ref, w_loc1_ref,      # (H,A), (1,A), (K,A), (K,A)
    # decoder-LSTM weights (per-gate)
    w_ha_d_ref, w_ctx_d_ref, w_hh_d_ref, b_d_ref,  # (4,H,H), (4,E,H), (4,H,H), (4,1,H)
    # output projections
    w_proj_h_ref, w_proj_c_ref, b_proj_ref,        # (H,Min), (E,Min), (1,Min)
    w_gate_h_ref, w_gate_c_ref, b_gate_ref,        # (1,H), (1,E), (1,1)
    # outputs
    mel_ref, gate_ref, align_ref,                  # (T_dec,B,Min), (T_dec,B,1), (T_dec,B,T)
    # scratch (recurrent state)
    att_h, att_c, dec_h, dec_c, att_ctx, aw_pad, awc_pad,
):
    T_dec, B, H = xg_i_ref.shape
    T = memory_ref.shape[1]
    A = pm_ref.shape[2]
    K = w_loc0_ref.shape[0]
    pad = (aw_pad.shape[1] - T) // 2
    f32 = jnp.float32

    # ---- initialize recurrent state (single invocation: runs exactly once) ----
    att_h[...] = jnp.zeros_like(att_h)
    att_c[...] = jnp.zeros_like(att_c)
    dec_h[...] = jnp.zeros_like(dec_h)
    dec_c[...] = jnp.zeros_like(dec_c)
    att_ctx[...] = jnp.zeros_like(att_ctx)
    aw_pad[...] = jnp.zeros_like(aw_pad)        # zero halo never rewritten
    awc_pad[...] = jnp.zeros_like(awc_pad)

    def step(t, carry):
        # -------- Attention LSTMCell (per-gate weights, concat eliminated) --------
        xg = (xg_i_ref[t], xg_f_ref[t], xg_g_ref[t], xg_o_ref[t])
        ctx_prev = att_ctx[...]
        h_prev = att_h[...]

        def a_gate(g):
            return (xg[g]
                    + jnp.dot(ctx_prev, w_ctx_a_ref[g], preferred_element_type=f32)
                    + jnp.dot(h_prev, w_hh_a_ref[g], preferred_element_type=f32)
                    + b_a_ref[g])

        i_a = jax.nn.sigmoid(a_gate(0))
        f_a = jax.nn.sigmoid(a_gate(1))
        g_a = jnp.tanh(a_gate(2))
        o_a = jax.nn.sigmoid(a_gate(3))
        c_a = f_a * att_c[...] + i_a * g_a
        h_a = o_a * jnp.tanh(c_a) * drop_att_ref[t]      # F.dropout(attention_hidden)
        att_c[...] = c_a
        att_h[...] = h_a

        # -------- Location-sensitive attention --------
        pq = jnp.dot(h_a, w_q_ref[...], preferred_element_type=f32)        # (B, A)
        wl0 = w_loc0_ref[...]
        wl1 = w_loc1_ref[...]
        proc = jnp.zeros((B, T, A), f32)
        for k in range(K):                    # conv1d taps over the zero-halo scratch
            s0 = aw_pad[:, k:k + T]           # previous attention weights
            s1 = awc_pad[:, k:k + T]          # cumulative attention weights
            proc = proc + s0[:, :, None] * wl0[k:k + 1, :][None, :, :] \
                        + s1[:, :, None] * wl1[k:k + 1, :][None, :, :]
        energies = jnp.tanh(pq[:, None, :] + proc + pm_ref[...])           # (B, T, A)
        scores = jnp.sum(energies * w_v_ref[...][None, :, :], axis=-1)     # (B, T)
        scores = scores + maskadd_ref[...]    # additive -1e30 on padded positions
        m = jnp.max(scores, axis=1, keepdims=True)
        p = jnp.exp(scores - m)
        new_w = p / jnp.sum(p, axis=1, keepdims=True)                      # softmax over T
        ctx = jnp.sum(new_w[:, :, None] * memory_ref[...], axis=1)         # (B, E)

        awc_new = awc_pad[:, pad:pad + T] + new_w
        aw_pad[:, pad:pad + T] = new_w
        awc_pad[:, pad:pad + T] = awc_new
        att_ctx[...] = ctx

        # -------- Decoder LSTMCell (per-gate weights, concat eliminated) --------
        h_d_prev = dec_h[...]

        def d_gate(g):
            return (jnp.dot(h_a, w_ha_d_ref[g], preferred_element_type=f32)
                    + jnp.dot(ctx, w_ctx_d_ref[g], preferred_element_type=f32)
                    + jnp.dot(h_d_prev, w_hh_d_ref[g], preferred_element_type=f32)
                    + b_d_ref[g])

        i_d = jax.nn.sigmoid(d_gate(0))
        f_d = jax.nn.sigmoid(d_gate(1))
        g_d = jnp.tanh(d_gate(2))
        o_d = jax.nn.sigmoid(d_gate(3))
        c_d = f_d * dec_c[...] + i_d * g_d
        h_d = o_d * jnp.tanh(c_d) * drop_dec_ref[t]      # F.dropout(decoder_hidden)
        dec_c[...] = c_d
        dec_h[...] = h_d

        # -------- Output projections (concat eliminated) --------
        mel = (jnp.dot(h_d, w_proj_h_ref[...], preferred_element_type=f32)
               + jnp.dot(ctx, w_proj_c_ref[...], preferred_element_type=f32)
               + b_proj_ref[...])
        gate = (jnp.sum(h_d * w_gate_h_ref[...], axis=-1, keepdims=True)
                + jnp.sum(ctx * w_gate_c_ref[...], axis=-1, keepdims=True)
                + b_gate_ref[...])
        mel_ref[t] = mel
        gate_ref[t] = gate
        align_ref[t] = new_w
        return carry

    lax.fori_loop(0, T_dec, step, 0)


def init_params(key, cfg):
    n_mel = cfg["n_mel_channels"]
    frames = cfg["n_frames_per_step"]
    Min = n_mel * frames
    E = cfg["encoder_embedding_dim"]
    H = cfg["rnn_dim"]
    A = cfg["attention_dim"]
    P = cfg["prenet_dim"]
    L = cfg["location_inner_dim"]
    K = cfg["location_kernel_size"]
    ks = jax.random.split(key, 19)
    n = lambda k, shape, s=0.1: s * jax.random.normal(k, shape, jnp.float32)
    return dict(
        w_pre1=n(ks[0], (P, Min)),            # TCTRN_Linear weights are (out, in)
        w_pre2=n(ks[1], (P, P)),
        w_ih_a=n(ks[2], (4 * H, P + E)),      # nn.LSTMCell gate order: i, f, g, o
        w_hh_a=n(ks[3], (4 * H, H)),
        b_ih_a=n(ks[4], (4 * H,)),
        b_hh_a=n(ks[5], (4 * H,)),
        w_q=n(ks[6], (A, H)),
        w_mem=n(ks[7], (A, E)),
        w_v=n(ks[8], (1, A)),
        w_conv=n(ks[9], (L, 2, K)),           # Conv1d weight (out_ch, in_ch, K)
        w_locl=n(ks[10], (A, L)),
        w_ih_d=n(ks[11], (4 * H, H + E)),
        w_hh_d=n(ks[12], (4 * H, H)),
        b_ih_d=n(ks[13], (4 * H,)),
        b_hh_d=n(ks[14], (4 * H,)),
        w_proj=n(ks[15], (Min, H + E)),
        b_proj=n(ks[16], (Min,)),
        w_gate=n(ks[17], (1, H + E)),
        b_gate=n(ks[18], (1,)),
    )


def tctrn_decoder_forward(params, memory, decoder_inputs, memory_lengths,
                          dropout_key, cfg):
    n_mel = cfg["n_mel_channels"]
    frames = cfg["n_frames_per_step"]
    H = cfg["rnn_dim"]
    A = cfg["attention_dim"]
    P = cfg["prenet_dim"]
    K = cfg["location_kernel_size"]
    p_att = cfg["p_attention_dropout"]
    p_dec = cfg["p_decoder_dropout"]
    assert K % 2 == 1, "location_kernel_size must be odd (PyTorch same-padding conv)"

    B, T, E = memory.shape
    Min = n_mel * frames
    T_mel = decoder_inputs.shape[2]
    assert T_mel % frames == 0
    T_dec = T_mel // frames
    pad = (K - 1) // 2

    # ---- parse_decoder_inputs + go frame (only the first T_dec rows are consumed) ----
    x = jnp.transpose(decoder_inputs, (0, 2, 1)).reshape(B, T_dec, Min)
    x = jnp.transpose(x, (1, 0, 2))                                  # (T_dec, B, Min)
    go = jnp.zeros((1, B, Min), jnp.float32)
    dec_in = jnp.concatenate([go, x], axis=0)[:T_dec]                # (T_dec, B, Min)

    # ---- deterministic inverted-dropout masks ----
    k1, k2, k3, k4 = jax.random.split(dropout_key, 4)

    def dmask(k, shape, prob):
        if prob <= 0.0:
            return jnp.ones(shape, jnp.float32)
        keep = jax.random.bernoulli(k, 1.0 - prob, shape)
        return keep.astype(jnp.float32) / (1.0 - prob)

    drop_pre1 = dmask(k1, (T_dec, B, P), 0.5)    # prenet dropout is hardcoded training=True
    drop_pre2 = dmask(k2, (T_dec, B, P), 0.5)
    drop_att = dmask(k3, (T_dec, B, H), p_att)
    drop_dec = dmask(k4, (T_dec, B, H), p_dec)

    # ---- prenet hoisted out of the recurrence (teacher forcing => no serial dependence) ----
    h1 = jnp.maximum(jnp.einsum('tbm,pm->tbp', dec_in, params["w_pre1"]), 0.0) * drop_pre1
    h2 = jnp.maximum(jnp.einsum('tbp,qp->tbq', h1, params["w_pre2"]), 0.0) * drop_pre2

    # ---- attention-LSTM prenet-part gate pre-activations, hoisted & split per gate ----
    W_ih_a = params["w_ih_a"]                                        # (4H, P+E)
    xg_all = jnp.einsum('tbp,gp->tbg', h2, W_ih_a[:, :P])            # (T_dec, B, 4H)
    xg_all = xg_all.reshape(T_dec, B, 4, H)
    xg_i, xg_f, xg_g, xg_o = (xg_all[:, :, 0], xg_all[:, :, 1],
                              xg_all[:, :, 2], xg_all[:, :, 3])

    # ---- processed_memory hoisted out of the kernel ----
    pm = jnp.einsum('bte,ae->bta', memory, params["w_mem"])          # (B, T, A)

    # ---- additive attention mask (score_mask_value on padded encoder positions) ----
    padded = jnp.arange(T)[None, :] >= memory_lengths[:, None]
    mask_add = jnp.where(padded, jnp.float32(-1e30), jnp.float32(0.0))   # (B, T)

    # ---- per-gate recurrent weights in x @ W[in,out] layout (concat eliminated) ----
    w_ctx_a = jnp.transpose(W_ih_a[:, P:].reshape(4, H, E), (0, 2, 1))       # (4, E, H)
    w_hh_a = jnp.transpose(params["w_hh_a"].reshape(4, H, H), (0, 2, 1))     # (4, H, H)
    b_a = (params["b_ih_a"] + params["b_hh_a"]).reshape(4, 1, H)

    W_ih_d = params["w_ih_d"]                                        # (4H, H+E)
    w_ha_d = jnp.transpose(W_ih_d[:, :H].reshape(4, H, H), (0, 2, 1))
    w_ctx_d = jnp.transpose(W_ih_d[:, H:].reshape(4, H, E), (0, 2, 1))
    w_hh_d = jnp.transpose(params["w_hh_d"].reshape(4, H, H), (0, 2, 1))
    b_d = (params["b_ih_d"] + params["b_hh_d"]).reshape(4, 1, H)

    # ---- attention projections; fold the location linear (L->A) into the conv taps ----
    w_q_t = params["w_q"].T                                          # (H, A)
    w_v = params["w_v"]                                              # (1, A)
    w_loc0 = jnp.einsum('lk,al->ka', params["w_conv"][:, 0, :], params["w_locl"])  # (K, A)
    w_loc1 = jnp.einsum('lk,al->ka', params["w_conv"][:, 1, :], params["w_locl"])  # (K, A)

    # ---- output projections, split to eliminate the (h_d, ctx) concat ----
    w_proj_h = params["w_proj"][:, :H].T                             # (H, Min)
    w_proj_c = params["w_proj"][:, H:].T                             # (E, Min)
    b_proj = params["b_proj"].reshape(1, Min)
    w_gate_h = params["w_gate"][:, :H]                               # (1, H)
    w_gate_c = params["w_gate"][:, H:]                               # (1, E)
    b_gate = params["b_gate"].reshape(1, 1)

    vmem = pl.BlockSpec(memory_space=pltpu.MemorySpace.VMEM)

    mel_steps, gate_steps, align_steps = pl.pallas_call(
        _decoder_kernel,
        out_shape=(
            jax.ShapeDtypeStruct((T_dec, B, Min), jnp.float32),
            jax.ShapeDtypeStruct((T_dec, B, 1), jnp.float32),
            jax.ShapeDtypeStruct((T_dec, B, T), jnp.float32),
        ),
        in_specs=[vmem] * 26,
        out_specs=(vmem, vmem, vmem),
        scratch_shapes=[
            pltpu.VMEM((B, H), jnp.float32),              # attention_hidden
            pltpu.VMEM((B, H), jnp.float32),              # attention_cell
            pltpu.VMEM((B, H), jnp.float32),              # decoder_hidden
            pltpu.VMEM((B, H), jnp.float32),              # decoder_cell
            pltpu.VMEM((B, E), jnp.float32),              # attention_context
            pltpu.VMEM((B, T + 2 * pad), jnp.float32),    # attention_weights (zero halo)
            pltpu.VMEM((B, T + 2 * pad), jnp.float32),    # attention_weights_cum (zero halo)
        ],
    )(xg_i, xg_f, xg_g, xg_o, drop_att, drop_dec,
      memory, pm, mask_add,
      w_ctx_a, w_hh_a, b_a,
      w_q_t, w_v, w_loc0, w_loc1,
      w_ha_d, w_ctx_d, w_hh_d, b_d,
      w_proj_h, w_proj_c, b_proj, w_gate_h, w_gate_c, b_gate)

    # ---- parse_decoder_outputs ----
    alignments = jnp.transpose(align_steps, (1, 0, 2))               # (B, T_dec, T)
    gate_outputs = jnp.transpose(gate_steps[:, :, 0], (1, 0))        # (B, T_dec)
    mel = jnp.transpose(mel_steps, (1, 0, 2)).reshape(B, T_dec * frames, n_mel)
    mel = jnp.transpose(mel, (0, 2, 1))                              # (B, n_mel, T_dec*frames)
    return mel, gate_outputs, alignments


if __name__ == "__main__":
    cfg = dict(
        n_mel_channels=8,
        n_frames_per_step=2,
        encoder_embedding_dim=16,
        rnn_dim=32,                 # attention_rnn_dim == decoder_rnn_dim (required by module)
        attention_dim=16,
        prenet_dim=32,
        location_inner_dim=8,
        location_kernel_size=3,
        p_attention_dropout=0.1,
        p_decoder_dropout=0.1,
    )
    B, T_in, T_mel = 2, 8, 12

    key = jax.random.PRNGKey(0)
    kp, km, kd, kdrop = jax.random.split(key, 4)
    params = init_params(kp, cfg)
    memory = jax.random.normal(km, (B, T_in, cfg["encoder_embedding_dim"]), jnp.float32)
    decoder_inputs = jax.random.normal(kd, (B, cfg["n_mel_channels"], T_mel), jnp.float32)
    memory_lengths = jnp.array([T_in, 5], jnp.int32)

    fwd = jax.jit(lambda p, m, d, ml, k: tctrn_decoder_forward(p, m, d, ml, k, cfg))
    mel, gate, align = fwd(params, memory, decoder_inputs, memory_lengths, kdrop)
    jax.block_until_ready((mel, gate, align))

    T_dec = T_mel // cfg["n_frames_per_step"]
    assert mel.shape == (B, cfg["n_mel_channels"], T_dec * cfg["n_frames_per_step"])
    assert gate.shape == (B, T_dec)
    assert align.shape == (B, T_dec, T_in)
    assert bool(jnp.all(jnp.isfinite(mel)))
    assert bool(jnp.all(jnp.isfinite(gate)))
    assert bool(jnp.all(jnp.isfinite(align)))
    # attention weights are a softmax over encoder time -> rows sum to 1
    assert bool(jnp.allclose(jnp.sum(align, axis=-1), 1.0, atol=1e-4))
    # padded encoder positions (batch 1, t >= 5) must receive zero attention
    assert bool(jnp.max(jnp.abs(align[1, :, 5:])) < 1e-6)
    print("KERNEL_OK")
</pallas_src>

<mosaic_0001>
module attributes {stable_mosaic.version = 11 : i64} {
  func.func @_decoder_kernel(%arg0: memref<6x2x32xf32, #tpu.memory_space<vmem>>, %arg1: memref<6x2x32xf32, #tpu.memory_space<vmem>>, %arg2: memref<6x2x32xf32, #tpu.memory_space<vmem>>, %arg3: memref<6x2x32xf32, #tpu.memory_space<vmem>>, %arg4: memref<6x2x32xf32, #tpu.memory_space<vmem>>, %arg5: memref<6x2x32xf32, #tpu.memory_space<vmem>>, %arg6: memref<2x8x16xf32, #tpu.memory_space<vmem>>, %arg7: memref<2x8x16xf32, #tpu.memory_space<vmem>>, %arg8: memref<2x8xf32, #tpu.memory_space<vmem>>, %arg9: memref<4x16x32xf32, #tpu.memory_space<vmem>>, %arg10: memref<4x32x32xf32, #tpu.memory_space<vmem>>, %arg11: memref<4x1x32xf32, #tpu.memory_space<vmem>>, %arg12: memref<32x16xf32, #tpu.memory_space<vmem>>, %arg13: memref<1x16xf32, #tpu.memory_space<vmem>>, %arg14: memref<3x16xf32, #tpu.memory_space<vmem>>, %arg15: memref<3x16xf32, #tpu.memory_space<vmem>>, %arg16: memref<4x32x32xf32, #tpu.memory_space<vmem>>, %arg17: memref<4x16x32xf32, #tpu.memory_space<vmem>>, %arg18: memref<4x32x32xf32, #tpu.memory_space<vmem>>, %arg19: memref<4x1x32xf32, #tpu.memory_space<vmem>>, %arg20: memref<32x16xf32, #tpu.memory_space<vmem>>, %arg21: memref<16x16xf32, #tpu.memory_space<vmem>>, %arg22: memref<1x16xf32, #tpu.memory_space<vmem>>, %arg23: memref<1x32xf32, #tpu.memory_space<vmem>>, %arg24: memref<1x16xf32, #tpu.memory_space<vmem>>, %arg25: memref<1x1xf32, #tpu.memory_space<vmem>>, %arg26: memref<6x2x16xf32, #tpu.memory_space<vmem>>, %arg27: memref<6x2x1xf32, #tpu.memory_space<vmem>>, %arg28: memref<6x2x8xf32, #tpu.memory_space<vmem>>, %arg29: memref<2x32xf32, #tpu.memory_space<vmem>>, %arg30: memref<2x32xf32, #tpu.memory_space<vmem>>, %arg31: memref<2x32xf32, #tpu.memory_space<vmem>>, %arg32: memref<2x32xf32, #tpu.memory_space<vmem>>, %arg33: memref<2x16xf32, #tpu.memory_space<vmem>>, %arg34: memref<2x10xf32, #tpu.memory_space<vmem>>, %arg35: memref<2x10xf32, #tpu.memory_space<vmem>>) attributes {dimension_semantics = [], scalar_prefetch = 0 : i64, scratch_operands = 7 : i64, tpu.core_type = #tpu.core_type<tc>} {
    %cst = arith.constant 0.000000e+00 : f32
    %0 = vector.broadcast %cst : f32 to vector<2x32xf32>
    %c0 = arith.constant 0 : index
    %c0_0 = arith.constant 0 : index
    %1 = vector.load %arg29[%c0, %c0_0] : memref<2x32xf32, #tpu.memory_space<vmem>>, vector<2x32xf32>
    tpu.vector_store %arg29[%c0, %c0_0], %0 {strides = array<i32>} : memref<2x32xf32, #tpu.memory_space<vmem>>, vector<2x32xf32>,
    %cst_1 = arith.constant 0.000000e+00 : f32
    %2 = vector.broadcast %cst_1 : f32 to vector<2x32xf32>
    %c0_2 = arith.constant 0 : index
    %c0_3 = arith.constant 0 : index
    %3 = vector.load %arg30[%c0_2, %c0_3] : memref<2x32xf32, #tpu.memory_space<vmem>>, vector<2x32xf32>
    tpu.vector_store %arg30[%c0_2, %c0_3], %2 {strides = array<i32>} : memref<2x32xf32, #tpu.memory_space<vmem>>, vector<2x32xf32>,
    %cst_4 = arith.constant 0.000000e+00 : f32
    %4 = vector.broadcast %cst_4 : f32 to vector<2x32xf32>
    %c0_5 = arith.constant 0 : index
    %c0_6 = arith.constant 0 : index
    %5 = vector.load %arg31[%c0_5, %c0_6] : memref<2x32xf32, #tpu.memory_space<vmem>>, vector<2x32xf32>
    tpu.vector_store %arg31[%c0_5, %c0_6], %4 {strides = array<i32>} : memref<2x32xf32, #tpu.memory_space<vmem>>, vector<2x32xf32>,
    %cst_7 = arith.constant 0.000000e+00 : f32
    %6 = vector.broadcast %cst_7 : f32 to vector<2x32xf32>
    %c0_8 = arith.constant 0 : index
    %c0_9 = arith.constant 0 : index
    %7 = vector.load %arg32[%c0_8, %c0_9] : memref<2x32xf32, #tpu.memory_space<vmem>>, vector<2x32xf32>
    tpu.vector_store %arg32[%c0_8, %c0_9], %6 {strides = array<i32>} : memref<2x32xf32, #tpu.memory_space<vmem>>, vector<2x32xf32>,
    %cst_10 = arith.constant 0.000000e+00 : f32
    %8 = vector.broadcast %cst_10 : f32 to vector<2x16xf32>
    %c0_11 = arith.constant 0 : index
    %c0_12 = arith.constant 0 : index
    %9 = vector.load %arg33[%c0_11, %c0_12] : memref<2x16xf32, #tpu.memory_space<vmem>>, vector<2x16xf32>
    tpu.vector_store %arg33[%c0_11, %c0_12], %8 {strides = array<i32>} : memref<2x16xf32, #tpu.memory_space<vmem>>, vector<2x16xf32>,
    %cst_13 = arith.constant 0.000000e+00 : f32
    %10 = vector.broadcast %cst_13 : f32 to vector<2x10xf32>
    %c0_14 = arith.constant 0 : index
    %c0_15 = arith.constant 0 : index
    %11 = vector.load %arg34[%c0_14, %c0_15] : memref<2x10xf32, #tpu.memory_space<vmem>>, vector<2x10xf32>
    tpu.vector_store %arg34[%c0_14, %c0_15], %10 {strides = array<i32>} : memref<2x10xf32, #tpu.memory_space<vmem>>, vector<2x10xf32>,
    %cst_16 = arith.constant 0.000000e+00 : f32
    %12 = vector.broadcast %cst_16 : f32 to vector<2x10xf32>
    %c0_17 = arith.constant 0 : index
    %c0_18 = arith.constant 0 : index
    %13 = vector.load %arg35[%c0_17, %c0_18] : memref<2x10xf32, #tpu.memory_space<vmem>>, vector<2x10xf32>
    tpu.vector_store %arg35[%c0_17, %c0_18], %12 {strides = array<i32>} : memref<2x10xf32, #tpu.memory_space<vmem>>, vector<2x10xf32>,
    %c0_i32 = arith.constant 0 : i32
    %c6_i32 = arith.constant 6 : i32
    %14 = arith.addi %c0_i32, %c6_i32 : i32
    %c1_i32 = arith.constant 1 : i32
    scf.for %arg36 = %c0_i32 to %14 step %c1_i32  : i32 {
      %15 = arith.index_cast %arg36 : i32 to index
      %c0_20 = arith.constant 0 : index
      %c0_21 = arith.constant 0 : index
      %16 = vector.load %arg0[%15, %c0_20, %c0_21] : memref<6x2x32xf32, #tpu.memory_space<vmem>>, vector<1x2x32xf32>
      %17 = vector.shape_cast %16 : vector<1x2x32xf32> to vector<2x32xf32>
      %18 = arith.index_cast %arg36 : i32 to index
      %c0_22 = arith.constant 0 : index
      %c0_23 = arith.constant 0 : index
      %19 = vector.load %arg1[%18, %c0_22, %c0_23] : memref<6x2x32xf32, #tpu.memory_space<vmem>>, vector<1x2x32xf32>
      %20 = vector.shape_cast %19 : vector<1x2x32xf32> to vector<2x32xf32>
      %21 = arith.index_cast %arg36 : i32 to index
      %c0_24 = arith.constant 0 : index
      %c0_25 = arith.constant 0 : index
      %22 = vector.load %arg2[%21, %c0_24, %c0_25] : memref<6x2x32xf32, #tpu.memory_space<vmem>>, vector<1x2x32xf32>
      %23 = vector.shape_cast %22 : vector<1x2x32xf32> to vector<2x32xf32>
      %24 = arith.index_cast %arg36 : i32 to index
      %c0_26 = arith.constant 0 : index
      %c0_27 = arith.constant 0 : index
      %25 = vector.load %arg3[%24, %c0_26, %c0_27] : memref<6x2x32xf32, #tpu.memory_space<vmem>>, vector<1x2x32xf32>
      %26 = vector.shape_cast %25 : vector<1x2x32xf32> to vector<2x32xf32>
      %c0_28 = arith.constant 0 : index
      %c0_29 = arith.constant 0 : index
      %27 = vector.load %arg33[%c0_28, %c0_29] : memref<2x16xf32, #tpu.memory_space<vmem>>, vector<2x16xf32>
      %c0_30 = arith.constant 0 : index
      %c0_31 = arith.constant 0 : index
      %28 = vector.load %arg29[%c0_30, %c0_31] : memref<2x32xf32, #tpu.memory_space<vmem>>, vector<2x32xf32>
      %c0_32 = arith.constant 0 : index
      %c0_33 = arith.constant 0 : index
      %c0_34 = arith.constant 0 : index
      %29 = vector.load %arg9[%c0_32, %c0_33, %c0_34] : memref<4x16x32xf32, #tpu.memory_space<vmem>>, vector<1x16x32xf32>
      %30 = vector.shape_cast %29 : vector<1x16x32xf32> to vector<16x32xf32>
      %cst_35 = arith.constant dense<0.000000e+00> : vector<2x32xf32>
      %31 = tpu.matmul %27, %30, %cst_35 {dimension_numbers = #tpu.dot_dimension_numbers<[1], [0], [0], [1], [0, 0, 1, 1], [], []>} : vector<2x16xf32>, vector<16x32xf32>, vector<2x32xf32> -> vector<2x32xf32>
      %32 = arith.addf %17, %31 : vector<2x32xf32>
      %c0_36 = arith.constant 0 : index
      %c0_37 = arith.constant 0 : index
      %c0_38 = arith.constant 0 : index
      %33 = vector.load %arg10[%c0_36, %c0_37, %c0_38] : memref<4x32x32xf32, #tpu.memory_space<vmem>>, vector<1x32x32xf32>
      %34 = vector.shape_cast %33 : vector<1x32x32xf32> to vector<32x32xf32>
      %cst_39 = arith.constant dense<0.000000e+00> : vector<2x32xf32>
      %35 = tpu.matmul %28, %34, %cst_39 {dimension_numbers = #tpu.dot_dimension_numbers<[1], [0], [0], [1], [0, 0, 1, 1], [], []>} : vector<2x32xf32>, vector<32x32xf32>, vector<2x32xf32> -> vector<2x32xf32>
      %36 = arith.addf %32, %35 : vector<2x32xf32>
      %c0_40 = arith.constant 0 : index
      %c0_41 = arith.constant 0 : index
      %c0_42 = arith.constant 0 : index
      %37 = vector.load %arg11[%c0_40, %c0_41, %c0_42] : memref<4x1x32xf32, #tpu.memory_space<vmem>>, vector<1x1x32xf32>
      %38 = vector.shape_cast %37 : vector<1x1x32xf32> to vector<1x32xf32>
      %39 = vector.broadcast %38 : vector<1x32xf32> to vector<2x32xf32>
      %40 = arith.addf %36, %39 : vector<2x32xf32>
      %41 = arith.negf %40 : vector<2x32xf32>
      %42 = math.exp %41 : vector<2x32xf32>
      %cst_43 = arith.constant 1.000000e+00 : f32
      %43 = vector.broadcast %cst_43 : f32 to vector<2x32xf32>
      %44 = arith.addf %43, %42 : vector<2x32xf32>
      %45 = arith.divf %43, %44 : vector<2x32xf32>
      %c1 = arith.constant 1 : index
      %c0_44 = arith.constant 0 : index
      %c0_45 = arith.constant 0 : index
      %46 = vector.load %arg9[%c1, %c0_44, %c0_45] : memref<4x16x32xf32, #tpu.memory_space<vmem>>, vector<1x16x32xf32>
      %47 = vector.shape_cast %46 : vector<1x16x32xf32> to vector<16x32xf32>
      %cst_46 = arith.constant dense<0.000000e+00> : vector<2x32xf32>
      %48 = tpu.matmul %27, %47, %cst_46 {dimension_numbers = #tpu.dot_dimension_numbers<[1], [0], [0], [1], [0, 0, 1, 1], [], []>} : vector<2x16xf32>, vector<16x32xf32>, vector<2x32xf32> -> vector<2x32xf32>
      %49 = arith.addf %20, %48 : vector<2x32xf32>
      %c1_47 = arith.constant 1 : index
      %c0_48 = arith.constant 0 : index
      %c0_49 = arith.constant 0 : index
      %50 = vector.load %arg10[%c1_47, %c0_48, %c0_49] : memref<4x32x32xf32, #tpu.memory_space<vmem>>, vector<1x32x32xf32>
      %51 = vector.shape_cast %50 : vector<1x32x32xf32> to vector<32x32xf32>
      %cst_50 = arith.constant dense<0.000000e+00> : vector<2x32xf32>
      %52 = tpu.matmul %28, %51, %cst_50 {dimension_numbers = #tpu.dot_dimension_numbers<[1], [0], [0], [1], [0, 0, 1, 1], [], []>} : vector<2x32xf32>, vector<32x32xf32>, vector<2x32xf32> -> vector<2x32xf32>
      %53 = arith.addf %49, %52 : vector<2x32xf32>
      %c1_51 = arith.constant 1 : index
      %c0_52 = arith.constant 0 : index
      %c0_53 = arith.constant 0 : index
      %54 = vector.load %arg11[%c1_51, %c0_52, %c0_53] : memref<4x1x32xf32, #tpu.memory_space<vmem>>, vector<1x1x32xf32>
      %55 = vector.shape_cast %54 : vector<1x1x32xf32> to vector<1x32xf32>
      %56 = vector.broadcast %55 : vector<1x32xf32> to vector<2x32xf32>
      %57 = arith.addf %53, %56 : vector<2x32xf32>
      %58 = arith.negf %57 : vector<2x32xf32>
      %59 = math.exp %58 : vector<2x32xf32>
      %cst_54 = arith.constant 1.000000e+00 : f32
      %60 = vector.broadcast %cst_54 : f32 to vector<2x32xf32>
      %61 = arith.addf %60, %59 : vector<2x32xf32>
      %62 = arith.divf %60, %61 : vector<2x32xf32>
      %c2 = arith.constant 2 : index
      %c0_55 = arith.constant 0 : index
      %c0_56 = arith.constant 0 : index
      %63 = vector.load %arg9[%c2, %c0_55, %c0_56] : memref<4x16x32xf32, #tpu.memory_space<vmem>>, vector<1x16x32xf32>
      %64 = vector.shape_cast %63 : vector<1x16x32xf32> to vector<16x32xf32>
      %cst_57 = arith.constant dense<0.000000e+00> : vector<2x32xf32>
      %65 = tpu.matmul %27, %64, %cst_57 {dimension_numbers = #tpu.dot_dimension_numbers<[1], [0], [0], [1], [0, 0, 1, 1], [], []>} : vector<2x16xf32>, vector<16x32xf32>, vector<2x32xf32> -> vector<2x32xf32>
      %66 = arith.addf %23, %65 : vector<2x32xf32>
      %c2_58 = arith.constant 2 : index
      %c0_59 = arith.constant 0 : index
      %c0_60 = arith.constant 0 : index
      %67 = vector.load %arg10[%c2_58, %c0_59, %c0_60] : memref<4x32x32xf32, #tpu.memory_space<vmem>>, vector<1x32x32xf32>
      %68 = vector.shape_cast %67 : vector<1x32x32xf32> to vector<32x32xf32>
      %cst_61 = arith.constant dense<0.000000e+00> : vector<2x32xf32>
      %69 = tpu.matmul %28, %68, %cst_61 {dimension_numbers = #tpu.dot_dimension_numbers<[1], [0], [0], [1], [0, 0, 1, 1], [], []>} : vector<2x32xf32>, vector<32x32xf32>, vector<2x32xf32> -> vector<2x32xf32>
      %70 = arith.addf %66, %69 : vector<2x32xf32>
      %c2_62 = arith.constant 2 : index
      %c0_63 = arith.constant 0 : index
      %c0_64 = arith.constant 0 : index
      %71 = vector.load %arg11[%c2_62, %c0_63, %c0_64] : memref<4x1x32xf32, #tpu.memory_space<vmem>>, vector<1x1x32xf32>
      %72 = vector.shape_cast %71 : vector<1x1x32xf32> to vector<1x32xf32>
      %73 = vector.broadcast %72 : vector<1x32xf32> to vector<2x32xf32>
      %74 = arith.addf %70, %73 : vector<2x32xf32>
      %75 = math.tanh %74 : vector<2x32xf32>
      %c3 = arith.constant 3 : index
      %c0_65 = arith.constant 0 : index
      %c0_66 = arith.constant 0 : index
      %76 = vector.load %arg9[%c3, %c0_65, %c0_66] : memref<4x16x32xf32, #tpu.memory_space<vmem>>, vector<1x16x32xf32>
      %77 = vector.shape_cast %76 : vector<1x16x32xf32> to vector<16x32xf32>
      %cst_67 = arith.constant dense<0.000000e+00> : vector<2x32xf32>
      %78 = tpu.matmul %27, %77, %cst_67 {dimension_numbers = #tpu.dot_dimension_numbers<[1], [0], [0], [1], [0, 0, 1, 1], [], []>} : vector<2x16xf32>, vector<16x32xf32>, vector<2x32xf32> -> vector<2x32xf32>
      %79 = arith.addf %26, %78 : vector<2x32xf32>
      %c3_68 = arith.constant 3 : index
      %c0_69 = arith.constant 0 : index
      %c0_70 = arith.constant 0 : index
      %80 = vector.load %arg10[%c3_68, %c0_69, %c0_70] : memref<4x32x32xf32, #tpu.memory_space<vmem>>, vector<1x32x32xf32>
      %81 = vector.shape_cast %80 : vector<1x32x32xf32> to vector<32x32xf32>
      %cst_71 = arith.constant dense<0.000000e+00> : vector<2x32xf32>
      %82 = tpu.matmul %28, %81, %cst_71 {dimension_numbers = #tpu.dot_dimension_numbers<[1], [0], [0], [1], [0, 0, 1, 1], [], []>} : vector<2x32xf32>, vector<32x32xf32>, vector<2x32xf32> -> vector<2x32xf32>
      %83 = arith.addf %79, %82 : vector<2x32xf32>
      %c3_72 = arith.constant 3 : index
      %c0_73 = arith.constant 0 : index
      %c0_74 = arith.constant 0 : index
      %84 = vector.load %arg11[%c3_72, %c0_73, %c0_74] : memref<4x1x32xf32, #tpu.memory_space<vmem>>, vector<1x1x32xf32>
      %85 = vector.shape_cast %84 : vector<1x1x32xf32> to vector<1x32xf32>
      %86 = vector.broadcast %85 : vector<1x32xf32> to vector<2x32xf32>
      %87 = arith.addf %83, %86 : vector<2x32xf32>
      %88 = arith.negf %87 : vector<2x32xf32>
      %89 = math.exp %88 : vector<2x32xf32>
      %cst_75 = arith.constant 1.000000e+00 : f32
      %90 = vector.broadcast %cst_75 : f32 to vector<2x32xf32>
      %91 = arith.addf %90, %89 : vector<2x32xf32>
      %92 = arith.divf %90, %91 : vector<2x32xf32>
      %c0_76 = arith.constant 0 : index
      %c0_77 = arith.constant 0 : index
      %93 = vector.load %arg30[%c0_76, %c0_77] : memref<2x32xf32, #tpu.memory_space<vmem>>, vector<2x32xf32>
      %94 = arith.mulf %62, %93 : vector<2x32xf32>
      %95 = arith.mulf %45, %75 : vector<2x32xf32>
      %96 = arith.addf %94, %95 : vector<2x32xf32>
      %97 = math.tanh %96 : vector<2x32xf32>
      %98 = arith.mulf %92, %97 : vector<2x32xf32>
      %99 = arith.index_cast %arg36 : i32 to index
      %c0_78 = arith.constant 0 : index
      %c0_79 = arith.constant 0 : index
      %100 = vector.load %arg4[%99, %c0_78, %c0_79] : memref<6x2x32xf32, #tpu.memory_space<vmem>>, vector<1x2x32xf32>
      %101 = vector.shape_cast %100 : vector<1x2x32xf32> to vector<2x32xf32>
      %102 = arith.mulf %98, %101 : vector<2x32xf32>
      %c0_80 = arith.constant 0 : index
      %c0_81 = arith.constant 0 : index
      %103 = vector.load %arg30[%c0_80, %c0_81] : memref<2x32xf32, #tpu.memory_space<vmem>>, vector<2x32xf32>
      tpu.vector_store %arg30[%c0_80, %c0_81], %96 {strides = array<i32>} : memref<2x32xf32, #tpu.memory_space<vmem>>, vector<2x32xf32>,
      %c0_82 = arith.constant 0 : index
      %c0_83 = arith.constant 0 : index
      %104 = vector.load %arg29[%c0_82, %c0_83] : memref<2x32xf32, #tpu.memory_space<vmem>>, vector<2x32xf32>
      tpu.vector_store %arg29[%c0_82, %c0_83], %102 {strides = array<i32>} : memref<2x32xf32, #tpu.memory_space<vmem>>, vector<2x32xf32>,
      %c0_84 = arith.constant 0 : index
      %c0_85 = arith.constant 0 : index
      %105 = vector.load %arg12[%c0_84, %c0_85] : memref<32x16xf32, #tpu.memory_space<vmem>>, vector<32x16xf32>
      %cst_86 = arith.constant dense<0.000000e+00> : vector<2x16xf32>
      %106 = tpu.matmul %102, %105, %cst_86 {dimension_numbers = #tpu.dot_dimension_numbers<[1], [0], [0], [1], [0, 0, 1, 1], [], []>} : vector<2x32xf32>, vector<32x16xf32>, vector<2x16xf32> -> vector<2x16xf32>
      %c0_87 = arith.constant 0 : index
      %c0_88 = arith.constant 0 : index
      %107 = vector.load %arg14[%c0_87, %c0_88] : memref<3x16xf32, #tpu.memory_space<vmem>>, vector<3x16xf32>
      %c0_89 = arith.constant 0 : index
      %c0_90 = arith.constant 0 : index
      %108 = vector.load %arg15[%c0_89, %c0_90] : memref<3x16xf32, #tpu.memory_space<vmem>>, vector<3x16xf32>
      %cst_91 = arith.constant 0.000000e+00 : f32
      %109 = vector.broadcast %cst_91 : f32 to vector<2x8x16xf32>
      %c0_92 = arith.constant 0 : index
      %c0_93 = arith.constant 0 : index
      %110 = vector.load %arg34[%c0_92, %c0_93] : memref<2x10xf32, #tpu.memory_space<vmem>>, vector<2x8xf32>
      %c0_94 = arith.constant 0 : index
      %c0_95 = arith.constant 0 : index
      %111 = vector.load %arg35[%c0_94, %c0_95] : memref<2x10xf32, #tpu.memory_space<vmem>>, vector<2x8xf32>
      %112 = vector.shape_cast %110 : vector<2x8xf32> to vector<2x8x1xf32>
      %113 = vector.extract_strided_slice %107 {offsets = [0, 0], sizes = [1, 16], strides = [1, 1]} : vector<3x16xf32> to vector<1x16xf32>
      %114 = vector.shape_cast %113 : vector<1x16xf32> to vector<1x1x16xf32>
      %115 = vector.broadcast %112 : vector<2x8x1xf32> to vector<2x8x16xf32>
      %116 = vector.broadcast %114 : vector<1x1x16xf32> to vector<2x8x16xf32>
      %117 = arith.mulf %115, %116 : vector<2x8x16xf32>
      %118 = arith.addf %109, %117 : vector<2x8x16xf32>
      %119 = vector.shape_cast %111 : vector<2x8xf32> to vector<2x8x1xf32>
      %120 = vector.extract_strided_slice %108 {offsets = [0, 0], sizes = [1, 16], strides = [1, 1]} : vector<3x16xf32> to vector<1x16xf32>
      %121 = vector.shape_cast %120 : vector<1x16xf32> to vector<1x1x16xf32>
      %122 = vector.broadcast %119 : vector<2x8x1xf32> to vector<2x8x16xf32>
      %123 = vector.broadcast %121 : vector<1x1x16xf32> to vector<2x8x16xf32>
      %124 = arith.mulf %122, %123 : vector<2x8x16xf32>
      %125 = arith.addf %118, %124 : vector<2x8x16xf32>
      %c0_96 = arith.constant 0 : index
      %c1_97 = arith.constant 1 : index
      %126 = vector.load %arg34[%c0_96, %c1_97] : memref<2x10xf32, #tpu.memory_space<vmem>>, vector<2x8xf32>
      %c0_98 = arith.constant 0 : index
      %c1_99 = arith.constant 1 : index
      %127 = vector.load %arg35[%c0_98, %c1_99] : memref<2x10xf32, #tpu.memory_space<vmem>>, vector<2x8xf32>
      %128 = vector.shape_cast %126 : vector<2x8xf32> to vector<2x8x1xf32>
      %129 = vector.extract_strided_slice %107 {offsets = [1, 0], sizes = [1, 16], strides = [1, 1]} : vector<3x16xf32> to vector<1x16xf32>
      %130 = vector.shape_cast %129 : vector<1x16xf32> to vector<1x1x16xf32>
      %131 = vector.broadcast %128 : vector<2x8x1xf32> to vector<2x8x16xf32>
      %132 = vector.broadcast %130 : vector<1x1x16xf32> to vector<2x8x16xf32>
      %133 = arith.mulf %131, %132 : vector<2x8x16xf32>
      %134 = arith.addf %125, %133 : vector<2x8x16xf32>
      %135 = vector.shape_cast %127 : vector<2x8xf32> to vector<2x8x1xf32>
      %136 = vector.extract_strided_slice %108 {offsets = [1, 0], sizes = [1, 16], strides = [1, 1]} : vector<3x16xf32> to vector<1x16xf32>
      %137 = vector.shape_cast %136 : vector<1x16xf32> to vector<1x1x16xf32>
      %138 = vector.broadcast %135 : vector<2x8x1xf32> to vector<2x8x16xf32>
      %139 = vector.broadcast %137 : vector<1x1x16xf32> to vector<2x8x16xf32>
      %140 = arith.mulf %138, %139 : vector<2x8x16xf32>
      %141 = arith.addf %134, %140 : vector<2x8x16xf32>
      %c0_100 = arith.constant 0 : index
      %c2_101 = arith.constant 2 : index
      %142 = vector.load %arg34[%c0_100, %c2_101] : memref<2x10xf32, #tpu.memory_space<vmem>>, vector<2x8xf32>
      %c0_102 = arith.constant 0 : index
      %c2_103 = arith.constant 2 : index
      %143 = vector.load %arg35[%c0_102, %c2_103] : memref<2x10xf32, #tpu.memory_space<vmem>>, vector<2x8xf32>
      %144 = vector.shape_cast %142 : vector<2x8xf32> to vector<2x8x1xf32>
      %145 = vector.extract_strided_slice %107 {offsets = [2, 0], sizes = [1, 16], strides = [1, 1]} : vector<3x16xf32> to vector<1x16xf32>
      %146 = vector.shape_cast %145 : vector<1x16xf32> to vector<1x1x16xf32>
      %147 = vector.broadcast %144 : vector<2x8x1xf32> to vector<2x8x16xf32>
      %148 = vector.broadcast %146 : vector<1x1x16xf32> to vector<2x8x16xf32>
      %149 = arith.mulf %147, %148 : vector<2x8x16xf32>
      %150 = arith.addf %141, %149 : vector<2x8x16xf32>
      %151 = vector.shape_cast %143 : vector<2x8xf32> to vector<2x8x1xf32>
      %152 = vector.extract_strided_slice %108 {offsets = [2, 0], sizes = [1, 16], strides = [1, 1]} : vector<3x16xf32> to vector<1x16xf32>
      %153 = vector.shape_cast %152 : vector<1x16xf32> to vector<1x1x16xf32>
      %154 = vector.broadcast %151 : vector<2x8x1xf32> to vector<2x8x16xf32>
      %155 = vector.broadcast %153 : vector<1x1x16xf32> to vector<2x8x16xf32>
      %156 = arith.mulf %154, %155 : vector<2x8x16xf32>
      %157 = arith.addf %150, %156 : vector<2x8x16xf32>
      %158 = vector.shape_cast %106 : vector<2x16xf32> to vector<2x1x16xf32>
      %159 = vector.broadcast %158 : vector<2x1x16xf32> to vector<2x8x16xf32>
      %160 = arith.addf %159, %157 : vector<2x8x16xf32>
      %c0_104 = arith.constant 0 : index
      %c0_105 = arith.constant 0 : index
      %c0_106 = arith.constant 0 : index
      %161 = vector.load %arg7[%c0_104, %c0_105, %c0_106] : memref<2x8x16xf32, #tpu.memory_space<vmem>>, vector<2x8x16xf32>
      %162 = arith.addf %160, %161 : vector<2x8x16xf32>
      %163 = math.tanh %162 : vector<2x8x16xf32>
      %c0_107 = arith.constant 0 : index
      %c0_108 = arith.constant 0 : index
      %164 = vector.load %arg13[%c0_107, %c0_108] : memref<1x16xf32, #tpu.memory_space<vmem>>, vector<1x16xf32>
      %165 = vector.shape_cast %164 : vector<1x16xf32> to vector<1x1x16xf32>
      %166 = vector.broadcast %165 : vector<1x1x16xf32> to vector<2x8x16xf32>
      %167 = arith.mulf %163, %166 : vector<2x8x16xf32>
      %cst_109 = arith.constant dense<0.000000e+00> : vector<2x8xf32>
      %168 = vector.multi_reduction <add>, %167, %cst_109 [2] : vector<2x8x16xf32> to vector<2x8xf32>
      %c0_110 = arith.constant 0 : index
      %c0_111 = arith.constant 0 : index
      %169 = vector.load %arg8[%c0_110, %c0_111] : memref<2x8xf32, #tpu.memory_space<vmem>>, vector<2x8xf32>
      %170 = arith.addf %168, %169 : vector<2x8xf32>
      %cst_112 = arith.constant dense<0xFF800000> : vector<2xf32>
      %171 = vector.multi_reduction <maximumf>, %170, %cst_112 [1] : vector<2x8xf32> to vector<2xf32>
      %172 = vector.shape_cast %171 : vector<2xf32> to vector<2x1xf32>
      %173 = vector.broadcast %172 : vector<2x1xf32> to vector<2x8xf32>
      %174 = arith.subf %170, %173 : vector<2x8xf32>
      %175 = math.exp %174 : vector<2x8xf32>
      %cst_113 = arith.constant dense<0.000000e+00> : vector<2xf32>
      %176 = vector.multi_reduction <add>, %175, %cst_113 [1] : vector<2x8xf32> to vector<2xf32>
      %177 = vector.shape_cast %176 : vector<2xf32> to vector<2x1xf32>
      %178 = vector.broadcast %177 : vector<2x1xf32> to vector<2x8xf32>
      %179 = arith.divf %175, %178 : vector<2x8xf32>
      %180 = vector.shape_cast %179 : vector<2x8xf32> to vector<2x8x1xf32>
      %c0_114 = arith.constant 0 : index
      %c0_115 = arith.constant 0 : index
      %c0_116 = arith.constant 0 : index
      %181 = vector.load %arg6[%c0_114, %c0_115, %c0_116] : memref<2x8x16xf32, #tpu.memory_space<vmem>>, vector<2x8x16xf32>
      %182 = vector.broadcast %180 : vector<2x8x1xf32> to vector<2x8x16xf32>
      %183 = arith.mulf %182, %181 : vector<2x8x16xf32>
      %cst_117 = arith.constant dense<0.000000e+00> : vector<2x16xf32>
      %184 = vector.multi_reduction <add>, %183, %cst_117 [1] : vector<2x8x16xf32> to vector<2x16xf32>
      %c0_118 = arith.constant 0 : index
      %c1_119 = arith.constant 1 : index
      %185 = vector.load %arg35[%c0_118, %c1_119] : memref<2x10xf32, #tpu.memory_space<vmem>>, vector<2x8xf32>
      %186 = arith.addf %185, %179 : vector<2x8xf32>
      %c0_120 = arith.constant 0 : index
      %c1_121 = arith.constant 1 : index
      %187 = vector.load %arg34[%c0_120, %c1_121] : memref<2x10xf32, #tpu.memory_space<vmem>>, vector<2x8xf32>
      tpu.vector_store %arg34[%c0_120, %c1_121], %179 {strides = array<i32>} : memref<2x10xf32, #tpu.memory_space<vmem>>, vector<2x8xf32>,
      %c0_122 = arith.constant 0 : index
      %c1_123 = arith.constant 1 : index
      %188 = vector.load %arg35[%c0_122, %c1_123] : memref<2x10xf32, #tpu.memory_space<vmem>>, vector<2x8xf32>
      tpu.vector_store %arg35[%c0_122, %c1_123], %186 {strides = array<i32>} : memref<2x10xf32, #tpu.memory_space<vmem>>, vector<2x8xf32>,
      %c0_124 = arith.constant 0 : index
      %c0_125 = arith.constant 0 : index
      %189 = vector.load %arg33[%c0_124, %c0_125] : memref<2x16xf32, #tpu.memory_space<vmem>>, vector<2x16xf32>
      tpu.vector_store %arg33[%c0_124, %c0_125], %184 {strides = array<i32>} : memref<2x16xf32, #tpu.memory_space<vmem>>, vector<2x16xf32>,
      %c0_126 = arith.constant 0 : index
      %c0_127 = arith.constant 0 : index
      %190 = vector.load %arg31[%c0_126, %c0_127] : memref<2x32xf32, #tpu.memory_space<vmem>>, vector<2x32xf32>
      %c0_128 = arith.constant 0 : index
      %c0_129 = arith.constant 0 : index
      %c0_130 = arith.constant 0 : index
      %191 = vector.load %arg16[%c0_128, %c0_129, %c0_130] : memref<4x32x32xf32, #tpu.memory_space<vmem>>, vector<1x32x32xf32>
      %192 = vector.shape_cast %191 : vector<1x32x32xf32> to vector<32x32xf32>
      %cst_131 = arith.constant dense<0.000000e+00> : vector<2x32xf32>
      %193 = tpu.matmul %102, %192, %cst_131 {dimension_numbers = #tpu.dot_dimension_numbers<[1], [0], [0], [1], [0, 0, 1, 1], [], []>} : vector<2x32xf32>, vector<32x32xf32>, vector<2x32xf32> -> vector<2x32xf32>
      %c0_132 = arith.constant 0 : index
      %c0_133 = arith.constant 0 : index
      %c0_134 = arith.constant 0 : index
      %194 = vector.load %arg17[%c0_132, %c0_133, %c0_134] : memref<4x16x32xf32, #tpu.memory_space<vmem>>, vector<1x16x32xf32>
      %195 = vector.shape_cast %194 : vector<1x16x32xf32> to vector<16x32xf32>
      %cst_135 = arith.constant dense<0.000000e+00> : vector<2x32xf32>
      %196 = tpu.matmul %184, %195, %cst_135 {dimension_numbers = #tpu.dot_dimension_numbers<[1], [0], [0], [1], [0, 0, 1, 1], [], []>} : vector<2x16xf32>, vector<16x32xf32>, vector<2x32xf32> -> vector<2x32xf32>
      %197 = arith.addf %193, %196 : vector<2x32xf32>
      %c0_136 = arith.constant 0 : index
      %c0_137 = arith.constant 0 : index
      %c0_138 = arith.constant 0 : index
      %198 = vector.load %arg18[%c0_136, %c0_137, %c0_138] : memref<4x32x32xf32, #tpu.memory_space<vmem>>, vector<1x32x32xf32>
      %199 = vector.shape_cast %198 : vector<1x32x32xf32> to vector<32x32xf32>
      %cst_139 = arith.constant dense<0.000000e+00> : vector<2x32xf32>
      %200 = tpu.matmul %190, %199, %cst_139 {dimension_numbers = #tpu.dot_dimension_numbers<[1], [0], [0], [1], [0, 0, 1, 1], [], []>} : vector<2x32xf32>, vector<32x32xf32>, vector<2x32xf32> -> vector<2x32xf32>
      %201 = arith.addf %197, %200 : vector<2x32xf32>
      %c0_140 = arith.constant 0 : index
      %c0_141 = arith.constant 0 : index
      %c0_142 = arith.constant 0 : index
      %202 = vector.load %arg19[%c0_140, %c0_141, %c0_142] : memref<4x1x32xf32, #tpu.memory_space<vmem>>, vector<1x1x32xf32>
      %203 = vector.shape_cast %202 : vector<1x1x32xf32> to vector<1x32xf32>
      %204 = vector.broadcast %203 : vector<1x32xf32> to vector<2x32xf32>
      %205 = arith.addf %201, %204 : vector<2x32xf32>
      %206 = arith.negf %205 : vector<2x32xf32>
      %207 = math.exp %206 : vector<2x32xf32>
      %cst_143 = arith.constant 1.000000e+00 : f32
      %208 = vector.broadcast %cst_143 : f32 to vector<2x32xf32>
      %209 = arith.addf %208, %207 : vector<2x32xf32>
      %210 = arith.divf %208, %209 : vector<2x32xf32>
      %c1_144 = arith.constant 1 : index
      %c0_145 = arith.constant 0 : index
      %c0_146 = arith.constant 0 : index
      %211 = vector.load %arg16[%c1_144, %c0_145, %c0_146] : memref<4x32x32xf32, #tpu.memory_space<vmem>>, vector<1x32x32xf32>
      %212 = vector.shape_cast %211 : vector<1x32x32xf32> to vector<32x32xf32>
      %cst_147 = arith.constant dense<0.000000e+00> : vector<2x32xf32>
      %213 = tpu.matmul %102, %212, %cst_147 {dimension_numbers = #tpu.dot_dimension_numbers<[1], [0], [0], [1], [0, 0, 1, 1], [], []>} : vector<2x32xf32>, vector<32x32xf32>, vector<2x32xf32> -> vector<2x32xf32>
      %c1_148 = arith.constant 1 : index
      %c0_149 = arith.constant 0 : index
      %c0_150 = arith.constant 0 : index
      %214 = vector.load %arg17[%c1_148, %c0_149, %c0_150] : memref<4x16x32xf32, #tpu.memory_space<vmem>>, vector<1x16x32xf32>
      %215 = vector.shape_cast %214 : vector<1x16x32xf32> to vector<16x32xf32>
      %cst_151 = arith.constant dense<0.000000e+00> : vector<2x32xf32>
      %216 = tpu.matmul %184, %215, %cst_151 {dimension_numbers = #tpu.dot_dimension_numbers<[1], [0], [0], [1], [0, 0, 1, 1], [], []>} : vector<2x16xf32>, vector<16x32xf32>, vector<2x32xf32> -> vector<2x32xf32>
      %217 = arith.addf %213, %216 : vector<2x32xf32>
      %c1_152 = arith.constant 1 : index
      %c0_153 = arith.constant 0 : index
      %c0_154 = arith.constant 0 : index
      %218 = vector.load %arg18[%c1_152, %c0_153, %c0_154] : memref<4x32x32xf32, #tpu.memory_space<vmem>>, vector<1x32x32xf32>
      %219 = vector.shape_cast %218 : vector<1x32x32xf32> to vector<32x32xf32>
      %cst_155 = arith.constant dense<0.000000e+00> : vector<2x32xf32>
      %220 = tpu.matmul %190, %219, %cst_155 {dimension_numbers = #tpu.dot_dimension_numbers<[1], [0], [0], [1], [0, 0, 1, 1], [], []>} : vector<2x32xf32>, vector<32x32xf32>, vector<2x32xf32> -> vector<2x32xf32>
      %221 = arith.addf %217, %220 : vector<2x32xf32>
      %c1_156 = arith.constant 1 : index
      %c0_157 = arith.constant 0 : index
      %c0_158 = arith.constant 0 : index
      %222 = vector.load %arg19[%c1_156, %c0_157, %c0_158] : memref<4x1x32xf32, #tpu.memory_space<vmem>>, vector<1x1x32xf32>
      %223 = vector.shape_cast %222 : vector<1x1x32xf32> to vector<1x32xf32>
      %224 = vector.broadcast %223 : vector<1x32xf32> to vector<2x32xf32>
      %225 = arith.addf %221, %224 : vector<2x32xf32>
      %226 = arith.negf %225 : vector<2x32xf32>
      %227 = math.exp %226 : vector<2x32xf32>
      %cst_159 = arith.constant 1.000000e+00 : f32
      %228 = vector.broadcast %cst_159 : f32 to vector<2x32xf32>
      %229 = arith.addf %228, %227 : vector<2x32xf32>
      %230 = arith.divf %228, %229 : vector<2x32xf32>
      %c2_160 = arith.constant 2 : index
      %c0_161 = arith.constant 0 : index
      %c0_162 = arith.constant 0 : index
      %231 = vector.load %arg16[%c2_160, %c0_161, %c0_162] : memref<4x32x32xf32, #tpu.memory_space<vmem>>, vector<1x32x32xf32>
      %232 = vector.shape_cast %231 : vector<1x32x32xf32> to vector<32x32xf32>
      %cst_163 = arith.constant dense<0.000000e+00> : vector<2x32xf32>
      %233 = tpu.matmul %102, %232, %cst_163 {dimension_numbers = #tpu.dot_dimension_numbers<[1], [0], [0], [1], [0, 0, 1, 1], [], []>} : vector<2x32xf32>, vector<32x32xf32>, vector<2x32xf32> -> vector<2x32xf32>
      %c2_164 = arith.constant 2 : index
      %c0_165 = arith.constant 0 : index
      %c0_166 = arith.constant 0 : index
      %234 = vector.load %arg17[%c2_164, %c0_165, %c0_166] : memref<4x16x32xf32, #tpu.memory_space<vmem>>, vector<1x16x32xf32>
      %235 = vector.shape_cast %234 : vector<1x16x32xf32> to vector<16x32xf32>
      %cst_167 = arith.constant dense<0.000000e+00> : vector<2x32xf32>
      %236 = tpu.matmul %184, %235, %cst_167 {dimension_numbers = #tpu.dot_dimension_numbers<[1], [0], [0], [1], [0, 0, 1, 1], [], []>} : vector<2x16xf32>, vector<16x32xf32>, vector<2x32xf32> -> vector<2x32xf32>
      %237 = arith.addf %233, %236 : vector<2x32xf32>
      %c2_168 = arith.constant 2 : index
      %c0_169 = arith.constant 0 : index
      %c0_170 = arith.constant 0 : index
      %238 = vector.load %arg18[%c2_168, %c0_169, %c0_170] : memref<4x32x32xf32, #tpu.memory_space<vmem>>, vector<1x32x32xf32>
      %239 = vector.shape_cast %238 : vector<1x32x32xf32> to vector<32x32xf32>
      %cst_171 = arith.constant dense<0.000000e+00> : vector<2x32xf32>
      %240 = tpu.matmul %190, %239, %cst_171 {dimension_numbers = #tpu.dot_dimension_numbers<[1], [0], [0], [1], [0, 0, 1, 1], [], []>} : vector<2x32xf32>, vector<32x32xf32>, vector<2x32xf32> -> vector<2x32xf32>
      %241 = arith.addf %237, %240 : vector<2x32xf32>
      %c2_172 = arith.constant 2 : index
      %c0_173 = arith.constant 0 : index
      %c0_174 = arith.constant 0 : index
      %242 = vector.load %arg19[%c2_172, %c0_173, %c0_174] : memref<4x1x32xf32, #tpu.memory_space<vmem>>, vector<1x1x32xf32>
      %243 = vector.shape_cast %242 : vector<1x1x32xf32> to vector<1x32xf32>
      %244 = vector.broadcast %243 : vector<1x32xf32> to vector<2x32xf32>
      %245 = arith.addf %241, %244 : vector<2x32xf32>
      %246 = math.tanh %245 : vector<2x32xf32>
      %c3_175 = arith.constant 3 : index
      %c0_176 = arith.constant 0 : index
      %c0_177 = arith.constant 0 : index
      %247 = vector.load %arg16[%c3_175, %c0_176, %c0_177] : memref<4x32x32xf32, #tpu.memory_space<vmem>>, vector<1x32x32xf32>
      %248 = vector.shape_cast %247 : vector<1x32x32xf32> to vector<32x32xf32>
      %cst_178 = arith.constant dense<0.000000e+00> : vector<2x32xf32>
      %249 = tpu.matmul %102, %248, %cst_178 {dimension_numbers = #tpu.dot_dimension_numbers<[1], [0], [0], [1], [0, 0, 1, 1], [], []>} : vector<2x32xf32>, vector<32x32xf32>, vector<2x32xf32> -> vector<2x32xf32>
      %c3_179 = arith.constant 3 : index
      %c0_180 = arith.constant 0 : index
      %c0_181 = arith.constant 0 : index
      %250 = vector.load %arg17[%c3_179, %c0_180, %c0_181] : memref<4x16x32xf32, #tpu.memory_space<vmem>>, vector<1x16x32xf32>
      %251 = vector.shape_cast %250 : vector<1x16x32xf32> to vector<16x32xf32>
      %cst_182 = arith.constant dense<0.000000e+00> : vector<2x32xf32>
      %252 = tpu.matmul %184, %251, %cst_182 {dimension_numbers = #tpu.dot_dimension_numbers<[1], [0], [0], [1], [0, 0, 1, 1], [], []>} : vector<2x16xf32>, vector<16x32xf32>, vector<2x32xf32> -> vector<2x32xf32>
      %253 = arith.addf %249, %252 : vector<2x32xf32>
      %c3_183 = arith.constant 3 : index
      %c0_184 = arith.constant 0 : index
      %c0_185 = arith.constant 0 : index
      %254 = vector.load %arg18[%c3_183, %c0_184, %c0_185] : memref<4x32x32xf32, #tpu.memory_space<vmem>>, vector<1x32x32xf32>
      %255 = vector.shape_cast %254 : vector<1x32x32xf32> to vector<32x32xf32>
      %cst_186 = arith.constant dense<0.000000e+00> : vector<2x32xf32>
      %256 = tpu.matmul %190, %255, %cst_186 {dimension_numbers = #tpu.dot_dimension_numbers<[1], [0], [0], [1], [0, 0, 1, 1], [], []>} : vector<2x32xf32>, vector<32x32xf32>, vector<2x32xf32> -> vector<2x32xf32>
      %257 = arith.addf %253, %256 : vector<2x32xf32>
      %c3_187 = arith.constant 3 : index
      %c0_188 = arith.constant 0 : index
      %c0_189 = arith.constant 0 : index
      %258 = vector.load %arg19[%c3_187, %c0_188, %c0_189] : memref<4x1x32xf32, #tpu.memory_space<vmem>>, vector<1x1x32xf32>
      %259 = vector.shape_cast %258 : vector<1x1x32xf32> to vector<1x32xf32>
      %260 = vector.broadcast %259 : vector<1x32xf32> to vector<2x32xf32>
      %261 = arith.addf %257, %260 : vector<2x32xf32>
      %262 = arith.negf %261 : vector<2x32xf32>
      %263 = math.exp %262 : vector<2x32xf32>
      %cst_190 = arith.constant 1.000000e+00 : f32
      %264 = vector.broadcast %cst_190 : f32 to vector<2x32xf32>
      %265 = arith.addf %264, %263 : vector<2x32xf32>
      %266 = arith.divf %264, %265 : vector<2x32xf32>
      %c0_191 = arith.constant 0 : index
      %c0_192 = arith.constant 0 : index
      %267 = vector.load %arg32[%c0_191, %c0_192] : memref<2x32xf32, #tpu.memory_space<vmem>>, vector<2x32xf32>
      %268 = arith.mulf %230, %267 : vector<2x32xf32>
      %269 = arith.mulf %210, %246 : vector<2x32xf32>
      %270 = arith.addf %268, %269 : vector<2x32xf32>
      %271 = math.tanh %270 : vector<2x32xf32>
      %272 = arith.mulf %266, %271 : vector<2x32xf32>
      %273 = arith.index_cast %arg36 : i32 to index
      %c0_193 = arith.constant 0 : index
      %c0_194 = arith.constant 0 : index
      %274 = vector.load %arg5[%273, %c0_193, %c0_194] : memref<6x2x32xf32, #tpu.memory_space<vmem>>, vector<1x2x32xf32>
      %275 = vector.shape_cast %274 : vector<1x2x32xf32> to vector<2x32xf32>
      %276 = arith.mulf %272, %275 : vector<2x32xf32>
      %c0_195 = arith.constant 0 : index
      %c0_196 = arith.constant 0 : index
      %277 = vector.load %arg32[%c0_195, %c0_196] : memref<2x32xf32, #tpu.memory_space<vmem>>, vector<2x32xf32>
      tpu.vector_store %arg32[%c0_195, %c0_196], %270 {strides = array<i32>} : memref<2x32xf32, #tpu.memory_space<vmem>>, vector<2x32xf32>,
      %c0_197 = arith.constant 0 : index
      %c0_198 = arith.constant 0 : index
      %278 = vector.load %arg31[%c0_197, %c0_198] : memref<2x32xf32, #tpu.memory_space<vmem>>, vector<2x32xf32>
      tpu.vector_store %arg31[%c0_197, %c0_198], %276 {strides = array<i32>} : memref<2x32xf32, #tpu.memory_space<vmem>>, vector<2x32xf32>,
      %c0_199 = arith.constant 0 : index
      %c0_200 = arith.constant 0 : index
      %279 = vector.load %arg20[%c0_199, %c0_200] : memref<32x16xf32, #tpu.memory_space<vmem>>, vector<32x16xf32>
      %cst_201 = arith.constant dense<0.000000e+00> : vector<2x16xf32>
      %280 = tpu.matmul %276, %279, %cst_201 {dimension_numbers = #tpu.dot_dimension_numbers<[1], [0], [0], [1], [0, 0, 1, 1], [], []>} : vector<2x32xf32>, vector<32x16xf32>, vector<2x16xf32> -> vector<2x16xf32>
      %c0_202 = arith.constant 0 : index
      %c0_203 = arith.constant 0 : index
      %281 = vector.load %arg21[%c0_202, %c0_203] : memref<16x16xf32, #tpu.memory_space<vmem>>, vector<16x16xf32>
      %cst_204 = arith.constant dense<0.000000e+00> : vector<2x16xf32>
      %282 = tpu.matmul %184, %281, %cst_204 {dimension_numbers = #tpu.dot_dimension_numbers<[1], [0], [0], [1], [0, 0, 1, 1], [], []>} : vector<2x16xf32>, vector<16x16xf32>, vector<2x16xf32> -> vector<2x16xf32>
      %283 = arith.addf %280, %282 : vector<2x16xf32>
      %c0_205 = arith.constant 0 : index
      %c0_206 = arith.constant 0 : index
      %284 = vector.load %arg22[%c0_205, %c0_206] : memref<1x16xf32, #tpu.memory_space<vmem>>, vector<1x16xf32>
      %285 = vector.broadcast %284 : vector<1x16xf32> to vector<2x16xf32>
      %286 = arith.addf %283, %285 : vector<2x16xf32>
      %c0_207 = arith.constant 0 : index
      %c0_208 = arith.constant 0 : index
      %287 = vector.load %arg23[%c0_207, %c0_208] : memref<1x32xf32, #tpu.memory_space<vmem>>, vector<1x32xf32>
      %288 = vector.broadcast %287 : vector<1x32xf32> to vector<2x32xf32>
      %289 = arith.mulf %276, %288 : vector<2x32xf32>
      %cst_209 = arith.constant dense<0.000000e+00> : vector<2xf32>
      %290 = vector.multi_reduction <add>, %289, %cst_209 [1] : vector<2x32xf32> to vector<2xf32>
      %291 = vector.shape_cast %290 : vector<2xf32> to vector<2x1xf32>
      %c0_210 = arith.constant 0 : index
      %c0_211 = arith.constant 0 : index
      %292 = vector.load %arg24[%c0_210, %c0_211] : memref<1x16xf32, #tpu.memory_space<vmem>>, vector<1x16xf32>
      %293 = vector.broadcast %292 : vector<1x16xf32> to vector<2x16xf32>
      %294 = arith.mulf %184, %293 : vector<2x16xf32>
      %cst_212 = arith.constant dense<0.000000e+00> : vector<2xf32>
      %295 = vector.multi_reduction <add>, %294, %cst_212 [1] : vector<2x16xf32> to vector<2xf32>
      %296 = vector.shape_cast %295 : vector<2xf32> to vector<2x1xf32>
      %297 = arith.addf %291, %296 : vector<2x1xf32>
      %c0_213 = arith.constant 0 : index
      %c0_214 = arith.constant 0 : index
      %298 = vector.load %arg25[%c0_213, %c0_214] : memref<1x1xf32, #tpu.memory_space<vmem>>, vector<1x1xf32>
      %299 = vector.broadcast %298 : vector<1x1xf32> to vector<2x1xf32>
      %300 = arith.addf %297, %299 : vector<2x1xf32>
      %301 = arith.index_cast %arg36 : i32 to index
      %c0_215 = arith.constant 0 : index
      %c0_216 = arith.constant 0 : index
      %302 = vector.load %arg26[%301, %c0_215, %c0_216] : memref<6x2x16xf32, #tpu.memory_space<vmem>>, vector<1x2x16xf32>
      %303 = vector.shape_cast %302 : vector<1x2x16xf32> to vector<2x16xf32>
      %304 = vector.shape_cast %286 : vector<2x16xf32> to vector<1x2x16xf32>
      tpu.vector_store %arg26[%301, %c0_215, %c0_216], %304 {strides = array<i32>} : memref<6x2x16xf32, #tpu.memory_space<vmem>>, vector<1x2x16xf32>,
      %305 = arith.index_cast %arg36 : i32 to index
      %c0_217 = arith.constant 0 : index
      %c0_218 = arith.constant 0 : index
      %306 = vector.load %arg27[%305, %c0_217, %c0_218] : memref<6x2x1xf32, #tpu.memory_space<vmem>>, vector<1x2x1xf32>
      %307 = vector.shape_cast %306 : vector<1x2x1xf32> to vector<2x1xf32>
      %308 = vector.shape_cast %300 : vector<2x1xf32> to vector<1x2x1xf32>
      tpu.vector_store %arg27[%305, %c0_217, %c0_218], %308 {strides = array<i32>} : memref<6x2x1xf32, #tpu.memory_space<vmem>>, vector<1x2x1xf32>,
      %309 = arith.index_cast %arg36 : i32 to index
      %c0_219 = arith.constant 0 : index
      %c0_220 = arith.constant 0 : index
      %310 = vector.load %arg28[%309, %c0_219, %c0_220] : memref<6x2x8xf32, #tpu.memory_space<vmem>>, vector<1x2x8xf32>
      %311 = vector.shape_cast %310 : vector<1x2x8xf32> to vector<2x8xf32>
      %312 = vector.shape_cast %179 : vector<2x8xf32> to vector<1x2x8xf32>
      tpu.vector_store %arg28[%309, %c0_219, %c0_220], %312 {strides = array<i32>} : memref<6x2x8xf32, #tpu.memory_space<vmem>>, vector<1x2x8xf32>,
    }
    %c6_i32_19 = arith.constant 6 : i32
    return
  }
}

</mosaic_0001>

<llo_original>
// kernel: _lambda_.1
$region0: #{_lambda_.1}
  #allocation0 [shape = 'u32[]', space=smem, size = 0x4, offset = 0x4, fixed_abs, tag = 'smem constant byte address 0x4 - core index']
  #allocation1 [shape = 'u32[144,128]{1,0:T(1,128)}', space=vmem, size = 0x12000, scoped, tag = 'internal scratch']
  #allocation2 [shape = 'f32[2,32]{1,0:T(2,128)}', space=vmem, size = 0x400, scoped, tag = 'scratch operand']
  #allocation3 [shape = 'f32[2,32]{1,0:T(2,128)}', space=vmem, size = 0x400, scoped, tag = 'scratch operand']
  #allocation4 [shape = 'f32[2,32]{1,0:T(2,128)}', space=vmem, size = 0x400, scoped, tag = 'scratch operand']
  #allocation5 [shape = 'f32[2,32]{1,0:T(2,128)}', space=vmem, size = 0x400, scoped, tag = 'scratch operand']
  #allocation6 [shape = 'f32[2,16]{1,0:T(2,128)}', space=vmem, size = 0x400, scoped, tag = 'scratch operand']
  #allocation7 [shape = 'f32[2,10]{1,0:T(2,128)}', space=vmem, size = 0x400, scoped, tag = 'scratch operand']
  #allocation8 [shape = 'f32[2,10]{1,0:T(2,128)}', space=vmem, size = 0x400, scoped, tag = 'scratch operand']
  #allocation9 [shape = 'f32[1,1]{1,0:T(1,128)S(1)}', space=vmem, size = 0x200, scoped, tag = 'scoped memory for _lambda_.1']
  %s0 = inlined_call_operand.vmem [shape: f32[6,2,32], index: 0, kind: input, shape index: {}]
  %s1 = inlined_call_operand.vmem [shape: f32[6,2,32], index: 1, kind: input, shape index: {}]
  %s2 = inlined_call_operand.vmem [shape: f32[6,2,32], index: 2, kind: input, shape index: {}]
  %s3 = inlined_call_operand.vmem [shape: f32[6,2,32], index: 3, kind: input, shape index: {}]
  %s4 = inlined_call_operand.vmem [shape: f32[6,2,32], index: 4, kind: input, shape index: {}]
  %s5 = inlined_call_operand.vmem [shape: f32[6,2,32], index: 5, kind: input, shape index: {}]
  %s6 = inlined_call_operand.vmem [shape: f32[2,8,16], index: 6, kind: input, shape index: {}]
  %s7 = inlined_call_operand.vmem [shape: f32[2,8,16], index: 7, kind: input, shape index: {}]
  %s8 = inlined_call_operand.vmem [shape: f32[2,8], index: 8, kind: input, shape index: {}]
  %s9 = inlined_call_operand.vmem [shape: f32[4,16,32], index: 9, kind: input, shape index: {}]
  %s10 = inlined_call_operand.vmem [shape: f32[4,32,32], index: 10, kind: input, shape index: {}]
  %s11 = inlined_call_operand.vmem [shape: f32[4,1,32], index: 11, kind: input, shape index: {}]
  %s12 = inlined_call_operand.vmem [shape: f32[32,16], index: 12, kind: input, shape index: {}]
  %s13 = inlined_call_operand.vmem [shape: f32[1,16], index: 13, kind: input, shape index: {}]
  %s14 = inlined_call_operand.vmem [shape: f32[3,16], index: 14, kind: input, shape index: {}]
  %s15 = inlined_call_operand.vmem [shape: f32[3,16], index: 15, kind: input, shape index: {}]
  %s16 = inlined_call_operand.vmem [shape: f32[4,32,32], index: 16, kind: input, shape index: {}]
  %s17 = inlined_call_operand.vmem [shape: f32[4,16,32], index: 17, kind: input, shape index: {}]
  %s18 = inlined_call_operand.vmem [shape: f32[4,32,32], index: 18, kind: input, shape index: {}]
  %s19 = inlined_call_operand.vmem [shape: f32[4,1,32], index: 19, kind: input, shape index: {}]
  %s20 = inlined_call_operand.vmem [shape: f32[32,16], index: 20, kind: input, shape index: {}]
  %s21 = inlined_call_operand.vmem [shape: f32[16,16], index: 21, kind: input, shape index: {}]
  %s22 = inlined_call_operand.vmem [shape: f32[1,16], index: 22, kind: input, shape index: {}]
  %s23 = inlined_call_operand.vmem [shape: f32[1,32], index: 23, kind: input, shape index: {}]
  %s24 = inlined_call_operand.vmem [shape: f32[1,16], index: 24, kind: input, shape index: {}]
  %s25 = inlined_call_operand.<no memory space> [shape: f32[1,1], index: 25, kind: input, shape index: {}]
  %s26 = inlined_call_operand.vmem [shape: f32[6,2,16], index: 26, kind: output, shape index: {0}]
  %s27 = inlined_call_operand.vmem [shape: f32[6,2,1], index: 27, kind: output, shape index: {1}]
  %s28 = inlined_call_operand.hbm [shape: f32[6,2,8], index: 28, kind: output, shape index: {2}]
  %29 = xla_tuple %s26, %s27, %s28
  %s30 = sld [smem:[#allocation0]]
  $region137: #{_lambda_.1} parent=0
    _
  %s32 = ssub.s32 1, %s30
  %s33 = scalar_select 0, %s32, %s30
  %v34 = vstv %s25
  %35 = vst [vmem:[#allocation9] sm:$0x1] %v34
  $region1: #{_lambda_.1} parent=0
    #allocation10 [shape = 'u8[6144]{0}', space=vmem, size = 0x1800, scoped, tag = 'output window, operand 2, single buffered']
    #allocation11 [shape = 's32[1]{0}', space=sflag, size = 0x4, scoped, tag = 'scoped memory for _lambda_.1']
    %36 = vsyncpa [#allocation11], 0
    // Predicated region
    $region2: #{_lambda_.1} parent=1 // pred_check
      _
    $region3: #{_lambda_.1} parent=1 // pred_check_branch
      %38 = sbr.rel (0) target = $region5
    $region4: #{_lambda_.1} parent=1 // pred_region
      _
    $region5: #{_lambda_.1} parent=1 // pred_fallthru
      _
    // Predicated region
    $region6: #{_lambda_.1} parent=1 // pred_check
      _
    $region7: #{_lambda_.1} parent=1 // pred_check_branch
      %40 = sbr.rel (0) target = $region9
    $region8: #{_lambda_.1} parent=1 // pred_region
      _
    $region9: #{_lambda_.1} parent=1 // pred_fallthru
      _
    // Predicated region
    $region10: #{_lambda_.1} parent=1 // pred_check
      _
    $region11: #{_lambda_.1} parent=1 // pred_check_branch
      %42 = sbr.rel (0) target = $region13
    $region12: #{_lambda_.1} parent=1 // pred_region
      _
    $region13: #{_lambda_.1} parent=1 // pred_fallthru
      _
    // Predicated region
    $region14: #{_lambda_.1} parent=1 // pred_check
      _
    $region15: #{_lambda_.1} parent=1 // pred_check_branch
      %44 = sbr.rel (0) target = $region17
    $region16: #{_lambda_.1} parent=1 // pred_region
      _
    $region17: #{_lambda_.1} parent=1 // pred_fallthru
      _
    // Predicated region
    $region18: #{_lambda_.1} parent=1 // pred_check
      _
    $region19: #{_lambda_.1} parent=1 // pred_check_branch
      %46 = sbr.rel (0) target = $region21
    $region20: #{_lambda_.1} parent=1 // pred_region
      _
    $region21: #{_lambda_.1} parent=1 // pred_fallthru
      _
    // Predicated region
    $region22: #{_lambda_.1} parent=1 // pred_check
      _
    $region23: #{_lambda_.1} parent=1 // pred_check_branch
      %48 = sbr.rel (0) target = $region25
    $region24: #{_lambda_.1} parent=1 // pred_region
      _
    $region25: #{_lambda_.1} parent=1 // pred_fallthru
      _
    // Predicated region
    $region26: #{_lambda_.1} parent=1 // pred_check
      _
    $region27: #{_lambda_.1} parent=1 // pred_check_branch
      %50 = sbr.rel (0) target = $region29
    $region28: #{_lambda_.1} parent=1 // pred_region
      _
    $region29: #{_lambda_.1} parent=1 // pred_fallthru
      _
    // Predicated region
    $region30: #{_lambda_.1} parent=1 // pred_check
      _
    $region31: #{_lambda_.1} parent=1 // pred_check_branch
      %52 = sbr.rel (0) target = $region33
    $region32: #{_lambda_.1} parent=1 // pred_region
      _
    $region33: #{_lambda_.1} parent=1 // pred_fallthru
      _
    // Predicated region
    $region34: #{_lambda_.1} parent=1 // pred_check
      _
    $region35: #{_lambda_.1} parent=1 // pred_check_branch
      %54 = sbr.rel (0) target = $region37
    $region36: #{_lambda_.1} parent=1 // pred_region
      _
    $region37: #{_lambda_.1} parent=1 // pred_fallthru
      _
    // Predicated region
    $region38: #{_lambda_.1} parent=1 // pred_check
      _
    $region39: #{_lambda_.1} parent=1 // pred_check_branch
      %56 = sbr.rel (0) target = $region41
    $region40: #{_lambda_.1} parent=1 // pred_region
      _
    $region41: #{_lambda_.1} parent=1 // pred_fallthru
      _
    // Predicated region
    $region42: #{_lambda_.1} parent=1 // pred_check
      _
    $region43: #{_lambda_.1} parent=1 // pred_check_branch
      %58 = sbr.rel (0) target = $region45
    $region44: #{_lambda_.1} parent=1 // pred_region
      _
    $region45: #{_lambda_.1} parent=1 // pred_fallthru
      _
    // Predicated region
    $region46: #{_lambda_.1} parent=1 // pred_check
      _
    $region47: #{_lambda_.1} parent=1 // pred_check_branch
      %60 = sbr.rel (0) target = $region49
    $region48: #{_lambda_.1} parent=1 // pred_region
      _
    $region49: #{_lambda_.1} parent=1 // pred_fallthru
      _
    // Predicated region
    $region50: #{_lambda_.1} parent=1 // pred_check
      _
    $region51: #{_lambda_.1} parent=1 // pred_check_branch
      %62 = sbr.rel (0) target = $region53
    $region52: #{_lambda_.1} parent=1 // pred_region
      _
    $region53: #{_lambda_.1} parent=1 // pred_fallthru
      _
    // Predicated region
    $region54: #{_lambda_.1} parent=1 // pred_check
      _
    $region55: #{_lambda_.1} parent=1 // pred_check_branch
      %64 = sbr.rel (0) target = $region57
    $region56: #{_lambda_.1} parent=1 // pred_region
      _
    $region57: #{_lambda_.1} parent=1 // pred_fallthru
      _
    // Predicated region
    $region58: #{_lambda_.1} parent=1 // pred_check
      _
    $region59: #{_lambda_.1} parent=1 // pred_check_branch
      %66 = sbr.rel (0) target = $region61
    $region60: #{_lambda_.1} parent=1 // pred_region
      _
    $region61: #{_lambda_.1} parent=1 // pred_fallthru
      _
    // Predicated region
    $region62: #{_lambda_.1} parent=1 // pred_check
      _
    $region63: #{_lambda_.1} parent=1 // pred_check_branch
      %68 = sbr.rel (0) target = $region65
    $region64: #{_lambda_.1} parent=1 // pred_region
      _
    $region65: #{_lambda_.1} parent=1 // pred_fallthru
      _
    // Predicated region
    $region66: #{_lambda_.1} parent=1 // pred_check
      _
    $region67: #{_lambda_.1} parent=1 // pred_check_branch
      %70 = sbr.rel (0) target = $region69
    $region68: #{_lambda_.1} parent=1 // pred_region
      _
    $region69: #{_lambda_.1} parent=1 // pred_fallthru
      _
    // Predicated region
    $region70: #{_lambda_.1} parent=1 // pred_check
      _
    $region71: #{_lambda_.1} parent=1 // pred_check_branch
      %72 = sbr.rel (0) target = $region73
    $region72: #{_lambda_.1} parent=1 // pred_region
      _
    $region73: #{_lambda_.1} parent=1 // pred_fallthru
      _
    // Predicated region
    $region74: #{_lambda_.1} parent=1 // pred_check
      _
    $region75: #{_lambda_.1} parent=1 // pred_check_branch
      %74 = sbr.rel (0) target = $region77
    $region76: #{_lambda_.1} parent=1 // pred_region
      _
    $region77: #{_lambda_.1} parent=1 // pred_fallthru
      _
    // Predicated region
    $region78: #{_lambda_.1} parent=1 // pred_check
      _
    $region79: #{_lambda_.1} parent=1 // pred_check_branch
      %76 = sbr.rel (0) target = $region81
    $region80: #{_lambda_.1} parent=1 // pred_region
      _
    $region81: #{_lambda_.1} parent=1 // pred_fallthru
      _
    // Predicated region
    $region82: #{_lambda_.1} parent=1 // pred_check
      _
    $region83: #{_lambda_.1} parent=1 // pred_check_branch
      %78 = sbr.rel (0) target = $region85
    $region84: #{_lambda_.1} parent=1 // pred_region
      _
    $region85: #{_lambda_.1} parent=1 // pred_fallthru
      _
    // Predicated region
    $region86: #{_lambda_.1} parent=1 // pred_check
      _
    $region87: #{_lambda_.1} parent=1 // pred_check_branch
      %80 = sbr.rel (0) target = $region89
    $region88: #{_lambda_.1} parent=1 // pred_region
      _
    $region89: #{_lambda_.1} parent=1 // pred_fallthru
      _
    // Predicated region
    $region90: #{_lambda_.1} parent=1 // pred_check
      _
    $region91: #{_lambda_.1} parent=1 // pred_check_branch
      %82 = sbr.rel (0) target = $region93
    $region92: #{_lambda_.1} parent=1 // pred_region
      _
    $region93: #{_lambda_.1} parent=1 // pred_fallthru
      _
    // Predicated region
    $region94: #{_lambda_.1} parent=1 // pred_check
      _
    $region95: #{_lambda_.1} parent=1 // pred_check_branch
      %84 = sbr.rel (0) target = $region97
    $region96: #{_lambda_.1} parent=1 // pred_region
      _
    $region97: #{_lambda_.1} parent=1 // pred_fallthru
      _
    // Predicated region
    $region98: #{_lambda_.1} parent=1 // pred_check
      _
    $region99: #{_lambda_.1} parent=1 // pred_check_branch
      %86 = sbr.rel (0) target = $region101
    $region100: #{_lambda_.1} parent=1 // pred_region
      _
    $region101: #{_lambda_.1} parent=1 // pred_fallthru
      _
    // Predicated region
    $region102: #{_lambda_.1} parent=1 // pred_check
      _
    $region103: #{_lambda_.1} parent=1 // pred_check_branch
      %88 = sbr.rel (0) target = $region105
    $region104: #{_lambda_.1} parent=1 // pred_region
      _
    $region105: #{_lambda_.1} parent=1 // pred_fallthru
      _
    %vm89 = vcmask 254976
    %90 = vst.msk [vmem:[#allocation2] sm:$0x3] %vm89, 0.0
    %91 = vst.msk [vmem:[#allocation3] sm:$0x3] %vm89, 0.0
    %92 = vst.msk [vmem:[#allocation4] sm:$0x3] %vm89, 0.0
    %93 = vst.msk [vmem:[#allocation5] sm:$0x3] %vm89, 0.0
    %vm94 = vcmask 123904
    %95 = vst.msk [vmem:[#allocation6] sm:$0x3] %vm94, 0.0
    %vm96 = vcmask 74752
    %97 = vst.msk [vmem:[#allocation7] sm:$0x3] %vm96, 0.0
    %98 = vst.msk [vmem:[#allocation8] sm:$0x3] %vm96, 0.0
    loop: start=0, step=1, limit=6
    $region106: #{_lambda_.1} parent=1 // loop_pre_header
      _
    $region107: #{_lambda_.1} parent=1 // loop_header
      %s100 = sphi 0, %s104
      %p101 = scmp.ge.s32.totalorder %s100, 6
    $region108: #{_lambda_.1} parent=1 // loop_header_branch
      %103 = sbr.rel (%p101) target = $region112
    $region109: #{_lambda_.1} parent=1 // loop_body
      %s105 = smul.u32 %s100, 2
      %s106 = scalar_lea.vmem %s0, %s105
      %v107 = vld [vmem:[%s106] sm:$0x3]
      %s108 = scalar_lea.vmem %s1, %s105
      %v109 = vld [vmem:[%s108] sm:$0x3]
      %s110 = scalar_lea.vmem %s2, %s105
      %v111 = vld [vmem:[%s110] sm:$0x3]
      %s112 = scalar_lea.vmem %s3, %s105
      %v113 = vld [vmem:[%s112] sm:$0x3]
      %v114 = vld [vmem:[#allocation6] sm:$0x3]
      %v115 = vld [vmem:[#allocation2] sm:$0x3]
      %v116 = vld [vmem:[%s9] sm:$0xff]
      %v117 = vld [vmem:[%s9 + $0x8] sm:$0xff]
      %vm118 = vcmask 130048
      %v120 = vsel %vm118, %v114, 0
      %122 = vmatprep.subr.mxu0 0.0
      %123 = vmatpush1.msra.mxu0 %v116
      %124 = vmatprep.subr.mxu0 0.0
      %125 = vmatpush1.msra.mxu0 %v117
      %126 = vmatprep.subr.mxu0 0.0
      %127 = vmatpush1.msra.mxu0 0.0
      %128 = vmatprep.subr.mxu0 0.0
      %129 = vmatpush1.msra.mxu0 0.0
      %130 = vmatprep.subr.mxu0 0.0
      %131 = vmatpush1.msra.mxu0 0.0
      %132 = vmatprep.subr.mxu0 0.0
      %133 = vmatpush1.msra.mxu0 0.0
      %134 = vmatprep.subr.mxu0 0.0
      %135 = vmatpush1.msra.mxu0 0.0
      %136 = vmatprep.subr.mxu0 0.0
      %137 = vmatpush1.msra.mxu0 0.0
      %138 = vmatprep.subr.mxu0 0.0
      %139 = vmatpush1.msra.mxu0 0.0
      %140 = vmatprep.subr.mxu0 0.0
      %141 = vmatpush1.msra.mxu0 0.0
      %142 = vmatprep.subr.mxu0 0.0
      %143 = vmatpush1.msra.mxu0 0.0
      %144 = vmatprep.subr.mxu0 0.0
      %145 = vmatpush1.msra.mxu0 0.0
      %146 = vmatprep.subr.mxu0 0.0
      %147 = vmatpush1.msra.mxu0 0.0
      %148 = vmatprep.subr.mxu0 0.0
      %149 = vmatpush1.msra.mxu0 0.0
      %150 = vmatprep.subr.mxu0 0.0
      %151 = vmatpush1.msra.mxu0 0.0
      %152 = vmatprep.subr.mxu0 0.0
      %153 = vmatpush1.msra.mxu0 0.0
      %154 = vmatprep.subr.mxu0 0.0
      %155 = vmatpush1.msra.mxu0 0.0
      %156 = vmatprep.subr.mxu0 0.0
      %157 = vmatpush1.msra.mxu0 0.0
      %158 = vmatprep.subr.mxu0 0.0
      %159 = vmatpush1.msra.mxu0 0.0
      %160 = vmatprep.subr.mxu0 0.0
      %161 = vmatpush1.msra.mxu0 0.0
      %162 = vmatprep.subr.mxu0 0.0
      %163 = vmatpush1.msra.mxu0 0.0
      %164 = vmatprep.subr.mxu0 0.0
      %165 = vmatpush1.msra.mxu0 0.0
      %166 = vmatprep.subr.mxu0 0.0
      %167 = vmatpush1.msra.mxu0 0.0
      %168 = vmatprep.subr.mxu0 0.0
      %169 = vmatpush1.msra.mxu0 0.0
      %170 = vmatprep.subr.mxu0 0.0
      %171 = vmatpush1.msra.mxu0 0.0
      %172 = vmatprep.subr.mxu0 0.0
      %173 = vmatpush1.msra.mxu0 0.0
      %174 = vmatprep.subr.mxu0 0.0
      %175 = vmatpush1.msra.mxu0 0.0
      %176 = vmatprep.subr.mxu0 0.0
      %177 = vmatpush1.msra.mxu0 0.0
      %178 = vmatprep.subr.mxu0 0.0
      %179 = vmatpush1.msra.mxu0 0.0
      %180 = vmatprep.subr.mxu0 0.0
      %181 = vmatpush1.msra.mxu0 0.0
      %182 = vmatprep.subr.mxu0 0.0
      %183 = vmatpush1.msra.mxu0 0.0
      %184 = vmatprep.subr.mxu0 0.0
      %185 = vmatpush1.msra.mxu0 0.0
      %186 = vmatprep.mubr.f32.mxu0 0.0
      %187 = vmatmul.mubr.f32.gmra.mrb[0].mxu0 %v120
      %v188 = vpop.f32.mrb[0].mxu0
      %v189 = vadd.f32 0.0, %v188
      %v190 = vpop.f32.mrb[0].mxu0
      %191 = vdwg.mxu0
      %v192 = vadd.f32 %v107, %v189
      %v193 = vld [vmem:[%s10] sm:$0xff]
      %v194 = vld [vmem:[%s10 + $0x8] sm:$0xff]
      %v195 = vld [vmem:[%s10 + $0x10] sm:$0xff]
      %v196 = vld [vmem:[%s10 + $0x18] sm:$0xff]
      %vm197 = vcmask 261120
      %v199 = vsel %vm197, %v115, 0
      %201 = vmatprep.subr.mxu0 0.0
      %202 = vmatpush1.msra.mxu0 %v193
      %203 = vmatprep.subr.mxu0 0.0
      %204 = vmatpush1.msra.mxu0 %v194
      %205 = vmatprep.subr.mxu0 0.0
      %206 = vmatpush1.msra.mxu0 %v195
      %207 = vmatprep.subr.mxu0 0.0
      %208 = vmatpush1.msra.mxu0 %v196
      %209 = vmatprep.subr.mxu0 0.0
      %210 = vmatpush1.msra.mxu0 0.0
      %211 = vmatprep.subr.mxu0 0.0
      %212 = vmatpush1.msra.mxu0 0.0
      %213 = vmatprep.subr.mxu0 0.0
      %214 = vmatpush1.msra.mxu0 0.0
      %215 = vmatprep.subr.mxu0 0.0
      %216 = vmatpush1.msra.mxu0 0.0
      %217 = vmatprep.subr.mxu0 0.0
      %218 = vmatpush1.msra.mxu0 0.0
      %219 = vmatprep.subr.mxu0 0.0
      %220 = vmatpush1.msra.mxu0 0.0
      %221 = vmatprep.subr.mxu0 0.0
      %222 = vmatpush1.msra.mxu0 0.0
      %223 = vmatprep.subr.mxu0 0.0
      %224 = vmatpush1.msra.mxu0 0.0
      %225 = vmatprep.subr.mxu0 0.0
      %226 = vmatpush1.msra.mxu0 0.0
      %227 = vmatprep.subr.mxu0 0.0
      %228 = vmatpush1.msra.mxu0 0.0
      %229 = vmatprep.subr.mxu0 0.0
      %230 = vmatpush1.msra.mxu0 0.0
      %231 = vmatprep.subr.mxu0 0.0
      %232 = vmatpush1.msra.mxu0 0.0
      %233 = vmatprep.subr.mxu0 0.0
      %234 = vmatpush1.msra.mxu0 0.0
      %235 = vmatprep.subr.mxu0 0.0
      %236 = vmatpush1.msra.mxu0 0.0
      %237 = vmatprep.subr.mxu0 0.0
      %238 = vmatpush1.msra.mxu0 0.0
      %239 = vmatprep.subr.mxu0 0.0
      %240 = vmatpush1.msra.mxu0 0.0
      %241 = vmatprep.subr.mxu0 0.0
      %242 = vmatpush1.msra.mxu0 0.0
      %243 = vmatprep.subr.mxu0 0.0
      %244 = vmatpush1.msra.mxu0 0.0
      %245 = vmatprep.subr.mxu0 0.0
      %246 = vmatpush1.msra.mxu0 0.0
      %247 = vmatprep.subr.mxu0 0.0
      %248 = vmatpush1.msra.mxu0 0.0
      %249 = vmatprep.subr.mxu0 0.0
      %250 = vmatpush1.msra.mxu0 0.0
      %251 = vmatprep.subr.mxu0 0.0
      %252 = vmatpush1.msra.mxu0 0.0
      %253 = vmatprep.subr.mxu0 0.0
      %254 = vmatpush1.msra.mxu0 0.0
      %255 = vmatprep.subr.mxu0 0.0
      %256 = vmatpush1.msra.mxu0 0.0
      %257 = vmatprep.subr.mxu0 0.0
      %258 = vmatpush1.msra.mxu0 0.0
      %259 = vmatprep.subr.mxu0 0.0
      %260 = vmatpush1.msra.mxu0 0.0
      %261 = vmatprep.subr.mxu0 0.0
      %262 = vmatpush1.msra.mxu0 0.0
      %263 = vmatprep.subr.mxu0 0.0
      %264 = vmatpush1.msra.mxu0 0.0
      %265 = vmatprep.mubr.f32.mxu0 0.0
      %266 = vmatmul.mubr.f32.gmra.mrb[0].mxu0 %v199
      %v267 = vpop.f32.mrb[0].mxu0
      %v268 = vadd.f32 0.0, %v267
      %v269 = vpop.f32.mrb[0].mxu0
      %270 = vdwg.mxu0
      %v271 = vadd.f32 %v192, %v268
      %v272 = vld [vmem:[%s11] sm:$0x1]
      %v274 = vlaneseq
      %v275 = vshrl.u32 %v274, 7
      %v276 = vsub.s32 0, %v275
      %v277 = vrot.slane %v272, %v276
      %v279 = vadd.f32 %v271, %v277
      %v280 = vxor.u32 %v279, 2147483648
      %v281 = vmul.f32 %v280, 1.442695
      %v282 = vpow.pop %v281
      %v283 = vadd.f32 %v282, 1.0
      %v284 = vrcp.pop %v283
      %v285 = vmul.f32 1.0, %v284
      %s286 = scalar_lea.vmem %s9, 16
      %v287 = vld [vmem:[%s286] sm:$0xff]
      %v288 = vld [vmem:[%s286 + $0x8] sm:$0xff]
      %289 = vmatprep.subr.mxu0 0.0
      %290 = vmatpush1.msra.mxu0 %v287
      %291 = vmatprep.subr.mxu0 0.0
      %292 = vmatpush1.msra.mxu0 %v288
      %293 = vmatprep.subr.mxu0 0.0
      %294 = vmatpush1.msra.mxu0 0.0
      %295 = vmatprep.subr.mxu0 0.0
      %296 = vmatpush1.msra.mxu0 0.0
      %297 = vmatprep.subr.mxu0 0.0
      %298 = vmatpush1.msra.mxu0 0.0
      %299 = vmatprep.subr.mxu0 0.0
      %300 = vmatpush1.msra.mxu0 0.0
      %301 = vmatprep.subr.mxu0 0.0
      %302 = vmatpush1.msra.mxu0 0.0
      %303 = vmatprep.subr.mxu0 0.0
      %304 = vmatpush1.msra.mxu0 0.0
      %305 = vmatprep.subr.mxu0 0.0
      %306 = vmatpush1.msra.mxu0 0.0
      %307 = vmatprep.subr.mxu0 0.0
      %308 = vmatpush1.msra.mxu0 0.0
      %309 = vmatprep.subr.mxu0 0.0
      %310 = vmatpush1.msra.mxu0 0.0
      %311 = vmatprep.subr.mxu0 0.0
      %312 = vmatpush1.msra.mxu0 0.0
      %313 = vmatprep.subr.mxu0 0.0
      %314 = vmatpush1.msra.mxu0 0.0
      %315 = vmatprep.subr.mxu0 0.0
      %316 = vmatpush1.msra.mxu0 0.0
      %317 = vmatprep.subr.mxu0 0.0
      %318 = vmatpush1.msra.mxu0 0.0
      %319 = vmatprep.subr.mxu0 0.0
      %320 = vmatpush1.msra.mxu0 0.0
      %321 = vmatprep.subr.mxu0 0.0
      %322 = vmatpush1.msra.mxu0 0.0
      %323 = vmatprep.subr.mxu0 0.0
      %324 = vmatpush1.msra.mxu0 0.0
      %325 = vmatprep.subr.mxu0 0.0
      %326 = vmatpush1.msra.mxu0 0.0
      %327 = vmatprep.subr.mxu0 0.0
      %328 = vmatpush1.msra.mxu0 0.0
      %329 = vmatprep.subr.mxu0 0.0
      %330 = vmatpush1.msra.mxu0 0.0
      %331 = vmatprep.subr.mxu0 0.0
      %332 = vmatpush1.msra.mxu0 0.0
      %333 = vmatprep.subr.mxu0 0.0
      %334 = vmatpush1.msra.mxu0 0.0
      %335 = vmatprep.subr.mxu0 0.0
      %336 = vmatpush1.msra.mxu0 0.0
      %337 = vmatprep.subr.mxu0 0.0
      %338 = vmatpush1.msra.mxu0 0.0
      %339 = vmatprep.subr.mxu0 0.0
      %340 = vmatpush1.msra.mxu0 0.0
      %341 = vmatprep.subr.mxu0 0.0
      %342 = vmatpush1.msra.mxu0 0.0
      %343 = vmatprep.subr.mxu0 0.0
      %344 = vmatpush1.msra.mxu0 0.0
      %345 = vmatprep.subr.mxu0 0.0
      %346 = vmatpush1.msra.mxu0 0.0
      %347 = vmatprep.subr.mxu0 0.0
      %348 = vmatpush1.msra.mxu0 0.0
      %349 = vmatprep.subr.mxu0 0.0
      %350 = vmatpush1.msra.mxu0 0.0
      %351 = vmatprep.subr.mxu0 0.0
      %352 = vmatpush1.msra.mxu0 0.0
      %353 = vmatprep.mubr.f32.mxu0 0.0
      %354 = vmatmul.mubr.f32.gmra.mrb[0].mxu0 %v120
      %v355 = vpop.f32.mrb[0].mxu0
      %v356 = vadd.f32 0.0, %v355
      %v357 = vpop.f32.mrb[0].mxu0
      %358 = vdwg.mxu0
      %v359 = vadd.f32 %v109, %v356
      %s360 = scalar_lea.vmem %s10, 32
      %v361 = vld [vmem:[%s360] sm:$0xff]
      %v362 = vld [vmem:[%s360 + $0x8] sm:$0xff]
      %v363 = vld [vmem:[%s360 + $0x10] sm:$0xff]
      %v364 = vld [vmem:[%s360 + $0x18] sm:$0xff]
      %365 = vmatprep.subr.mxu0 0.0
      %366 = vmatpush1.msra.mxu0 %v361
      %367 = vmatprep.subr.mxu0 0.0
      %368 = vmatpush1.msra.mxu0 %v362
      %369 = vmatprep.subr.mxu0 0.0
      %370 = vmatpush1.msra.mxu0 %v363
      %371 = vmatprep.subr.mxu0 0.0
      %372 = vmatpush1.msra.mxu0 %v364
      %373 = vmatprep.subr.mxu0 0.0
      %374 = vmatpush1.msra.mxu0 0.0
      %375 = vmatprep.subr.mxu0 0.0
      %376 = vmatpush1.msra.mxu0 0.0
      %377 = vmatprep.subr.mxu0 0.0
      %378 = vmatpush1.msra.mxu0 0.0
      %379 = vmatprep.subr.mxu0 0.0
      %380 = vmatpush1.msra.mxu0 0.0
      %381 = vmatprep.subr.mxu0 0.0
      %382 = vmatpush1.msra.mxu0 0.0
      %383 = vmatprep.subr.mxu0 0.0
      %384 = vmatpush1.msra.mxu0 0.0
      %385 = vmatprep.subr.mxu0 0.0
      %386 = vmatpush1.msra.mxu0 0.0
      %387 = vmatprep.subr.mxu0 0.0
      %388 = vmatpush1.msra.mxu0 0.0
      %389 = vmatprep.subr.mxu0 0.0
      %390 = vmatpush1.msra.mxu0 0.0
      %391 = vmatprep.subr.mxu0 0.0
      %392 = vmatpush1.msra.mxu0 0.0
      %393 = vmatprep.subr.mxu0 0.0
      %394 = vmatpush1.msra.mxu0 0.0
      %395 = vmatprep.subr.mxu0 0.0
      %396 = vmatpush1.msra.mxu0 0.0
      %397 = vmatprep.subr.mxu0 0.0
      %398 = vmatpush1.msra.mxu0 0.0
      %399 = vmatprep.subr.mxu0 0.0
      %400 = vmatpush1.msra.mxu0 0.0
      %401 = vmatprep.subr.mxu0 0.0
      %402 = vmatpush1.msra.mxu0 0.0
      %403 = vmatprep.subr.mxu0 0.0
      %404 = vmatpush1.msra.mxu0 0.0
      %405 = vmatprep.subr.mxu0 0.0
      %406 = vmatpush1.msra.mxu0 0.0
      %407 = vmatprep.subr.mxu0 0.0
      %408 = vmatpush1.msra.mxu0 0.0
      %409 = vmatprep.subr.mxu0 0.0
      %410 = vmatpush1.msra.mxu0 0.0
      %411 = vmatprep.subr.mxu0 0.0
      %412 = vmatpush1.msra.mxu0 0.0
      %413 = vmatprep.subr.mxu0 0.0
      %414 = vmatpush1.msra.mxu0 0.0
      %415 = vmatprep.subr.mxu0 0.0
      %416 = vmatpush1.msra.mxu0 0.0
      %417 = vmatprep.subr.mxu0 0.0
      %418 = vmatpush1.msra.mxu0 0.0
      %419 = vmatprep.subr.mxu0 0.0
      %420 = vmatpush1.msra.mxu0 0.0
      %421 = vmatprep.subr.mxu0 0.0
      %422 = vmatpush1.msra.mxu0 0.0
      %423 = vmatprep.subr.mxu0 0.0
      %424 = vmatpush1.msra.mxu0 0.0
      %425 = vmatprep.subr.mxu0 0.0
      %426 = vmatpush1.msra.mxu0 0.0
      %427 = vmatprep.subr.mxu0 0.0
      %428 = vmatpush1.msra.mxu0 0.0
      %429 = vmatprep.mubr.f32.mxu0 0.0
      %430 = vmatmul.mubr.f32.gmra.mrb[0].mxu0 %v199
      %v431 = vpop.f32.mrb[0].mxu0
      %v432 = vadd.f32 0.0, %v431
      %v433 = vpop.f32.mrb[0].mxu0
      %434 = vdwg.mxu0
      %v435 = vadd.f32 %v359, %v432
      %s436 = scalar_lea.vmem %s11, 1
      %v437 = vld [vmem:[%s436] sm:$0x1]
      %v439 = vlaneseq
      %v440 = vshrl.u32 %v439, 7
      %v441 = vsub.s32 0, %v440
      %v442 = vrot.slane %v437, %v441
      %v444 = vadd.f32 %v435, %v442
      %v445 = vxor.u32 %v444, 2147483648
      %v446 = vmul.f32 %v445, 1.442695
      %v447 = vpow.pop %v446
      %v448 = vadd.f32 %v447, 1.0
      %v449 = vrcp.pop %v448
      %v450 = vmul.f32 1.0, %v449
      %s451 = scalar_lea.vmem %s9, 32
      %v452 = vld [vmem:[%s451] sm:$0xff]
      %v453 = vld [vmem:[%s451 + $0x8] sm:$0xff]
      %454 = vmatprep.subr.mxu0 0.0
      %455 = vmatpush1.msra.mxu0 %v452
      %456 = vmatprep.subr.mxu0 0.0
      %457 = vmatpush1.msra.mxu0 %v453
      %458 = vmatprep.subr.mxu0 0.0
      %459 = vmatpush1.msra.mxu0 0.0
      %460 = vmatprep.subr.mxu0 0.0
      %461 = vmatpush1.msra.mxu0 0.0
      %462 = vmatprep.subr.mxu0 0.0
      %463 = vmatpush1.msra.mxu0 0.0
      %464 = vmatprep.subr.mxu0 0.0
      %465 = vmatpush1.msra.mxu0 0.0
      %466 = vmatprep.subr.mxu0 0.0
      %467 = vmatpush1.msra.mxu0 0.0
      %468 = vmatprep.subr.mxu0 0.0
      %469 = vmatpush1.msra.mxu0 0.0
      %470 = vmatprep.subr.mxu0 0.0
      %471 = vmatpush1.msra.mxu0 0.0
      %472 = vmatprep.subr.mxu0 0.0
      %473 = vmatpush1.msra.mxu0 0.0
      %474 = vmatprep.subr.mxu0 0.0
      %475 = vmatpush1.msra.mxu0 0.0
      %476 = vmatprep.subr.mxu0 0.0
      %477 = vmatpush1.msra.mxu0 0.0
      %478 = vmatprep.subr.mxu0 0.0
      %479 = vmatpush1.msra.mxu0 0.0
      %480 = vmatprep.subr.mxu0 0.0
      %481 = vmatpush1.msra.mxu0 0.0
      %482 = vmatprep.subr.mxu0 0.0
      %483 = vmatpush1.msra.mxu0 0.0
      %484 = vmatprep.subr.mxu0 0.0
      %485 = vmatpush1.msra.mxu0 0.0
      %486 = vmatprep.subr.mxu0 0.0
      %487 = vmatpush1.msra.mxu0 0.0
      %488 = vmatprep.subr.mxu0 0.0
      %489 = vmatpush1.msra.mxu0 0.0
      %490 = vmatprep.subr.mxu0 0.0
      %491 = vmatpush1.msra.mxu0 0.0
      %492 = vmatprep.subr.mxu0 0.0
      %493 = vmatpush1.msra.mxu0 0.0
      %494 = vmatprep.subr.mxu0 0.0
      %495 = vmatpush1.msra.mxu0 0.0
      %496 = vmatprep.subr.mxu0 0.0
      %497 = vmatpush1.msra.mxu0 0.0
      %498 = vmatprep.subr.mxu0 0.0
      %499 = vmatpush1.msra.mxu0 0.0
      %500 = vmatprep.subr.mxu0 0.0
      %501 = vmatpush1.msra.mxu0 0.0
      %502 = vmatprep.subr.mxu0 0.0
      %503 = vmatpush1.msra.mxu0 0.0
      %504 = vmatprep.subr.mxu0 0.0
      %505 = vmatpush1.msra.mxu0 0.0
      %506 = vmatprep.subr.mxu0 0.0
      %507 = vmatpush1.msra.mxu0 0.0
      %508 = vmatprep.subr.mxu0 0.0
      %509 = vmatpush1.msra.mxu0 0.0
      %510 = vmatprep.subr.mxu0 0.0
      %511 = vmatpush1.msra.mxu0 0.0
      %512 = vmatprep.subr.mxu0 0.0
      %513 = vmatpush1.msra.mxu0 0.0
      %514 = vmatprep.subr.mxu0 0.0
      %515 = vmatpush1.msra.mxu0 0.0
      %516 = vmatprep.subr.mxu0 0.0
      %517 = vmatpush1.msra.mxu0 0.0
      %518 = vmatprep.mubr.f32.mxu0 0.0
      %519 = vmatmul.mubr.f32.gmra.mrb[0].mxu0 %v120
      %v520 = vpop.f32.mrb[0].mxu0
      %v521 = vadd.f32 0.0, %v520
      %v522 = vpop.f32.mrb[0].mxu0
      %523 = vdwg.mxu0
      %v524 = vadd.f32 %v111, %v521
      %s525 = scalar_lea.vmem %s10, 64
      %v526 = vld [vmem:[%s525] sm:$0xff]
      %v527 = vld [vmem:[%s525 + $0x8] sm:$0xff]
      %v528 = vld [vmem:[%s525 + $0x10] sm:$0xff]
      %v529 = vld [vmem:[%s525 + $0x18] sm:$0xff]
      %530 = vmatprep.subr.mxu0 0.0
      %531 = vmatpush1.msra.mxu0 %v526
      %532 = vmatprep.subr.mxu0 0.0
      %533 = vmatpush1.msra.mxu0 %v527
      %534 = vmatprep.subr.mxu0 0.0
      %535 = vmatpush1.msra.mxu0 %v528
      %536 = vmatprep.subr.mxu0 0.0
      %537 = vmatpush1.msra.mxu0 %v529
      %538 = vmatprep.subr.mxu0 0.0
      %539 = vmatpush1.msra.mxu0 0.0
      %540 = vmatprep.subr.mxu0 0.0
      %541 = vmatpush1.msra.mxu0 0.0
      %542 = vmatprep.subr.mxu0 0.0
      %543 = vmatpush1.msra.mxu0 0.0
      %544 = vmatprep.subr.mxu0 0.0
      %545 = vmatpush1.msra.mxu0 0.0
      %546 = vmatprep.subr.mxu0 0.0
      %547 = vmatpush1.msra.mxu0 0.0
      %548 = vmatprep.subr.mxu0 0.0
      %549 = vmatpush1.msra.mxu0 0.0
      %550 = vmatprep.subr.mxu0 0.0
      %551 = vmatpush1.msra.mxu0 0.0
      %552 = vmatprep.subr.mxu0 0.0
      %553 = vmatpush1.msra.mxu0 0.0
      %554 = vmatprep.subr.mxu0 0.0
      %555 = vmatpush1.msra.mxu0 0.0
      %556 = vmatprep.subr.mxu0 0.0
      %557 = vmatpush1.msra.mxu0 0.0
      %558 = vmatprep.subr.mxu0 0.0
      %559 = vmatpush1.msra.mxu0 0.0
      %560 = vmatprep.subr.mxu0 0.0
      %561 = vmatpush1.msra.mxu0 0.0
      %562 = vmatprep.subr.mxu0 0.0
      %563 = vmatpush1.msra.mxu0 0.0
      %564 = vmatprep.subr.mxu0 0.0
      %565 = vmatpush1.msra.mxu0 0.0
      %566 = vmatprep.subr.mxu0 0.0
      %567 = vmatpush1.msra.mxu0 0.0
      %568 = vmatprep.subr.mxu0 0.0
      %569 = vmatpush1.msra.mxu0 0.0
      %570 = vmatprep.subr.mxu0 0.0
      %571 = vmatpush1.msra.mxu0 0.0
      %572 = vmatprep.subr.mxu0 0.0
      %573 = vmatpush1.msra.mxu0 0.0
      %574 = vmatprep.subr.mxu0 0.0
      %575 = vmatpush1.msra.mxu0 0.0
      %576 = vmatprep.subr.mxu0 0.0
      %577 = vmatpush1.msra.mxu0 0.0
      %578 = vmatprep.subr.mxu0 0.0
      %579 = vmatpush1.msra.mxu0 0.0
      %580 = vmatprep.subr.mxu0 0.0
      %581 = vmatpush1.msra.mxu0 0.0
      %582 = vmatprep.subr.mxu0 0.0
      %583 = vmatpush1.msra.mxu0 0.0
      %584 = vmatprep.subr.mxu0 0.0
      %585 = vmatpush1.msra.mxu0 0.0
      %586 = vmatprep.subr.mxu0 0.0
      %587 = vmatpush1.msra.mxu0 0.0
      %588 = vmatprep.subr.mxu0 0.0
      %589 = vmatpush1.msra.mxu0 0.0
      %590 = vmatprep.subr.mxu0 0.0
      %591 = vmatpush1.msra.mxu0 0.0
      %592 = vmatprep.subr.mxu0 0.0
      %593 = vmatpush1.msra.mxu0 0.0
      %594 = vmatprep.mubr.f32.mxu0 0.0
      %595 = vmatmul.mubr.f32.gmra.mrb[0].mxu0 %v199
      %v596 = vpop.f32.mrb[0].mxu0
      %v597 = vadd.f32 0.0, %v596
      %v598 = vpop.f32.mrb[0].mxu0
      %599 = vdwg.mxu0
      %v600 = vadd.f32 %v524, %v597
      %s601 = scalar_lea.vmem %s11, 2
      %v602 = vld [vmem:[%s601] sm:$0x1]
      %v604 = vlaneseq
      %v605 = vshrl.u32 %v604, 7
      %v606 = vsub.s32 0, %v605
      %v607 = vrot.slane %v602, %v606
      %v609 = vadd.f32 %v600, %v607
      %v610 = vtanh.pop %v609
      %s611 = scalar_lea.vmem %s9, 48
      %v612 = vld [vmem:[%s611] sm:$0xff]
      %v613 = vld [vmem:[%s611 + $0x8] sm:$0xff]
      %614 = vmatprep.subr.mxu0 0.0
      %615 = vmatpush1.msra.mxu0 %v612
      %616 = vmatprep.subr.mxu0 0.0
      %617 = vmatpush1.msra.mxu0 %v613
      %618 = vmatprep.subr.mxu0 0.0
      %619 = vmatpush1.msra.mxu0 0.0
      %620 = vmatprep.subr.mxu0 0.0
      %621 = vmatpush1.msra.mxu0 0.0
      %622 = vmatprep.subr.mxu0 0.0
      %623 = vmatpush1.msra.mxu0 0.0
      %624 = vmatprep.subr.mxu0 0.0
      %625 = vmatpush1.msra.mxu0 0.0
      %626 = vmatprep.subr.mxu0 0.0
      %627 = vmatpush1.msra.mxu0 0.0
      %628 = vmatprep.subr.mxu0 0.0
      %629 = vmatpush1.msra.mxu0 0.0
      %630 = vmatprep.subr.mxu0 0.0
      %631 = vmatpush1.msra.mxu0 0.0
      %632 = vmatprep.subr.mxu0 0.0
      %633 = vmatpush1.msra.mxu0 0.0
      %634 = vmatprep.subr.mxu0 0.0
      %635 = vmatpush1.msra.mxu0 0.0
      %636 = vmatprep.subr.mxu0 0.0
      %637 = vmatpush1.msra.mxu0 0.0
      %638 = vmatprep.subr.mxu0 0.0
      %639 = vmatpush1.msra.mxu0 0.0
      %640 = vmatprep.subr.mxu0 0.0
      %641 = vmatpush1.msra.mxu0 0.0
      %642 = vmatprep.subr.mxu0 0.0
      %643 = vmatpush1.msra.mxu0 0.0
      %644 = vmatprep.subr.mxu0 0.0
      %645 = vmatpush1.msra.mxu0 0.0
      %646 = vmatprep.subr.mxu0 0.0
      %647 = vmatpush1.msra.mxu0 0.0
      %648 = vmatprep.subr.mxu0 0.0
      %649 = vmatpush1.msra.mxu0 0.0
      %650 = vmatprep.subr.mxu0 0.0
      %651 = vmatpush1.msra.mxu0 0.0
      %652 = vmatprep.subr.mxu0 0.0
      %653 = vmatpush1.msra.mxu0 0.0
      %654 = vmatprep.subr.mxu0 0.0
      %655 = vmatpush1.msra.mxu0 0.0
      %656 = vmatprep.subr.mxu0 0.0
      %657 = vmatpush1.msra.mxu0 0.0
      %658 = vmatprep.subr.mxu0 0.0
      %659 = vmatpush1.msra.mxu0 0.0
      %660 = vmatprep.subr.mxu0 0.0
      %661 = vmatpush1.msra.mxu0 0.0
      %662 = vmatprep.subr.mxu0 0.0
      %663 = vmatpush1.msra.mxu0 0.0
      %664 = vmatprep.subr.mxu0 0.0
      %665 = vmatpush1.msra.mxu0 0.0
      %666 = vmatprep.subr.mxu0 0.0
      %667 = vmatpush1.msra.mxu0 0.0
      %668 = vmatprep.subr.mxu0 0.0
      %669 = vmatpush1.msra.mxu0 0.0
      %670 = vmatprep.subr.mxu0 0.0
      %671 = vmatpush1.msra.mxu0 0.0
      %672 = vmatprep.subr.mxu0 0.0
      %673 = vmatpush1.msra.mxu0 0.0
      %674 = vmatprep.subr.mxu0 0.0
      %675 = vmatpush1.msra.mxu0 0.0
      %676 = vmatprep.subr.mxu0 0.0
      %677 = vmatpush1.msra.mxu0 0.0
      %678 = vmatprep.mubr.f32.mxu0 0.0
      %679 = vmatmul.mubr.f32.gmra.mrb[0].mxu0 %v120
      %v680 = vpop.f32.mrb[0].mxu0
      %v681 = vadd.f32 0.0, %v680
      %v682 = vpop.f32.mrb[0].mxu0
      %683 = vdwg.mxu0
      %v684 = vadd.f32 %v113, %v681
      %s685 = scalar_lea.vmem %s10, 96
      %v686 = vld [vmem:[%s685] sm:$0xff]
      %v687 = vld [vmem:[%s685 + $0x8] sm:$0xff]
      %v688 = vld [vmem:[%s685 + $0x10] sm:$0xff]
      %v689 = vld [vmem:[%s685 + $0x18] sm:$0xff]
      %690 = vmatprep.subr.mxu0 0.0
      %691 = vmatpush1.msra.mxu0 %v686
      %692 = vmatprep.subr.mxu0 0.0
      %693 = vmatpush1.msra.mxu0 %v687
      %694 = vmatprep.subr.mxu0 0.0
      %695 = vmatpush1.msra.mxu0 %v688
      %696 = vmatprep.subr.mxu0 0.0
      %697 = vmatpush1.msra.mxu0 %v689
      %698 = vmatprep.subr.mxu0 0.0
      %699 = vmatpush1.msra.mxu0 0.0
      %700 = vmatprep.subr.mxu0 0.0
      %701 = vmatpush1.msra.mxu0 0.0
      %702 = vmatprep.subr.mxu0 0.0
      %703 = vmatpush1.msra.mxu0 0.0
      %704 = vmatprep.subr.mxu0 0.0
      %705 = vmatpush1.msra.mxu0 0.0
      %706 = vmatprep.subr.mxu0 0.0
      %707 = vmatpush1.msra.mxu0 0.0
      %708 = vmatprep.subr.mxu0 0.0
      %709 = vmatpush1.msra.mxu0 0.0
      %710 = vmatprep.subr.mxu0 0.0
      %711 = vmatpush1.msra.mxu0 0.0
      %712 = vmatprep.subr.mxu0 0.0
      %713 = vmatpush1.msra.mxu0 0.0
      %714 = vmatprep.subr.mxu0 0.0
      %715 = vmatpush1.msra.mxu0 0.0
      %716 = vmatprep.subr.mxu0 0.0
      %717 = vmatpush1.msra.mxu0 0.0
      %718 = vmatprep.subr.mxu0 0.0
      %719 = vmatpush1.msra.mxu0 0.0
      %720 = vmatprep.subr.mxu0 0.0
      %721 = vmatpush1.msra.mxu0 0.0
      %722 = vmatprep.subr.mxu0 0.0
      %723 = vmatpush1.msra.mxu0 0.0
      %724 = vmatprep.subr.mxu0 0.0
      %725 = vmatpush1.msra.mxu0 0.0
      %726 = vmatprep.subr.mxu0 0.0
      %727 = vmatpush1.msra.mxu0 0.0
      %728 = vmatprep.subr.mxu0 0.0
      %729 = vmatpush1.msra.mxu0 0.0
      %730 = vmatprep.subr.mxu0 0.0
      %731 = vmatpush1.msra.mxu0 0.0
      %732 = vmatprep.subr.mxu0 0.0
      %733 = vmatpush1.msra.mxu0 0.0
      %734 = vmatprep.subr.mxu0 0.0
      %735 = vmatpush1.msra.mxu0 0.0
      %736 = vmatprep.subr.mxu0 0.0
      %737 = vmatpush1.msra.mxu0 0.0
      %738 = vmatprep.subr.mxu0 0.0
      %739 = vmatpush1.msra.mxu0 0.0
      %740 = vmatprep.subr.mxu0 0.0
      %741 = vmatpush1.msra.mxu0 0.0
      %742 = vmatprep.subr.mxu0 0.0
      %743 = vmatpush1.msra.mxu0 0.0
      %744 = vmatprep.subr.mxu0 0.0
      %745 = vmatpush1.msra.mxu0 0.0
      %746 = vmatprep.subr.mxu0 0.0
      %747 = vmatpush1.msra.mxu0 0.0
      %748 = vmatprep.subr.mxu0 0.0
      %749 = vmatpush1.msra.mxu0 0.0
      %750 = vmatprep.subr.mxu0 0.0
      %751 = vmatpush1.msra.mxu0 0.0
      %752 = vmatprep.subr.mxu0 0.0
      %753 = vmatpush1.msra.mxu0 0.0
      %754 = vmatprep.mubr.f32.mxu0 0.0
      %755 = vmatmul.mubr.f32.gmra.mrb[0].mxu0 %v199
      %v756 = vpop.f32.mrb[0].mxu0
      %v757 = vadd.f32 0.0, %v756
      %v758 = vpop.f32.mrb[0].mxu0
      %759 = vdwg.mxu0
      %v760 = vadd.f32 %v684, %v757
      %s761 = scalar_lea.vmem %s11, 3
      %v762 = vld [vmem:[%s761] sm:$0x1]
      %v764 = vlaneseq
      %v765 = vshrl.u32 %v764, 7
      %v766 = vsub.s32 0, %v765
      %v767 = vrot.slane %v762, %v766
      %v769 = vadd.f32 %v760, %v767
      %v770 = vxor.u32 %v769, 2147483648
      %v771 = vmul.f32 %v770, 1.442695
      %v772 = vpow.pop %v771
      %v773 = vadd.f32 %v772, 1.0
      %v774 = vrcp.pop %v773
      %v775 = vmul.f32 1.0, %v774
      %v776 = vld [vmem:[#allocation3] sm:$0x3]
      %v777 = vmul.f32 %v450, %v776
      %v778 = vmul.f32 %v285, %v610
      %v779 = vadd.f32 %v777, %v778
      %v780 = vtanh.pop %v779
      %v781 = vmul.f32 %v775, %v780
      %s782 = scalar_lea.vmem %s4, %s105
      %v783 = vld [vmem:[%s782] sm:$0x3]
      %v784 = vmul.f32 %v781, %v783
      %785 = vst.msk [vmem:[#allocation3] sm:$0x3] %vm89, %v779
      %786 = vst.msk [vmem:[#allocation2] sm:$0x3] %vm89, %v784
      %v787 = vld [vmem:[%s12] sm:$0xff]
      %v788 = vld [vmem:[%s12 + $0x8] sm:$0xff]
      %v789 = vld [vmem:[%s12 + $0x10] sm:$0xff]
      %v790 = vld [vmem:[%s12 + $0x18] sm:$0xff]
      %v792 = vsel %vm197, %v784, 0
      %794 = vmatprep.subr.mxu0 0.0
      %795 = vmatpush1.msra.mxu0 %v787
      %796 = vmatprep.subr.mxu0 0.0
      %797 = vmatpush1.msra.mxu0 %v788
      %798 = vmatprep.subr.mxu0 0.0
      %799 = vmatpush1.msra.mxu0 %v789
      %800 = vmatprep.subr.mxu0 0.0
      %801 = vmatpush1.msra.mxu0 %v790
      %802 = vmatprep.subr.mxu0 0.0
      %803 = vmatpush1.msra.mxu0 0.0
      %804 = vmatprep.subr.mxu0 0.0
      %805 = vmatpush1.msra.mxu0 0.0
      %806 = vmatprep.subr.mxu0 0.0
      %807 = vmatpush1.msra.mxu0 0.0
      %808 = vmatprep.subr.mxu0 0.0
      %809 = vmatpush1.msra.mxu0 0.0
      %810 = vmatprep.subr.mxu0 0.0
      %811 = vmatpush1.msra.mxu0 0.0
      %812 = vmatprep.subr.mxu0 0.0
      %813 = vmatpush1.msra.mxu0 0.0
      %814 = vmatprep.subr.mxu0 0.0
      %815 = vmatpush1.msra.mxu0 0.0
      %816 = vmatprep.subr.mxu0 0.0
      %817 = vmatpush1.msra.mxu0 0.0
      %818 = vmatprep.subr.mxu0 0.0
      %819 = vmatpush1.msra.mxu0 0.0
      %820 = vmatprep.subr.mxu0 0.0
      %821 = vmatpush1.msra.mxu0 0.0
      %822 = vmatprep.subr.mxu0 0.0
      %823 = vmatpush1.msra.mxu0 0.0
      %824 = vmatprep.subr.mxu0 0.0
      %825 = vmatpush1.msra.mxu0 0.0
      %826 = vmatprep.subr.mxu0 0.0
      %827 = vmatpush1.msra.mxu0 0.0
      %828 = vmatprep.subr.mxu0 0.0
      %829 = vmatpush1.msra.mxu0 0.0
      %830 = vmatprep.subr.mxu0 0.0
      %831 = vmatpush1.msra.mxu0 0.0
      %832 = vmatprep.subr.mxu0 0.0
      %833 = vmatpush1.msra.mxu0 0.0
      %834 = vmatprep.subr.mxu0 0.0
      %835 = vmatpush1.msra.mxu0 0.0
      %836 = vmatprep.subr.mxu0 0.0
      %837 = vmatpush1.msra.mxu0 0.0
      %838 = vmatprep.subr.mxu0 0.0
      %839 = vmatpush1.msra.mxu0 0.0
      %840 = vmatprep.subr.mxu0 0.0
      %841 = vmatpush1.msra.mxu0 0.0
      %842 = vmatprep.subr.mxu0 0.0
      %843 = vmatpush1.msra.mxu0 0.0
      %844 = vmatprep.subr.mxu0 0.0
      %845 = vmatpush1.msra.mxu0 0.0
      %846 = vmatprep.subr.mxu0 0.0
      %847 = vmatpush1.msra.mxu0 0.0
      %848 = vmatprep.subr.mxu0 0.0
      %849 = vmatpush1.msra.mxu0 0.0
      %850 = vmatprep.subr.mxu0 0.0
      %851 = vmatpush1.msra.mxu0 0.0
      %852 = vmatprep.subr.mxu0 0.0
      %853 = vmatpush1.msra.mxu0 0.0
      %854 = vmatprep.subr.mxu0 0.0
      %855 = vmatpush1.msra.mxu0 0.0
      %856 = vmatprep.subr.mxu0 0.0
      %857 = vmatpush1.msra.mxu0 0.0
      %858 = vmatprep.mubr.f32.mxu0 0.0
      %859 = vmatmul.mubr.f32.gmra.mrb[0].mxu0 %v792
      %v860 = vpop.f32.mrb[0].mxu0
      %v861 = vadd.f32 0.0, %v860
      %v862 = vpop.f32.mrb[0].mxu0
      %863 = vdwg.mxu0
      %v864 = vld [vmem:[%s14] sm:$0x7]
      %v865 = vld [vmem:[%s15] sm:$0x7]
      %v866 = vld [vmem:[#allocation7] sm:$0x3]
      %v867 = vld [vmem:[#allocation8] sm:$0x3]
      %v868 = vlaneseq
      %v869 = vshrl.u32 %v868, 7
      %v870 = vsub.s32 0, %v869
      %v871 = vrot.slane %v866, %v870
      %873 = vbcast.lane.b32.xlu0 %v871, 256
      %v874 = vpop.permute.xlu0 %873
      %v875 = vlaneseq
      %v876 = vshrl.u32 %v875, 7
      %v877 = vsub.s32 1, %v876
      %v878 = vrot.slane %v866, %v877
      %880 = vbcast.lane.b32.xlu0 %v878, 256
      %v881 = vpop.permute.xlu0 %880
      %v882 = vlaneseq
      %v883 = vshrl.u32 %v882, 7
      %v884 = vsub.s32 0, %v883
      %v885 = vrot.slane %v864, %v884
      %v886 = vmul.f32 %v874, %v885
      %v887 = vmul.f32 %v881, %v885
      %v888 = vadd.f32 %v886, 0.0
      %v889 = vadd.f32 %v887, 0.0
      %v890 = vlaneseq
      %v891 = vshrl.u32 %v890, 7
      %v892 = vsub.s32 0, %v891
      %v893 = vrot.slane %v867, %v892
      %895 = vbcast.lane.b32.xlu0 %v893, 256
      %v896 = vpop.permute.xlu0 %895
      %v897 = vlaneseq
      %v898 = vshrl.u32 %v897, 7
      %v899 = vsub.s32 1, %v898
      %v900 = vrot.slane %v867, %v899
      %902 = vbcast.lane.b32.xlu0 %v900, 256
      %v903 = vpop.permute.xlu0 %902
      %v904 = vlaneseq
      %v905 = vshrl.u32 %v904, 7
      %v906 = vsub.s32 0, %v905
      %v907 = vrot.slane %v865, %v906
      %v908 = vmul.f32 %v896, %v907
      %v909 = vmul.f32 %v903, %v907
      %v910 = vadd.f32 %v888, %v908
      %v911 = vadd.f32 %v889, %v909
      %s913 = sor.u32 256, 1
      %914 = vbcast.lane.b32.xlu0 %v871, %s913
      %v915 = vpop.permute.xlu0 %914
      %s917 = sor.u32 256, 1
      %918 = vbcast.lane.b32.xlu0 %v878, %s917
      %v919 = vpop.permute.xlu0 %918
      %v920 = vlaneseq
      %v921 = vshrl.u32 %v920, 7
      %v922 = vsub.s32 1, %v921
      %v923 = vrot.slane %v864, %v922
      %v924 = vmul.f32 %v915, %v923
      %v925 = vmul.f32 %v919, %v923
      %v926 = vadd.f32 %v910, %v924
      %v927 = vadd.f32 %v911, %v925
      %s929 = sor.u32 256, 1
      %930 = vbcast.lane.b32.xlu0 %v893, %s929
      %v931 = vpop.permute.xlu0 %930
      %s933 = sor.u32 256, 1
      %934 = vbcast.lane.b32.xlu0 %v900, %s933
      %v935 = vpop.permute.xlu0 %934
      %v936 = vlaneseq
      %v937 = vshrl.u32 %v936, 7
      %v938 = vsub.s32 1, %v937
      %v939 = vrot.slane %v865, %v938
      %v940 = vmul.f32 %v931, %v939
      %v941 = vmul.f32 %v935, %v939
      %v942 = vadd.f32 %v926, %v940
      %v943 = vadd.f32 %v927, %v941
      %s945 = sor.u32 256, 2
      %946 = vbcast.lane.b32.xlu0 %v871, %s945
      %v947 = vpop.permute.xlu0 %946
      %s949 = sor.u32 256, 2
      %950 = vbcast.lane.b32.xlu0 %v878, %s949
      %v951 = vpop.permute.xlu0 %950
      %v952 = vlaneseq
      %v953 = vshrl.u32 %v952, 7
      %v954 = vsub.s32 2, %v953
      %v955 = vrot.slane %v864, %v954
      %v956 = vmul.f32 %v947, %v955
      %v957 = vmul.f32 %v951, %v955
      %v958 = vadd.f32 %v942, %v956
      %v959 = vadd.f32 %v943, %v957
      %s961 = sor.u32 256, 2
      %962 = vbcast.lane.b32.xlu0 %v893, %s961
      %v963 = vpop.permute.xlu0 %962
      %s965 = sor.u32 256, 2
      %966 = vbcast.lane.b32.xlu0 %v900, %s965
      %v967 = vpop.permute.xlu0 %966
      %v968 = vlaneseq
      %v969 = vshrl.u32 %v968, 7
      %v970 = vsub.s32 2, %v969
      %v971 = vrot.slane %v865, %v970
      %v972 = vmul.f32 %v963, %v971
      %v973 = vmul.f32 %v967, %v971
      %v974 = vadd.f32 %v958, %v972
      %v975 = vadd.f32 %v959, %v973
      %v978 = vunpack.c.l.s4 1966171168
      %v979 = vunpack.c.0.s8 %v978
      %v980 = vlaneseq
      %v981 = vshrl.u32 %v980, 7
      %v982 = vsub.s32 %v979, %v981
      %v983 = vrot.slane %v861, %v982
      %v984 = vcombine.high %v983, %v983
      %v986 = vunpack.c.l.s4 1966171168
      %v987 = vunpack.c.0.s8 %v986
      %v988 = vlaneseq
      %v989 = vshrl.u32 %v988, 7
      %v990 = vsub.s32 %v987, %v989
      %v991 = vrot.slane %v983, %v990
      %v993 = vunpack.c.l.s4 1966171168
      %v994 = vunpack.c.0.s8 %v993
      %v995 = vlaneseq
      %v996 = vshrl.u32 %v995, 7
      %v997 = vsub.s32 %v994, %v996
      %v998 = vrot.slane %v984, %v997
      %v999 = vlaneseq
      %v1000 = vshrl.u32 %v999, 7
      %v1001 = vsub.s32 0, %v1000
      %v1002 = vrot.slane %v991, %v1001
      %v1003 = vlaneseq
      %v1004 = vshrl.u32 %v1003, 7
      %v1005 = vsub.s32 0, %v1004
      %v1006 = vrot.slane %v998, %v1005
      %v1009 = vadd.f32 %v1002, %v974
      %v1010 = vadd.f32 %v1006, %v975
      %v1011 = vld [vmem:[%s7] sm:$0xff]
      %v1012 = vld [vmem:[%s7 + $0x8] sm:$0xff]
      %v1013 = vadd.f32 %v1009, %v1011
      %v1014 = vadd.f32 %v1010, %v1012
      %v1015 = vtanh.pop %v1013
      %v1016 = vtanh.pop %v1014
      %v1017 = vld [vmem:[%s13] sm:$0x1]
      %v1019 = vlaneseq
      %v1020 = vshrl.u32 %v1019, 7
      %v1021 = vsub.s32 0, %v1020
      %v1022 = vrot.slane %v1017, %v1021
      %v1024 = vmul.f32 %v1015, %v1022
      %v1025 = vmul.f32 %v1016, %v1022
      %v1026 = vsel %vm118, %v1024, 0.0
      %1027 = vadd.xlane.f32.xlu0 %v1026
      %v1028 = vpop.xlane.xlu0 %1027
      %v1029 = vsel %vm118, %v1025, 0.0
      %1030 = vadd.xlane.f32.xlu0 %v1029
      %v1031 = vpop.xlane.xlu0 %1030
      %v1032 = vld [vmem:[%s8] sm:$0x3]
      %v1034 = vlaneseq
      %v1035 = vshrl.u32 %v1034, 7
      %v1036 = vsub.s32 0, %v1035
      %v1037 = vrot.slane %v1032, %v1036
      %1039 = vbcast.lane.b32.xlu0 %v1037, 256
      %v1040 = vpop.permute.xlu0 %1039
      %v1041 = vlaneseq
      %v1042 = vshrl.u32 %v1041, 7
      %v1043 = vsub.s32 1, %v1042
      %v1044 = vrot.slane %v1032, %v1043
      %1046 = vbcast.lane.b32.xlu0 %v1044, 256
      %v1047 = vpop.permute.xlu0 %1046
      %v1050 = vadd.f32 %v1028, %v1040
      %v1051 = vadd.f32 %v1031, %v1047
      %1054 = vset.pattern.permute.xlu0 0
      %1055 = vperm.xlu0 %1054, %v1050
      %v1056 = vpop.permute.xlu0 %1055
      %1057 = vset.pattern.permute.xlu0 0
      %1058 = vperm.xlu0 %1057, %v1051
      %v1059 = vpop.permute.xlu0 %1058
      %v1060 = vlaneseq
      %v1061 = vand.u32 %v1060, 127
      %v1062 = vlaneseq
      %v1063 = vshrl.u32 %v1062, 7
      %v1064 = vsub.s32 %v1061, %v1063
      %v1065 = vrot.slane %v1056, %v1064
      %v1066 = vlaneseq
      %v1067 = vshrl.u32 %v1066, 7
      %v1068 = vsub.s32 %v1061, %v1067
      %v1069 = vrot.slane %v1059, %v1068
      %vm1070 = vcmask 1041409
      %v1071 = vsel %vm1070, %v1069, %v1065
      %vm1073 = vcmask 58368
      %v1074 = vsel %vm1073, %v1071, -inf
      %1075 = vmax.xlane.f32.xlu0 %v1074
      %v1076 = vpop.xlane.xlu0 %1075
      %v1078 = vlaneseq
      %v1079 = vshrl.u32 %v1078, 7
      %v1080 = vsub.s32 0, %v1079
      %v1081 = vrot.slane %v1076, %v1080
      %v1082 = vlaneseq
      %v1083 = vshrl.u32 %v1082, 7
      %v1084 = vsub.s32 1, %v1083
      %v1085 = vrot.slane %v1076, %v1084
      %v1088 = vsub.f32 %v1050, %v1081
      %v1089 = vsub.f32 %v1051, %v1085
      %v1090 = vmul.f32 %v1088, 1.442695
      %v1091 = vpow.pop %v1090
      %v1092 = vmul.f32 %v1089, 1.442695
      %v1093 = vpow.pop %v1092
      %1096 = vset.pattern.permute.xlu0 0
      %1097 = vperm.xlu0 %1096, %v1091
      %v1098 = vpop.permute.xlu0 %1097
      %1099 = vset.pattern.permute.xlu0 0
      %1100 = vperm.xlu0 %1099, %v1093
      %v1101 = vpop.permute.xlu0 %1100
      %v1102 = vlaneseq
      %v1103 = vshrl.u32 %v1102, 7
      %v1104 = vsub.s32 %v1061, %v1103
      %v1105 = vrot.slane %v1098, %v1104
      %v1106 = vlaneseq
      %v1107 = vshrl.u32 %v1106, 7
      %v1108 = vsub.s32 %v1061, %v1107
      %v1109 = vrot.slane %v1101, %v1108
      %v1110 = vsel %vm1070, %v1109, %v1105
      %v1112 = vsel %vm1073, %v1110, 0.0
      %1113 = vadd.xlane.f32.xlu0 %v1112
      %v1114 = vpop.xlane.xlu0 %1113
      %v1116 = vlaneseq
      %v1117 = vshrl.u32 %v1116, 7
      %v1118 = vsub.s32 0, %v1117
      %v1119 = vrot.slane %v1114, %v1118
      %v1120 = vlaneseq
      %v1121 = vshrl.u32 %v1120, 7
      %v1122 = vsub.s32 1, %v1121
      %v1123 = vrot.slane %v1114, %v1122
      %v1126 = vrcp.pop %v1119
      %v1127 = vmul.f32 %v1091, %v1126
      %v1128 = vrcp.pop %v1123
      %v1129 = vmul.f32 %v1093, %v1128
      %v1130 = vld [vmem:[%s6] sm:$0xff]
      %v1131 = vld [vmem:[%s6 + $0x8] sm:$0xff]
      %1133 = vset.pattern.permute.xlu0 0
      %1134 = vperm.xlu0 %1133, %v1127
      %v1135 = vpop.permute.xlu0 %1134
      %1138 = vset.pattern.permute.xlu0 0
      %1139 = vperm.xlu0 %1138, %v1129
      %v1140 = vpop.permute.xlu0 %1139
      %v1142 = vmul.f32 %v1135, %v1130
      %v1143 = vmul.f32 %v1140, %v1131
      %v1144 = vsel %vm118, %v1142, 0.0
      %v1145 = vrot.slane %v1144, 4
      %v1146 = vadd.f32 %v1144, %v1145
      %v1147 = vrot.slane %v1146, 2
      %v1148 = vadd.f32 %v1146, %v1147
      %v1149 = vrot.slane %v1148, 1
      %v1150 = vadd.f32 %v1148, %v1149
      %v1151 = vsel %vm118, %v1143, 0.0
      %v1152 = vrot.slane %v1151, 4
      %v1153 = vadd.f32 %v1151, %v1152
      %v1154 = vrot.slane %v1153, 2
      %v1155 = vadd.f32 %v1153, %v1154
      %v1156 = vrot.slane %v1155, 1
      %v1157 = vadd.f32 %v1155, %v1156
      %v1158 = vadd.s32 %v1061, 4294967295
      %v1159 = vlaneseq
      %v1160 = vshrl.u32 %v1159, 7
      %v1161 = vsub.s32 %v1158, %v1160
      %v1162 = vrot.slane %v1135, %v1161
      %v1163 = vlaneseq
      %v1164 = vshrl.u32 %v1163, 7
      %v1165 = vsub.s32 %v1158, %v1164
      %v1166 = vrot.slane %v1140, %v1165
      %v1167 = vsel %vm1070, %v1166, %v1162
      %v1169 = vadd.f32 %v867, %v1167
      %vm1170 = vcmask 66568
      %1171 = vst.msk [vmem:[#allocation7] sm:$0x3] %vm1170, %v1167
      %1172 = vst.msk [vmem:[#allocation8] sm:$0x3] %vm1170, %v1169
      %v1175 = vsel %vm1070, %v1157, %v1150
      %1177 = vst.msk [vmem:[#allocation6] sm:$0x3] %vm94, %v1175
      %v1178 = vld [vmem:[#allocation4] sm:$0x3]
      %v1179 = vld [vmem:[%s16] sm:$0xff]
      %v1180 = vld [vmem:[%s16 + $0x8] sm:$0xff]
      %v1181 = vld [vmem:[%s16 + $0x10] sm:$0xff]
      %v1182 = vld [vmem:[%s16 + $0x18] sm:$0xff]
      %v1183 = vld [vmem:[%s17] sm:$0xff]
      %v1184 = vld [vmem:[%s17 + $0x8] sm:$0xff]
      %v1185 = vsel %vm118, %v1175, 0
      %1187 = vmatprep.subr.mxu0 0.0
      %1188 = vmatpush1.msra.mxu0 %v1183
      %1189 = vmatprep.subr.mxu0 0.0
      %1190 = vmatpush1.msra.mxu0 %v1184
      %1191 = vmatprep.subr.mxu0 0.0
      %1192 = vmatpush1.msra.mxu0 0.0
      %1193 = vmatprep.subr.mxu0 0.0
      %1194 = vmatpush1.msra.mxu0 0.0
      %1195 = vmatprep.subr.mxu0 0.0
      %1196 = vmatpush1.msra.mxu0 0.0
      %1197 = vmatprep.subr.mxu0 0.0
      %1198 = vmatpush1.msra.mxu0 0.0
      %1199 = vmatprep.subr.mxu0 0.0
      %1200 = vmatpush1.msra.mxu0 0.0
      %1201 = vmatprep.subr.mxu0 0.0
      %1202 = vmatpush1.msra.mxu0 0.0
      %1203 = vmatprep.subr.mxu0 0.0
      %1204 = vmatpush1.msra.mxu0 0.0
      %1205 = vmatprep.subr.mxu0 0.0
      %1206 = vmatpush1.msra.mxu0 0.0
      %1207 = vmatprep.subr.mxu0 0.0
      %1208 = vmatpush1.msra.mxu0 0.0
      %1209 = vmatprep.subr.mxu0 0.0
      %1210 = vmatpush1.msra.mxu0 0.0
      %1211 = vmatprep.subr.mxu0 0.0
      %1212 = vmatpush1.msra.mxu0 0.0
      %1213 = vmatprep.subr.mxu0 0.0
      %1214 = vmatpush1.msra.mxu0 0.0
      %1215 = vmatprep.subr.mxu0 0.0
      %1216 = vmatpush1.msra.mxu0 0.0
      %1217 = vmatprep.subr.mxu0 0.0
      %1218 = vmatpush1.msra.mxu0 0.0
      %1219 = vmatprep.subr.mxu0 0.0
      %1220 = vmatpush1.msra.mxu0 0.0
      %1221 = vmatprep.subr.mxu0 0.0
      %1222 = vmatpush1.msra.mxu0 0.0
      %1223 = vmatprep.subr.mxu0 0.0
      %1224 = vmatpush1.msra.mxu0 0.0
      %1225 = vmatprep.subr.mxu0 0.0
      %1226 = vmatpush1.msra.mxu0 0.0
      %1227 = vmatprep.subr.mxu0 0.0
      %1228 = vmatpush1.msra.mxu0 0.0
      %1229 = vmatprep.subr.mxu0 0.0
      %1230 = vmatpush1.msra.mxu0 0.0
      %1231 = vmatprep.subr.mxu0 0.0
      %1232 = vmatpush1.msra.mxu0 0.0
      %1233 = vmatprep.subr.mxu0 0.0
      %1234 = vmatpush1.msra.mxu0 0.0
      %1235 = vmatprep.subr.mxu0 0.0
      %1236 = vmatpush1.msra.mxu0 0.0
      %1237 = vmatprep.subr.mxu0 0.0
      %1238 = vmatpush1.msra.mxu0 0.0
      %1239 = vmatprep.subr.mxu0 0.0
      %1240 = vmatpush1.msra.mxu0 0.0
      %1241 = vmatprep.subr.mxu0 0.0
      %1242 = vmatpush1.msra.mxu0 0.0
      %1243 = vmatprep.subr.mxu0 0.0
      %1244 = vmatpush1.msra.mxu0 0.0
      %1245 = vmatprep.subr.mxu0 0.0
      %1246 = vmatpush1.msra.mxu0 0.0
      %1247 = vmatprep.subr.mxu0 0.0
      %1248 = vmatpush1.msra.mxu0 0.0
      %1249 = vmatprep.subr.mxu0 0.0
      %1250 = vmatpush1.msra.mxu0 0.0
      %1251 = vmatprep.mubr.f32.mxu0 0.0
      %1252 = vmatmul.mubr.f32.gmra.mrb[0].mxu0 %v1185
      %v1253 = vpop.f32.mrb[0].mxu0
      %v1254 = vadd.f32 0.0, %v1253
      %v1255 = vpop.f32.mrb[0].mxu0
      %1256 = vdwg.mxu0
      %1257 = vmatprep.subr.mxu0 0.0
      %1258 = vmatpush1.msra.mxu0 %v1179
      %1259 = vmatprep.subr.mxu0 0.0
      %1260 = vmatpush1.msra.mxu0 %v1180
      %1261 = vmatprep.subr.mxu0 0.0
      %1262 = vmatpush1.msra.mxu0 %v1181
      %1263 = vmatprep.subr.mxu0 0.0
      %1264 = vmatpush1.msra.mxu0 %v1182
      %1265 = vmatprep.subr.mxu0 0.0
      %1266 = vmatpush1.msra.mxu0 0.0
      %1267 = vmatprep.subr.mxu0 0.0
      %1268 = vmatpush1.msra.mxu0 0.0
      %1269 = vmatprep.subr.mxu0 0.0
      %1270 = vmatpush1.msra.mxu0 0.0
      %1271 = vmatprep.subr.mxu0 0.0
      %1272 = vmatpush1.msra.mxu0 0.0
      %1273 = vmatprep.subr.mxu0 0.0
      %1274 = vmatpush1.msra.mxu0 0.0
      %1275 = vmatprep.subr.mxu0 0.0
      %1276 = vmatpush1.msra.mxu0 0.0
      %1277 = vmatprep.subr.mxu0 0.0
      %1278 = vmatpush1.msra.mxu0 0.0
      %1279 = vmatprep.subr.mxu0 0.0
      %1280 = vmatpush1.msra.mxu0 0.0
      %1281 = vmatprep.subr.mxu0 0.0
      %1282 = vmatpush1.msra.mxu0 0.0
      %1283 = vmatprep.subr.mxu0 0.0
      %1284 = vmatpush1.msra.mxu0 0.0
      %1285 = vmatprep.subr.mxu0 0.0
      %1286 = vmatpush1.msra.mxu0 0.0
      %1287 = vmatprep.subr.mxu0 0.0
      %1288 = vmatpush1.msra.mxu0 0.0
      %1289 = vmatprep.subr.mxu0 0.0
      %1290 = vmatpush1.msra.mxu0 0.0
      %1291 = vmatprep.subr.mxu0 0.0
      %1292 = vmatpush1.msra.mxu0 0.0
      %1293 = vmatprep.subr.mxu0 0.0
      %1294 = vmatpush1.msra.mxu0 0.0
      %1295 = vmatprep.subr.mxu0 0.0
      %1296 = vmatpush1.msra.mxu0 0.0
      %1297 = vmatprep.subr.mxu0 0.0
      %1298 = vmatpush1.msra.mxu0 0.0
      %1299 = vmatprep.subr.mxu0 0.0
      %1300 = vmatpush1.msra.mxu0 0.0
      %1301 = vmatprep.subr.mxu0 0.0
      %1302 = vmatpush1.msra.mxu0 0.0
      %1303 = vmatprep.subr.mxu0 0.0
      %1304 = vmatpush1.msra.mxu0 0.0
      %1305 = vmatprep.subr.mxu0 0.0
      %1306 = vmatpush1.msra.mxu0 0.0
      %1307 = vmatprep.subr.mxu0 0.0
      %1308 = vmatpush1.msra.mxu0 0.0
      %1309 = vmatprep.subr.mxu0 0.0
      %1310 = vmatpush1.msra.mxu0 0.0
      %1311 = vmatprep.subr.mxu0 0.0
      %1312 = vmatpush1.msra.mxu0 0.0
      %1313 = vmatprep.subr.mxu0 0.0
      %1314 = vmatpush1.msra.mxu0 0.0
      %1315 = vmatprep.subr.mxu0 0.0
      %1316 = vmatpush1.msra.mxu0 0.0
      %1317 = vmatprep.subr.mxu0 0.0
      %1318 = vmatpush1.msra.mxu0 0.0
      %1319 = vmatprep.subr.mxu0 0.0
      %1320 = vmatpush1.msra.mxu0 0.0
      %1321 = vmatprep.mubr.f32.mxu0 0.0
      %1322 = vmatmul.mubr.f32.gmra.mrb[0].mxu0 %v792
      %v1323 = vpop.f32.mrb[0].mxu0
      %v1324 = vadd.f32 %v1254, %v1323
      %v1325 = vpop.f32.mrb[0].mxu0
      %1326 = vdwg.mxu0
      %v1327 = vld [vmem:[%s18] sm:$0xff]
      %v1328 = vld [vmem:[%s18 + $0x8] sm:$0xff]
      %v1329 = vld [vmem:[%s18 + $0x10] sm:$0xff]
      %v1330 = vld [vmem:[%s18 + $0x18] sm:$0xff]
      %v1332 = vsel %vm197, %v1178, 0
      %1334 = vmatprep.subr.mxu0 0.0
      %1335 = vmatpush1.msra.mxu0 %v1327
      %1336 = vmatprep.subr.mxu0 0.0
      %1337 = vmatpush1.msra.mxu0 %v1328
      %1338 = vmatprep.subr.mxu0 0.0
      %1339 = vmatpush1.msra.mxu0 %v1329
      %1340 = vmatprep.subr.mxu0 0.0
      %1341 = vmatpush1.msra.mxu0 %v1330
      %1342 = vmatprep.subr.mxu0 0.0
      %1343 = vmatpush1.msra.mxu0 0.0
      %1344 = vmatprep.subr.mxu0 0.0
      %1345 = vmatpush1.msra.mxu0 0.0
      %1346 = vmatprep.subr.mxu0 0.0
      %1347 = vmatpush1.msra.mxu0 0.0
      %1348 = vmatprep.subr.mxu0 0.0
      %1349 = vmatpush1.msra.mxu0 0.0
      %1350 = vmatprep.subr.mxu0 0.0
      %1351 = vmatpush1.msra.mxu0 0.0
      %1352 = vmatprep.subr.mxu0 0.0
      %1353 = vmatpush1.msra.mxu0 0.0
      %1354 = vmatprep.subr.mxu0 0.0
      %1355 = vmatpush1.msra.mxu0 0.0
      %1356 = vmatprep.subr.mxu0 0.0
      %1357 = vmatpush1.msra.mxu0 0.0
      %1358 = vmatprep.subr.mxu0 0.0
      %1359 = vmatpush1.msra.mxu0 0.0
      %1360 = vmatprep.subr.mxu0 0.0
      %1361 = vmatpush1.msra.mxu0 0.0
      %1362 = vmatprep.subr.mxu0 0.0
      %1363 = vmatpush1.msra.mxu0 0.0
      %1364 = vmatprep.subr.mxu0 0.0
      %1365 = vmatpush1.msra.mxu0 0.0
      %1366 = vmatprep.subr.mxu0 0.0
      %1367 = vmatpush1.msra.mxu0 0.0
      %1368 = vmatprep.subr.mxu0 0.0
      %1369 = vmatpush1.msra.mxu0 0.0
      %1370 = vmatprep.subr.mxu0 0.0
      %1371 = vmatpush1.msra.mxu0 0.0
      %1372 = vmatprep.subr.mxu0 0.0
      %1373 = vmatpush1.msra.mxu0 0.0
      %1374 = vmatprep.subr.mxu0 0.0
      %1375 = vmatpush1.msra.mxu0 0.0
      %1376 = vmatprep.subr.mxu0 0.0
      %1377 = vmatpush1.msra.mxu0 0.0
      %1378 = vmatprep.subr.mxu0 0.0
      %1379 = vmatpush1.msra.mxu0 0.0
      %1380 = vmatprep.subr.mxu0 0.0
      %1381 = vmatpush1.msra.mxu0 0.0
      %1382 = vmatprep.subr.mxu0 0.0
      %1383 = vmatpush1.msra.mxu0 0.0
      %1384 = vmatprep.subr.mxu0 0.0
      %1385 = vmatpush1.msra.mxu0 0.0
      %1386 = vmatprep.subr.mxu0 0.0
      %1387 = vmatpush1.msra.mxu0 0.0
      %1388 = vmatprep.subr.mxu0 0.0
      %1389 = vmatpush1.msra.mxu0 0.0
      %1390 = vmatprep.subr.mxu0 0.0
      %1391 = vmatpush1.msra.mxu0 0.0
      %1392 = vmatprep.subr.mxu0 0.0
      %1393 = vmatpush1.msra.mxu0 0.0
      %1394 = vmatprep.subr.mxu0 0.0
      %1395 = vmatpush1.msra.mxu0 0.0
      %1396 = vmatprep.subr.mxu0 0.0
      %1397 = vmatpush1.msra.mxu0 0.0
      %1398 = vmatprep.mubr.f32.mxu0 0.0
      %1399 = vmatmul.mubr.f32.gmra.mrb[0].mxu0 %v1332
      %v1400 = vpop.f32.mrb[0].mxu0
      %v1401 = vadd.f32 0.0, %v1400
      %v1402 = vpop.f32.mrb[0].mxu0
      %1403 = vdwg.mxu0
      %v1404 = vadd.f32 %v1324, %v1401
      %v1405 = vld [vmem:[%s19] sm:$0x1]
      %v1407 = vlaneseq
      %v1408 = vshrl.u32 %v1407, 7
      %v1409 = vsub.s32 0, %v1408
      %v1410 = vrot.slane %v1405, %v1409
      %v1412 = vadd.f32 %v1404, %v1410
      %v1413 = vxor.u32 %v1412, 2147483648
      %v1414 = vmul.f32 %v1413, 1.442695
      %v1415 = vpow.pop %v1414
      %v1416 = vadd.f32 %v1415, 1.0
      %v1417 = vrcp.pop %v1416
      %v1418 = vmul.f32 1.0, %v1417
      %s1419 = scalar_lea.vmem %s16, 32
      %v1420 = vld [vmem:[%s1419] sm:$0xff]
      %v1421 = vld [vmem:[%s1419 + $0x8] sm:$0xff]
      %v1422 = vld [vmem:[%s1419 + $0x10] sm:$0xff]
      %v1423 = vld [vmem:[%s1419 + $0x18] sm:$0xff]
      %s1424 = scalar_lea.vmem %s17, 16
      %v1425 = vld [vmem:[%s1424] sm:$0xff]
      %v1426 = vld [vmem:[%s1424 + $0x8] sm:$0xff]
      %1427 = vmatprep.subr.mxu0 0.0
      %1428 = vmatpush1.msra.mxu0 %v1425
      %1429 = vmatprep.subr.mxu0 0.0
      %1430 = vmatpush1.msra.mxu0 %v1426
      %1431 = vmatprep.subr.mxu0 0.0
      %1432 = vmatpush1.msra.mxu0 0.0
      %1433 = vmatprep.subr.mxu0 0.0
      %1434 = vmatpush1.msra.mxu0 0.0
      %1435 = vmatprep.subr.mxu0 0.0
      %1436 = vmatpush1.msra.mxu0 0.0
      %1437 = vmatprep.subr.mxu0 0.0
      %1438 = vmatpush1.msra.mxu0 0.0
      %1439 = vmatprep.subr.mxu0 0.0
      %1440 = vmatpush1.msra.mxu0 0.0
      %1441 = vmatprep.subr.mxu0 0.0
      %1442 = vmatpush1.msra.mxu0 0.0
      %1443 = vmatprep.subr.mxu0 0.0
      %1444 = vmatpush1.msra.mxu0 0.0
      %1445 = vmatprep.subr.mxu0 0.0
      %1446 = vmatpush1.msra.mxu0 0.0
      %1447 = vmatprep.subr.mxu0 0.0
      %1448 = vmatpush1.msra.mxu0 0.0
      %1449 = vmatprep.subr.mxu0 0.0
      %1450 = vmatpush1.msra.mxu0 0.0
      %1451 = vmatprep.subr.mxu0 0.0
      %1452 = vmatpush1.msra.mxu0 0.0
      %1453 = vmatprep.subr.mxu0 0.0
      %1454 = vmatpush1.msra.mxu0 0.0
      %1455 = vmatprep.subr.mxu0 0.0
      %1456 = vmatpush1.msra.mxu0 0.0
      %1457 = vmatprep.subr.mxu0 0.0
      %1458 = vmatpush1.msra.mxu0 0.0
      %1459 = vmatprep.subr.mxu0 0.0
      %1460 = vmatpush1.msra.mxu0 0.0
      %1461 = vmatprep.subr.mxu0 0.0
      %1462 = vmatpush1.msra.mxu0 0.0
      %1463 = vmatprep.subr.mxu0 0.0
      %1464 = vmatpush1.msra.mxu0 0.0
      %1465 = vmatprep.subr.mxu0 0.0
      %1466 = vmatpush1.msra.mxu0 0.0
      %1467 = vmatprep.subr.mxu0 0.0
      %1468 = vmatpush1.msra.mxu0 0.0
      %1469 = vmatprep.subr.mxu0 0.0
      %1470 = vmatpush1.msra.mxu0 0.0
      %1471 = vmatprep.subr.mxu0 0.0
      %1472 = vmatpush1.msra.mxu0 0.0
      %1473 = vmatprep.subr.mxu0 0.0
      %1474 = vmatpush1.msra.mxu0 0.0
      %1475 = vmatprep.subr.mxu0 0.0
      %1476 = vmatpush1.msra.mxu0 0.0
      %1477 = vmatprep.subr.mxu0 0.0
      %1478 = vmatpush1.msra.mxu0 0.0
      %1479 = vmatprep.subr.mxu0 0.0
      %1480 = vmatpush1.msra.mxu0 0.0
      %1481 = vmatprep.subr.mxu0 0.0
      %1482 = vmatpush1.msra.mxu0 0.0
      %1483 = vmatprep.subr.mxu0 0.0
      %1484 = vmatpush1.msra.mxu0 0.0
      %1485 = vmatprep.subr.mxu0 0.0
      %1486 = vmatpush1.msra.mxu0 0.0
      %1487 = vmatprep.subr.mxu0 0.0
      %1488 = vmatpush1.msra.mxu0 0.0
      %1489 = vmatprep.subr.mxu0 0.0
      %1490 = vmatpush1.msra.mxu0 0.0
      %1491 = vmatprep.mubr.f32.mxu0 0.0
      %1492 = vmatmul.mubr.f32.gmra.mrb[0].mxu0 %v1185
      %v1493 = vpop.f32.mrb[0].mxu0
      %v1494 = vadd.f32 0.0, %v1493
      %v1495 = vpop.f32.mrb[0].mxu0
      %1496 = vdwg.mxu0
      %1497 = vmatprep.subr.mxu0 0.0
      %1498 = vmatpush1.msra.mxu0 %v1420
      %1499 = vmatprep.subr.mxu0 0.0
      %1500 = vmatpush1.msra.mxu0 %v1421
      %1501 = vmatprep.subr.mxu0 0.0
      %1502 = vmatpush1.msra.mxu0 %v1422
      %1503 = vmatprep.subr.mxu0 0.0
      %1504 = vmatpush1.msra.mxu0 %v1423
      %1505 = vmatprep.subr.mxu0 0.0
      %1506 = vmatpush1.msra.mxu0 0.0
      %1507 = vmatprep.subr.mxu0 0.0
      %1508 = vmatpush1.msra.mxu0 0.0
      %1509 = vmatprep.subr.mxu0 0.0
      %1510 = vmatpush1.msra.mxu0 0.0
      %1511 = vmatprep.subr.mxu0 0.0
      %1512 = vmatpush1.msra.mxu0 0.0
      %1513 = vmatprep.subr.mxu0 0.0
      %1514 = vmatpush1.msra.mxu0 0.0
      %1515 = vmatprep.subr.mxu0 0.0
      %1516 = vmatpush1.msra.mxu0 0.0
      %1517 = vmatprep.subr.mxu0 0.0
      %1518 = vmatpush1.msra.mxu0 0.0
      %1519 = vmatprep.subr.mxu0 0.0
      %1520 = vmatpush1.msra.mxu0 0.0
      %1521 = vmatprep.subr.mxu0 0.0
      %1522 = vmatpush1.msra.mxu0 0.0
      %1523 = vmatprep.subr.mxu0 0.0
      %1524 = vmatpush1.msra.mxu0 0.0
      %1525 = vmatprep.subr.mxu0 0.0
      %1526 = vmatpush1.msra.mxu0 0.0
      %1527 = vmatprep.subr.mxu0 0.0
      %1528 = vmatpush1.msra.mxu0 0.0
      %1529 = vmatprep.subr.mxu0 0.0
      %1530 = vmatpush1.msra.mxu0 0.0
      %1531 = vmatprep.subr.mxu0 0.0
      %1532 = vmatpush1.msra.mxu0 0.0
      %1533 = vmatprep.subr.mxu0 0.0
      %1534 = vmatpush1.msra.mxu0 0.0
      %1535 = vmatprep.subr.mxu0 0.0
      %1536 = vmatpush1.msra.mxu0 0.0
      %1537 = vmatprep.subr.mxu0 0.0
      %1538 = vmatpush1.msra.mxu0 0.0
      %1539 = vmatprep.subr.mxu0 0.0
      %1540 = vmatpush1.msra.mxu0 0.0
      %1541 = vmatprep.subr.mxu0 0.0
      %1542 = vmatpush1.msra.mxu0 0.0
      %1543 = vmatprep.subr.mxu0 0.0
      %1544 = vmatpush1.msra.mxu0 0.0
      %1545 = vmatprep.subr.mxu0 0.0
      %1546 = vmatpush1.msra.mxu0 0.0
      %1547 = vmatprep.subr.mxu0 0.0
      %1548 = vmatpush1.msra.mxu0 0.0
      %1549 = vmatprep.subr.mxu0 0.0
      %1550 = vmatpush1.msra.mxu0 0.0
      %1551 = vmatprep.subr.mxu0 0.0
      %1552 = vmatpush1.msra.mxu0 0.0
      %1553 = vmatprep.subr.mxu0 0.0
      %1554 = vmatpush1.msra.mxu0 0.0
      %1555 = vmatprep.subr.mxu0 0.0
      %1556 = vmatpush1.msra.mxu0 0.0
      %1557 = vmatprep.subr.mxu0 0.0
      %1558 = vmatpush1.msra.mxu0 0.0
      %1559 = vmatprep.subr.mxu0 0.0
      %1560 = vmatpush1.msra.mxu0 0.0
      %1561 = vmatprep.mubr.f32.mxu0 0.0
      %1562 = vmatmul.mubr.f32.gmra.mrb[0].mxu0 %v792
      %v1563 = vpop.f32.mrb[0].mxu0
      %v1564 = vadd.f32 %v1494, %v1563
      %v1565 = vpop.f32.mrb[0].mxu0
      %1566 = vdwg.mxu0
      %s1567 = scalar_lea.vmem %s18, 32
      %v1568 = vld [vmem:[%s1567] sm:$0xff]
      %v1569 = vld [vmem:[%s1567 + $0x8] sm:$0xff]
      %v1570 = vld [vmem:[%s1567 + $0x10] sm:$0xff]
      %v1571 = vld [vmem:[%s1567 + $0x18] sm:$0xff]
      %1572 = vmatprep.subr.mxu0 0.0
      %1573 = vmatpush1.msra.mxu0 %v1568
      %1574 = vmatprep.subr.mxu0 0.0
      %1575 = vmatpush1.msra.mxu0 %v1569
      %1576 = vmatprep.subr.mxu0 0.0
      %1577 = vmatpush1.msra.mxu0 %v1570
      %1578 = vmatprep.subr.mxu0 0.0
      %1579 = vmatpush1.msra.mxu0 %v1571
      %1580 = vmatprep.subr.mxu0 0.0
      %1581 = vmatpush1.msra.mxu0 0.0
      %1582 = vmatprep.subr.mxu0 0.0
      %1583 = vmatpush1.msra.mxu0 0.0
      %1584 = vmatprep.subr.mxu0 0.0
      %1585 = vmatpush1.msra.mxu0 0.0
      %1586 = vmatprep.subr.mxu0 0.0
      %1587 = vmatpush1.msra.mxu0 0.0
      %1588 = vmatprep.subr.mxu0 0.0
      %1589 = vmatpush1.msra.mxu0 0.0
      %1590 = vmatprep.subr.mxu0 0.0
      %1591 = vmatpush1.msra.mxu0 0.0
      %1592 = vmatprep.subr.mxu0 0.0
      %1593 = vmatpush1.msra.mxu0 0.0
      %1594 = vmatprep.subr.mxu0 0.0
      %1595 = vmatpush1.msra.mxu0 0.0
      %1596 = vmatprep.subr.mxu0 0.0
      %1597 = vmatpush1.msra.mxu0 0.0
      %1598 = vmatprep.subr.mxu0 0.0
      %1599 = vmatpush1.msra.mxu0 0.0
      %1600 = vmatprep.subr.mxu0 0.0
      %1601 = vmatpush1.msra.mxu0 0.0
      %1602 = vmatprep.subr.mxu0 0.0
      %1603 = vmatpush1.msra.mxu0 0.0
      %1604 = vmatprep.subr.mxu0 0.0
      %1605 = vmatpush1.msra.mxu0 0.0
      %1606 = vmatprep.subr.mxu0 0.0
      %1607 = vmatpush1.msra.mxu0 0.0
      %1608 = vmatprep.subr.mxu0 0.0
      %1609 = vmatpush1.msra.mxu0 0.0
      %1610 = vmatprep.subr.mxu0 0.0
      %1611 = vmatpush1.msra.mxu0 0.0
      %1612 = vmatprep.subr.mxu0 0.0
      %1613 = vmatpush1.msra.mxu0 0.0
      %1614 = vmatprep.subr.mxu0 0.0
      %1615 = vmatpush1.msra.mxu0 0.0
      %1616 = vmatprep.subr.mxu0 0.0
      %1617 = vmatpush1.msra.mxu0 0.0
      %1618 = vmatprep.subr.mxu0 0.0
      %1619 = vmatpush1.msra.mxu0 0.0
      %1620 = vmatprep.subr.mxu0 0.0
      %1621 = vmatpush1.msra.mxu0 0.0
      %1622 = vmatprep.subr.mxu0 0.0
      %1623 = vmatpush1.msra.mxu0 0.0
      %1624 = vmatprep.subr.mxu0 0.0
      %1625 = vmatpush1.msra.mxu0 0.0
      %1626 = vmatprep.subr.mxu0 0.0
      %1627 = vmatpush1.msra.mxu0 0.0
      %1628 = vmatprep.subr.mxu0 0.0
      %1629 = vmatpush1.msra.mxu0 0.0
      %1630 = vmatprep.subr.mxu0 0.0
      %1631 = vmatpush1.msra.mxu0 0.0
      %1632 = vmatprep.subr.mxu0 0.0
      %1633 = vmatpush1.msra.mxu0 0.0
      %1634 = vmatprep.subr.mxu0 0.0
      %1635 = vmatpush1.msra.mxu0 0.0
      %1636 = vmatprep.mubr.f32.mxu0 0.0
      %1637 = vmatmul.mubr.f32.gmra.mrb[0].mxu0 %v1332
      %v1638 = vpop.f32.mrb[0].mxu0
      %v1639 = vadd.f32 0.0, %v1638
      %v1640 = vpop.f32.mrb[0].mxu0
      %1641 = vdwg.mxu0
      %v1642 = vadd.f32 %v1564, %v1639
      %s1643 = scalar_lea.vmem %s19, 1
      %v1644 = vld [vmem:[%s1643] sm:$0x1]
      %v1646 = vlaneseq
      %v1647 = vshrl.u32 %v1646, 7
      %v1648 = vsub.s32 0, %v1647
      %v1649 = vrot.slane %v1644, %v1648
      %v1651 = vadd.f32 %v1642, %v1649
      %v1652 = vxor.u32 %v1651, 2147483648
      %v1653 = vmul.f32 %v1652, 1.442695
      %v1654 = vpow.pop %v1653
      %v1655 = vadd.f32 %v1654, 1.0
      %v1656 = vrcp.pop %v1655
      %v1657 = vmul.f32 1.0, %v1656
      %s1658 = scalar_lea.vmem %s16, 64
      %v1659 = vld [vmem:[%s1658] sm:$0xff]
      %v1660 = vld [vmem:[%s1658 + $0x8] sm:$0xff]
      %v1661 = vld [vmem:[%s1658 + $0x10] sm:$0xff]
      %v1662 = vld [vmem:[%s1658 + $0x18] sm:$0xff]
      %s1663 = scalar_lea.vmem %s17, 32
      %v1664 = vld [vmem:[%s1663] sm:$0xff]
      %v1665 = vld [vmem:[%s1663 + $0x8] sm:$0xff]
      %1666 = vmatprep.subr.mxu0 0.0
      %1667 = vmatpush1.msra.mxu0 %v1664
      %1668 = vmatprep.subr.mxu0 0.0
      %1669 = vmatpush1.msra.mxu0 %v1665
      %1670 = vmatprep.subr.mxu0 0.0
      %1671 = vmatpush1.msra.mxu0 0.0
      %1672 = vmatprep.subr.mxu0 0.0
      %1673 = vmatpush1.msra.mxu0 0.0
      %1674 = vmatprep.subr.mxu0 0.0
      %1675 = vmatpush1.msra.mxu0 0.0
      %1676 = vmatprep.subr.mxu0 0.0
      %1677 = vmatpush1.msra.mxu0 0.0
      %1678 = vmatprep.subr.mxu0 0.0
      %1679 = vmatpush1.msra.mxu0 0.0
      %1680 = vmatprep.subr.mxu0 0.0
      %1681 = vmatpush1.msra.mxu0 0.0
      %1682 = vmatprep.subr.mxu0 0.0
      %1683 = vmatpush1.msra.mxu0 0.0
      %1684 = vmatprep.subr.mxu0 0.0
      %1685 = vmatpush1.msra.mxu0 0.0
      %1686 = vmatprep.subr.mxu0 0.0
      %1687 = vmatpush1.msra.mxu0 0.0
      %1688 = vmatprep.subr.mxu0 0.0
      %1689 = vmatpush1.msra.mxu0 0.0
      %1690 = vmatprep.subr.mxu0 0.0
      %1691 = vmatpush1.msra.mxu0 0.0
      %1692 = vmatprep.subr.mxu0 0.0
      %1693 = vmatpush1.msra.mxu0 0.0
      %1694 = vmatprep.subr.mxu0 0.0
      %1695 = vmatpush1.msra.mxu0 0.0
      %1696 = vmatprep.subr.mxu0 0.0
      %1697 = vmatpush1.msra.mxu0 0.0
      %1698 = vmatprep.subr.mxu0 0.0
      %1699 = vmatpush1.msra.mxu0 0.0
      %1700 = vmatprep.subr.mxu0 0.0
      %1701 = vmatpush1.msra.mxu0 0.0
      %1702 = vmatprep.subr.mxu0 0.0
      %1703 = vmatpush1.msra.mxu0 0.0
      %1704 = vmatprep.subr.mxu0 0.0
      %1705 = vmatpush1.msra.mxu0 0.0
      %1706 = vmatprep.subr.mxu0 0.0
      %1707 = vmatpush1.msra.mxu0 0.0
      %1708 = vmatprep.subr.mxu0 0.0
      %1709 = vmatpush1.msra.mxu0 0.0
      %1710 = vmatprep.subr.mxu0 0.0
      %1711 = vmatpush1.msra.mxu0 0.0
      %1712 = vmatprep.subr.mxu0 0.0
      %1713 = vmatpush1.msra.mxu0 0.0
      %1714 = vmatprep.subr.mxu0 0.0
      %1715 = vmatpush1.msra.mxu0 0.0
      %1716 = vmatprep.subr.mxu0 0.0
      %1717 = vmatpush1.msra.mxu0 0.0
      %1718 = vmatprep.subr.mxu0 0.0
      %1719 = vmatpush1.msra.mxu0 0.0
      %1720 = vmatprep.subr.mxu0 0.0
      %1721 = vmatpush1.msra.mxu0 0.0
      %1722 = vmatprep.subr.mxu0 0.0
      %1723 = vmatpush1.msra.mxu0 0.0
      %1724 = vmatprep.subr.mxu0 0.0
      %1725 = vmatpush1.msra.mxu0 0.0
      %1726 = vmatprep.subr.mxu0 0.0
      %1727 = vmatpush1.msra.mxu0 0.0
      %1728 = vmatprep.subr.mxu0 0.0
      %1729 = vmatpush1.msra.mxu0 0.0
      %1730 = vmatprep.mubr.f32.mxu0 0.0
      %1731 = vmatmul.mubr.f32.gmra.mrb[0].mxu0 %v1185
      %v1732 = vpop.f32.mrb[0].mxu0
      %v1733 = vadd.f32 0.0, %v1732
      %v1734 = vpop.f32.mrb[0].mxu0
      %1735 = vdwg.mxu0
      %1736 = vmatprep.subr.mxu0 0.0
      %1737 = vmatpush1.msra.mxu0 %v1659
      %1738 = vmatprep.subr.mxu0 0.0
      %1739 = vmatpush1.msra.mxu0 %v1660
      %1740 = vmatprep.subr.mxu0 0.0
      %1741 = vmatpush1.msra.mxu0 %v1661
      %1742 = vmatprep.subr.mxu0 0.0
      %1743 = vmatpush1.msra.mxu0 %v1662
      %1744 = vmatprep.subr.mxu0 0.0
      %1745 = vmatpush1.msra.mxu0 0.0
      %1746 = vmatprep.subr.mxu0 0.0
      %1747 = vmatpush1.msra.mxu0 0.0
      %1748 = vmatprep.subr.mxu0 0.0
      %1749 = vmatpush1.msra.mxu0 0.0
      %1750 = vmatprep.subr.mxu0 0.0
      %1751 = vmatpush1.msra.mxu0 0.0
      %1752 = vmatprep.subr.mxu0 0.0
      %1753 = vmatpush1.msra.mxu0 0.0
      %1754 = vmatprep.subr.mxu0 0.0
      %1755 = vmatpush1.msra.mxu0 0.0
      %1756 = vmatprep.subr.mxu0 0.0
      %1757 = vmatpush1.msra.mxu0 0.0
      %1758 = vmatprep.subr.mxu0 0.0
      %1759 = vmatpush1.msra.mxu0 0.0
      %1760 = vmatprep.subr.mxu0 0.0
      %1761 = vmatpush1.msra.mxu0 0.0
      %1762 = vmatprep.subr.mxu0 0.0
      %1763 = vmatpush1.msra.mxu0 0.0
      %1764 = vmatprep.subr.mxu0 0.0
      %1765 = vmatpush1.msra.mxu0 0.0
      %1766 = vmatprep.subr.mxu0 0.0
      %1767 = vmatpush1.msra.mxu0 0.0
      %1768 = vmatprep.subr.mxu0 0.0
      %1769 = vmatpush1.msra.mxu0 0.0
      %1770 = vmatprep.subr.mxu0 0.0
      %1771 = vmatpush1.msra.mxu0 0.0
      %1772 = vmatprep.subr.mxu0 0.0
      %1773 = vmatpush1.msra.mxu0 0.0
      %1774 = vmatprep.subr.mxu0 0.0
      %1775 = vmatpush1.msra.mxu0 0.0
      %1776 = vmatprep.subr.mxu0 0.0
      %1777 = vmatpush1.msra.mxu0 0.0
      %1778 = vmatprep.subr.mxu0 0.0
      %1779 = vmatpush1.msra.mxu0 0.0
      %1780 = vmatprep.subr.mxu0 0.0
      %1781 = vmatpush1.msra.mxu0 0.0
      %1782 = vmatprep.subr.mxu0 0.0
      %1783 = vmatpush1.msra.mxu0 0.0
      %1784 = vmatprep.subr.mxu0 0.0
      %1785 = vmatpush1.msra.mxu0 0.0
      %1786 = vmatprep.subr.mxu0 0.0
      %1787 = vmatpush1.msra.mxu0 0.0
      %1788 = vmatprep.subr.mxu0 0.0
      %1789 = vmatpush1.msra.mxu0 0.0
      %1790 = vmatprep.subr.mxu0 0.0
      %1791 = vmatpush1.msra.mxu0 0.0
      %1792 = vmatprep.subr.mxu0 0.0
      %1793 = vmatpush1.msra.mxu0 0.0
      %1794 = vmatprep.subr.mxu0 0.0
      %1795 = vmatpush1.msra.mxu0 0.0
      %1796 = vmatprep.subr.mxu0 0.0
      %1797 = vmatpush1.msra.mxu0 0.0
      %1798 = vmatprep.subr.mxu0 0.0
      %1799 = vmatpush1.msra.mxu0 0.0
      %1800 = vmatprep.mubr.f32.mxu0 0.0
      %1801 = vmatmul.mubr.f32.gmra.mrb[0].mxu0 %v792
      %v1802 = vpop.f32.mrb[0].mxu0
      %v1803 = vadd.f32 %v1733, %v1802
      %v1804 = vpop.f32.mrb[0].mxu0
      %1805 = vdwg.mxu0
      %s1806 = scalar_lea.vmem %s18, 64
      %v1807 = vld [vmem:[%s1806] sm:$0xff]
      %v1808 = vld [vmem:[%s1806 + $0x8] sm:$0xff]
      %v1809 = vld [vmem:[%s1806 + $0x10] sm:$0xff]
      %v1810 = vld [vmem:[%s1806 + $0x18] sm:$0xff]
      %1811 = vmatprep.subr.mxu0 0.0
      %1812 = vmatpush1.msra.mxu0 %v1807
      %1813 = vmatprep.subr.mxu0 0.0
      %1814 = vmatpush1.msra.mxu0 %v1808
      %1815 = vmatprep.subr.mxu0 0.0
      %1816 = vmatpush1.msra.mxu0 %v1809
      %1817 = vmatprep.subr.mxu0 0.0
      %1818 = vmatpush1.msra.mxu0 %v1810
      %1819 = vmatprep.subr.mxu0 0.0
      %1820 = vmatpush1.msra.mxu0 0.0
      %1821 = vmatprep.subr.mxu0 0.0
      %1822 = vmatpush1.msra.mxu0 0.0
      %1823 = vmatprep.subr.mxu0 0.0
      %1824 = vmatpush1.msra.mxu0 0.0
      %1825 = vmatprep.subr.mxu0 0.0
      %1826 = vmatpush1.msra.mxu0 0.0
      %1827 = vmatprep.subr.mxu0 0.0
      %1828 = vmatpush1.msra.mxu0 0.0
      %1829 = vmatprep.subr.mxu0 0.0
      %1830 = vmatpush1.msra.mxu0 0.0
      %1831 = vmatprep.subr.mxu0 0.0
      %1832 = vmatpush1.msra.mxu0 0.0
      %1833 = vmatprep.subr.mxu0 0.0
      %1834 = vmatpush1.msra.mxu0 0.0
      %1835 = vmatprep.subr.mxu0 0.0
      %1836 = vmatpush1.msra.mxu0 0.0
      %1837 = vmatprep.subr.mxu0 0.0
      %1838 = vmatpush1.msra.mxu0 0.0
      %1839 = vmatprep.subr.mxu0 0.0
      %1840 = vmatpush1.msra.mxu0 0.0
      %1841 = vmatprep.subr.mxu0 0.0
      %1842 = vmatpush1.msra.mxu0 0.0
      %1843 = vmatprep.subr.mxu0 0.0
      %1844 = vmatpush1.msra.mxu0 0.0
      %1845 = vmatprep.subr.mxu0 0.0
      %1846 = vmatpush1.msra.mxu0 0.0
      %1847 = vmatprep.subr.mxu0 0.0
      %1848 = vmatpush1.msra.mxu0 0.0
      %1849 = vmatprep.subr.mxu0 0.0
      %1850 = vmatpush1.msra.mxu0 0.0
      %1851 = vmatprep.subr.mxu0 0.0
      %1852 = vmatpush1.msra.mxu0 0.0
      %1853 = vmatprep.subr.mxu0 0.0
      %1854 = vmatpush1.msra.mxu0 0.0
      %1855 = vmatprep.subr.mxu0 0.0
      %1856 = vmatpush1.msra.mxu0 0.0
      %1857 = vmatprep.subr.mxu0 0.0
      %1858 = vmatpush1.msra.mxu0 0.0
      %1859 = vmatprep.subr.mxu0 0.0
      %1860 = vmatpush1.msra.mxu0 0.0
      %1861 = vmatprep.subr.mxu0 0.0
      %1862 = vmatpush1.msra.mxu0 0.0
      %1863 = vmatprep.subr.mxu0 0.0
      %1864 = vmatpush1.msra.mxu0 0.0
      %1865 = vmatprep.subr.mxu0 0.0
      %1866 = vmatpush1.msra.mxu0 0.0
      %1867 = vmatprep.subr.mxu0 0.0
      %1868 = vmatpush1.msra.mxu0 0.0
      %1869 = vmatprep.subr.mxu0 0.0
      %1870 = vmatpush1.msra.mxu0 0.0
      %1871 = vmatprep.subr.mxu0 0.0
      %1872 = vmatpush1.msra.mxu0 0.0
      %1873 = vmatprep.subr.mxu0 0.0
      %1874 = vmatpush1.msra.mxu0 0.0
      %1875 = vmatprep.mubr.f32.mxu0 0.0
      %1876 = vmatmul.mubr.f32.gmra.mrb[0].mxu0 %v1332
      %v1877 = vpop.f32.mrb[0].mxu0
      %v1878 = vadd.f32 0.0, %v1877
      %v1879 = vpop.f32.mrb[0].mxu0
      %1880 = vdwg.mxu0
      %v1881 = vadd.f32 %v1803, %v1878
      %s1882 = scalar_lea.vmem %s19, 2
      %v1883 = vld [vmem:[%s1882] sm:$0x1]
      %v1885 = vlaneseq
      %v1886 = vshrl.u32 %v1885, 7
      %v1887 = vsub.s32 0, %v1886
      %v1888 = vrot.slane %v1883, %v1887
      %v1890 = vadd.f32 %v1881, %v1888
      %v1891 = vtanh.pop %v1890
      %s1892 = scalar_lea.vmem %s16, 96
      %v1893 = vld [vmem:[%s1892] sm:$0xff]
      %v1894 = vld [vmem:[%s1892 + $0x8] sm:$0xff]
      %v1895 = vld [vmem:[%s1892 + $0x10] sm:$0xff]
      %v1896 = vld [vmem:[%s1892 + $0x18] sm:$0xff]
      %s1897 = scalar_lea.vmem %s17, 48
      %v1898 = vld [vmem:[%s1897] sm:$0xff]
      %v1899 = vld [vmem:[%s1897 + $0x8] sm:$0xff]
      %1900 = vmatprep.subr.mxu0 0.0
      %1901 = vmatpush1.msra.mxu0 %v1898
      %1902 = vmatprep.subr.mxu0 0.0
      %1903 = vmatpush1.msra.mxu0 %v1899
      %1904 = vmatprep.subr.mxu0 0.0
      %1905 = vmatpush1.msra.mxu0 0.0
      %1906 = vmatprep.subr.mxu0 0.0
      %1907 = vmatpush1.msra.mxu0 0.0
      %1908 = vmatprep.subr.mxu0 0.0
      %1909 = vmatpush1.msra.mxu0 0.0
      %1910 = vmatprep.subr.mxu0 0.0
      %1911 = vmatpush1.msra.mxu0 0.0
      %1912 = vmatprep.subr.mxu0 0.0
      %1913 = vmatpush1.msra.mxu0 0.0
      %1914 = vmatprep.subr.mxu0 0.0
      %1915 = vmatpush1.msra.mxu0 0.0
      %1916 = vmatprep.subr.mxu0 0.0
      %1917 = vmatpush1.msra.mxu0 0.0
      %1918 = vmatprep.subr.mxu0 0.0
      %1919 = vmatpush1.msra.mxu0 0.0
      %1920 = vmatprep.subr.mxu0 0.0
      %1921 = vmatpush1.msra.mxu0 0.0
      %1922 = vmatprep.subr.mxu0 0.0
      %1923 = vmatpush1.msra.mxu0 0.0
      %1924 = vmatprep.subr.mxu0 0.0
      %1925 = vmatpush1.msra.mxu0 0.0
      %1926 = vmatprep.subr.mxu0 0.0
      %1927 = vmatpush1.msra.mxu0 0.0
      %1928 = vmatprep.subr.mxu0 0.0
      %1929 = vmatpush1.msra.mxu0 0.0
      %1930 = vmatprep.subr.mxu0 0.0
      %1931 = vmatpush1.msra.mxu0 0.0
      %1932 = vmatprep.subr.mxu0 0.0
      %1933 = vmatpush1.msra.mxu0 0.0
      %1934 = vmatprep.subr.mxu0 0.0
      %1935 = vmatpush1.msra.mxu0 0.0
      %1936 = vmatprep.subr.mxu0 0.0
      %1937 = vmatpush1.msra.mxu0 0.0
      %1938 = vmatprep.subr.mxu0 0.0
      %1939 = vmatpush1.msra.mxu0 0.0
      %1940 = vmatprep.subr.mxu0 0.0
      %1941 = vmatpush1.msra.mxu0 0.0
      %1942 = vmatprep.subr.mxu0 0.0
      %1943 = vmatpush1.msra.mxu0 0.0
      %1944 = vmatprep.subr.mxu0 0.0
      %1945 = vmatpush1.msra.mxu0 0.0
      %1946 = vmatprep.subr.mxu0 0.0
      %1947 = vmatpush1.msra.mxu0 0.0
      %1948 = vmatprep.subr.mxu0 0.0
      %1949 = vmatpush1.msra.mxu0 0.0
      %1950 = vmatprep.subr.mxu0 0.0
      %1951 = vmatpush1.msra.mxu0 0.0
      %1952 = vmatprep.subr.mxu0 0.0
      %1953 = vmatpush1.msra.mxu0 0.0
      %1954 = vmatprep.subr.mxu0 0.0
      %1955 = vmatpush1.msra.mxu0 0.0
      %1956 = vmatprep.subr.mxu0 0.0
      %1957 = vmatpush1.msra.mxu0 0.0
      %1958 = vmatprep.subr.mxu0 0.0
      %1959 = vmatpush1.msra.mxu0 0.0
      %1960 = vmatprep.subr.mxu0 0.0
      %1961 = vmatpush1.msra.mxu0 0.0
      %1962 = vmatprep.subr.mxu0 0.0
      %1963 = vmatpush1.msra.mxu0 0.0
      %1964 = vmatprep.mubr.f32.mxu0 0.0
      %1965 = vmatmul.mubr.f32.gmra.mrb[0].mxu0 %v1185
      %v1966 = vpop.f32.mrb[0].mxu0
      %v1967 = vadd.f32 0.0, %v1966
      %v1968 = vpop.f32.mrb[0].mxu0
      %1969 = vdwg.mxu0
      %1970 = vmatprep.subr.mxu0 0.0
      %1971 = vmatpush1.msra.mxu0 %v1893
      %1972 = vmatprep.subr.mxu0 0.0
      %1973 = vmatpush1.msra.mxu0 %v1894
      %1974 = vmatprep.subr.mxu0 0.0
      %1975 = vmatpush1.msra.mxu0 %v1895
      %1976 = vmatprep.subr.mxu0 0.0
      %1977 = vmatpush1.msra.mxu0 %v1896
      %1978 = vmatprep.subr.mxu0 0.0
      %1979 = vmatpush1.msra.mxu0 0.0
      %1980 = vmatprep.subr.mxu0 0.0
      %1981 = vmatpush1.msra.mxu0 0.0
      %1982 = vmatprep.subr.mxu0 0.0
      %1983 = vmatpush1.msra.mxu0 0.0
      %1984 = vmatprep.subr.mxu0 0.0
      %1985 = vmatpush1.msra.mxu0 0.0
      %1986 = vmatprep.subr.mxu0 0.0
      %1987 = vmatpush1.msra.mxu0 0.0
      %1988 = vmatprep.subr.mxu0 0.0
      %1989 = vmatpush1.msra.mxu0 0.0
      %1990 = vmatprep.subr.mxu0 0.0
      %1991 = vmatpush1.msra.mxu0 0.0
      %1992 = vmatprep.subr.mxu0 0.0
      %1993 = vmatpush1.msra.mxu0 0.0
      %1994 = vmatprep.subr.mxu0 0.0
      %1995 = vmatpush1.msra.mxu0 0.0
      %1996 = vmatprep.subr.mxu0 0.0
      %1997 = vmatpush1.msra.mxu0 0.0
      %1998 = vmatprep.subr.mxu0 0.0
      %1999 = vmatpush1.msra.mxu0 0.0
      %2000 = vmatprep.subr.mxu0 0.0
      %2001 = vmatpush1.msra.mxu0 0.0
      %2002 = vmatprep.subr.mxu0 0.0
      %2003 = vmatpush1.msra.mxu0 0.0
      %2004 = vmatprep.subr.mxu0 0.0
      %2005 = vmatpush1.msra.mxu0 0.0
      %2006 = vmatprep.subr.mxu0 0.0
      %2007 = vmatpush1.msra.mxu0 0.0
      %2008 = vmatprep.subr.mxu0 0.0
      %2009 = vmatpush1.msra.mxu0 0.0
      %2010 = vmatprep.subr.mxu0 0.0
      %2011 = vmatpush1.msra.mxu0 0.0
      %2012 = vmatprep.subr.mxu0 0.0
      %2013 = vmatpush1.msra.mxu0 0.0
      %2014 = vmatprep.subr.mxu0 0.0
      %2015 = vmatpush1.msra.mxu0 0.0
      %2016 = vmatprep.subr.mxu0 0.0
      %2017 = vmatpush1.msra.mxu0 0.0
      %2018 = vmatprep.subr.mxu0 0.0
      %2019 = vmatpush1.msra.mxu0 0.0
      %2020 = vmatprep.subr.mxu0 0.0
      %2021 = vmatpush1.msra.mxu0 0.0
      %2022 = vmatprep.subr.mxu0 0.0
      %2023 = vmatpush1.msra.mxu0 0.0
      %2024 = vmatprep.subr.mxu0 0.0
      %2025 = vmatpush1.msra.mxu0 0.0
      %2026 = vmatprep.subr.mxu0 0.0
      %2027 = vmatpush1.msra.mxu0 0.0
      %2028 = vmatprep.subr.mxu0 0.0
      %2029 = vmatpush1.msra.mxu0 0.0
      %2030 = vmatprep.subr.mxu0 0.0
      %2031 = vmatpush1.msra.mxu0 0.0
      %2032 = vmatprep.subr.mxu0 0.0
      %2033 = vmatpush1.msra.mxu0 0.0
      %2034 = vmatprep.mubr.f32.mxu0 0.0
      %2035 = vmatmul.mubr.f32.gmra.mrb[0].mxu0 %v792
      %v2036 = vpop.f32.mrb[0].mxu0
      %v2037 = vadd.f32 %v1967, %v2036
      %v2038 = vpop.f32.mrb[0].mxu0
      %2039 = vdwg.mxu0
      %s2040 = scalar_lea.vmem %s18, 96
      %v2041 = vld [vmem:[%s2040] sm:$0xff]
      %v2042 = vld [vmem:[%s2040 + $0x8] sm:$0xff]
      %v2043 = vld [vmem:[%s2040 + $0x10] sm:$0xff]
      %v2044 = vld [vmem:[%s2040 + $0x18] sm:$0xff]
      %2045 = vmatprep.subr.mxu0 0.0
      %2046 = vmatpush1.msra.mxu0 %v2041
      %2047 = vmatprep.subr.mxu0 0.0
      %2048 = vmatpush1.msra.mxu0 %v2042
      %2049 = vmatprep.subr.mxu0 0.0
      %2050 = vmatpush1.msra.mxu0 %v2043
      %2051 = vmatprep.subr.mxu0 0.0
      %2052 = vmatpush1.msra.mxu0 %v2044
      %2053 = vmatprep.subr.mxu0 0.0
      %2054 = vmatpush1.msra.mxu0 0.0
      %2055 = vmatprep.subr.mxu0 0.0
      %2056 = vmatpush1.msra.mxu0 0.0
      %2057 = vmatprep.subr.mxu0 0.0
      %2058 = vmatpush1.msra.mxu0 0.0
      %2059 = vmatprep.subr.mxu0 0.0
      %2060 = vmatpush1.msra.mxu0 0.0
      %2061 = vmatprep.subr.mxu0 0.0
      %2062 = vmatpush1.msra.mxu0 0.0
      %2063 = vmatprep.subr.mxu0 0.0
      %2064 = vmatpush1.msra.mxu0 0.0
      %2065 = vmatprep.subr.mxu0 0.0
      %2066 = vmatpush1.msra.mxu0 0.0
      %2067 = vmatprep.subr.mxu0 0.0
      %2068 = vmatpush1.msra.mxu0 0.0
      %2069 = vmatprep.subr.mxu0 0.0
      %2070 = vmatpush1.msra.mxu0 0.0
      %2071 = vmatprep.subr.mxu0 0.0
      %2072 = vmatpush1.msra.mxu0 0.0
      %2073 = vmatprep.subr.mxu0 0.0
      %2074 = vmatpush1.msra.mxu0 0.0
      %2075 = vmatprep.subr.mxu0 0.0
      %2076 = vmatpush1.msra.mxu0 0.0
      %2077 = vmatprep.subr.mxu0 0.0
      %2078 = vmatpush1.msra.mxu0 0.0
      %2079 = vmatprep.subr.mxu0 0.0
      %2080 = vmatpush1.msra.mxu0 0.0
      %2081 = vmatprep.subr.mxu0 0.0
      %2082 = vmatpush1.msra.mxu0 0.0
      %2083 = vmatprep.subr.mxu0 0.0
      %2084 = vmatpush1.msra.mxu0 0.0
      %2085 = vmatprep.subr.mxu0 0.0
      %2086 = vmatpush1.msra.mxu0 0.0
      %2087 = vmatprep.subr.mxu0 0.0
      %2088 = vmatpush1.msra.mxu0 0.0
      %2089 = vmatprep.subr.mxu0 0.0
      %2090 = vmatpush1.msra.mxu0 0.0
      %2091 = vmatprep.subr.mxu0 0.0
      %2092 = vmatpush1.msra.mxu0 0.0
      %2093 = vmatprep.subr.mxu0 0.0
      %2094 = vmatpush1.msra.mxu0 0.0
      %2095 = vmatprep.subr.mxu0 0.0
      %2096 = vmatpush1.msra.mxu0 0.0
      %2097 = vmatprep.subr.mxu0 0.0
      %2098 = vmatpush1.msra.mxu0 0.0
      %2099 = vmatprep.subr.mxu0 0.0
      %2100 = vmatpush1.msra.mxu0 0.0
      %2101 = vmatprep.subr.mxu0 0.0
      %2102 = vmatpush1.msra.mxu0 0.0
      %2103 = vmatprep.subr.mxu0 0.0
      %2104 = vmatpush1.msra.mxu0 0.0
      %2105 = vmatprep.subr.mxu0 0.0
      %2106 = vmatpush1.msra.mxu0 0.0
      %2107 = vmatprep.subr.mxu0 0.0
      %2108 = vmatpush1.msra.mxu0 0.0
      %2109 = vmatprep.mubr.f32.mxu0 0.0
      %2110 = vmatmul.mubr.f32.gmra.mrb[0].mxu0 %v1332
      %v2111 = vpop.f32.mrb[0].mxu0
      %v2112 = vadd.f32 0.0, %v2111
      %v2113 = vpop.f32.mrb[0].mxu0
      %2114 = vdwg.mxu0
      %v2115 = vadd.f32 %v2037, %v2112
      %s2116 = scalar_lea.vmem %s19, 3
      %v2117 = vld [vmem:[%s2116] sm:$0x1]
      %v2119 = vlaneseq
      %v2120 = vshrl.u32 %v2119, 7
      %v2121 = vsub.s32 0, %v2120
      %v2122 = vrot.slane %v2117, %v2121
      %v2124 = vadd.f32 %v2115, %v2122
      %v2125 = vxor.u32 %v2124, 2147483648
      %v2126 = vmul.f32 %v2125, 1.442695
      %v2127 = vpow.pop %v2126
      %v2128 = vadd.f32 %v2127, 1.0
      %v2129 = vrcp.pop %v2128
      %v2130 = vmul.f32 1.0, %v2129
      %v2131 = vld [vmem:[#allocation5] sm:$0x3]
      %v2132 = vmul.f32 %v1657, %v2131
      %v2133 = vmul.f32 %v1418, %v1891
      %v2134 = vadd.f32 %v2132, %v2133
      %v2135 = vtanh.pop %v2134
      %v2136 = vmul.f32 %v2130, %v2135
      %s2137 = scalar_lea.vmem %s5, %s105
      %v2138 = vld [vmem:[%s2137] sm:$0x3]
      %v2139 = vmul.f32 %v2136, %v2138
      %2140 = vst.msk [vmem:[#allocation5] sm:$0x3] %vm89, %v2134
      %2141 = vst.msk [vmem:[#allocation4] sm:$0x3] %vm89, %v2139
      %v2142 = vld [vmem:[%s20] sm:$0xff]
      %v2143 = vld [vmem:[%s20 + $0x8] sm:$0xff]
      %v2144 = vld [vmem:[%s20 + $0x10] sm:$0xff]
      %v2145 = vld [vmem:[%s20 + $0x18] sm:$0xff]
      %v2146 = vld [vmem:[%s21] sm:$0xff]
      %v2147 = vld [vmem:[%s21 + $0x8] sm:$0xff]
      %2148 = vmatprep.subr.mxu0 0.0
      %2149 = vmatpush1.msra.mxu0 %v2146
      %2150 = vmatprep.subr.mxu0 0.0
      %2151 = vmatpush1.msra.mxu0 %v2147
      %2152 = vmatprep.subr.mxu0 0.0
      %2153 = vmatpush1.msra.mxu0 0.0
      %2154 = vmatprep.subr.mxu0 0.0
      %2155 = vmatpush1.msra.mxu0 0.0
      %2156 = vmatprep.subr.mxu0 0.0
      %2157 = vmatpush1.msra.mxu0 0.0
      %2158 = vmatprep.subr.mxu0 0.0
      %2159 = vmatpush1.msra.mxu0 0.0
      %2160 = vmatprep.subr.mxu0 0.0
      %2161 = vmatpush1.msra.mxu0 0.0
      %2162 = vmatprep.subr.mxu0 0.0
      %2163 = vmatpush1.msra.mxu0 0.0
      %2164 = vmatprep.subr.mxu0 0.0
      %2165 = vmatpush1.msra.mxu0 0.0
      %2166 = vmatprep.subr.mxu0 0.0
      %2167 = vmatpush1.msra.mxu0 0.0
      %2168 = vmatprep.subr.mxu0 0.0
      %2169 = vmatpush1.msra.mxu0 0.0
      %2170 = vmatprep.subr.mxu0 0.0
      %2171 = vmatpush1.msra.mxu0 0.0
      %2172 = vmatprep.subr.mxu0 0.0
      %2173 = vmatpush1.msra.mxu0 0.0
      %2174 = vmatprep.subr.mxu0 0.0
      %2175 = vmatpush1.msra.mxu0 0.0
      %2176 = vmatprep.subr.mxu0 0.0
      %2177 = vmatpush1.msra.mxu0 0.0
      %2178 = vmatprep.subr.mxu0 0.0
      %2179 = vmatpush1.msra.mxu0 0.0
      %2180 = vmatprep.subr.mxu0 0.0
      %2181 = vmatpush1.msra.mxu0 0.0
      %2182 = vmatprep.subr.mxu0 0.0
      %2183 = vmatpush1.msra.mxu0 0.0
      %2184 = vmatprep.subr.mxu0 0.0
      %2185 = vmatpush1.msra.mxu0 0.0
      %2186 = vmatprep.subr.mxu0 0.0
      %2187 = vmatpush1.msra.mxu0 0.0
      %2188 = vmatprep.subr.mxu0 0.0
      %2189 = vmatpush1.msra.mxu0 0.0
      %2190 = vmatprep.subr.mxu0 0.0
      %2191 = vmatpush1.msra.mxu0 0.0
      %2192 = vmatprep.subr.mxu0 0.0
      %2193 = vmatpush1.msra.mxu0 0.0
      %2194 = vmatprep.subr.mxu0 0.0
      %2195 = vmatpush1.msra.mxu0 0.0
      %2196 = vmatprep.subr.mxu0 0.0
      %2197 = vmatpush1.msra.mxu0 0.0
      %2198 = vmatprep.subr.mxu0 0.0
      %2199 = vmatpush1.msra.mxu0 0.0
      %2200 = vmatprep.subr.mxu0 0.0
      %2201 = vmatpush1.msra.mxu0 0.0
      %2202 = vmatprep.subr.mxu0 0.0
      %2203 = vmatpush1.msra.mxu0 0.0
      %2204 = vmatprep.subr.mxu0 0.0
      %2205 = vmatpush1.msra.mxu0 0.0
      %2206 = vmatprep.subr.mxu0 0.0
      %2207 = vmatpush1.msra.mxu0 0.0
      %2208 = vmatprep.subr.mxu0 0.0
      %2209 = vmatpush1.msra.mxu0 0.0
      %2210 = vmatprep.subr.mxu0 0.0
      %2211 = vmatpush1.msra.mxu0 0.0
      %2212 = vmatprep.mubr.f32.mxu0 0.0
      %2213 = vmatmul.mubr.f32.gmra.mrb[0].mxu0 %v1185
      %v2214 = vpop.f32.mrb[0].mxu0
      %v2215 = vadd.f32 0.0, %v2214
      %v2216 = vpop.f32.mrb[0].mxu0
      %2217 = vdwg.mxu0
      %v2219 = vsel %vm197, %v2139, 0
      %2221 = vmatprep.subr.mxu0 0.0
      %2222 = vmatpush1.msra.mxu0 %v2142
      %2223 = vmatprep.subr.mxu0 0.0
      %2224 = vmatpush1.msra.mxu0 %v2143
      %2225 = vmatprep.subr.mxu0 0.0
      %2226 = vmatpush1.msra.mxu0 %v2144
      %2227 = vmatprep.subr.mxu0 0.0
      %2228 = vmatpush1.msra.mxu0 %v2145
      %2229 = vmatprep.subr.mxu0 0.0
      %2230 = vmatpush1.msra.mxu0 0.0
      %2231 = vmatprep.subr.mxu0 0.0
      %2232 = vmatpush1.msra.mxu0 0.0
      %2233 = vmatprep.subr.mxu0 0.0
      %2234 = vmatpush1.msra.mxu0 0.0
      %2235 = vmatprep.subr.mxu0 0.0
      %2236 = vmatpush1.msra.mxu0 0.0
      %2237 = vmatprep.subr.mxu0 0.0
      %2238 = vmatpush1.msra.mxu0 0.0
      %2239 = vmatprep.subr.mxu0 0.0
      %2240 = vmatpush1.msra.mxu0 0.0
      %2241 = vmatprep.subr.mxu0 0.0
      %2242 = vmatpush1.msra.mxu0 0.0
      %2243 = vmatprep.subr.mxu0 0.0
      %2244 = vmatpush1.msra.mxu0 0.0
      %2245 = vmatprep.subr.mxu0 0.0
      %2246 = vmatpush1.msra.mxu0 0.0
      %2247 = vmatprep.subr.mxu0 0.0
      %2248 = vmatpush1.msra.mxu0 0.0
      %2249 = vmatprep.subr.mxu0 0.0
      %2250 = vmatpush1.msra.mxu0 0.0
      %2251 = vmatprep.subr.mxu0 0.0
      %2252 = vmatpush1.msra.mxu0 0.0
      %2253 = vmatprep.subr.mxu0 0.0
      %2254 = vmatpush1.msra.mxu0 0.0
      %2255 = vmatprep.subr.mxu0 0.0
      %2256 = vmatpush1.msra.mxu0 0.0
      %2257 = vmatprep.subr.mxu0 0.0
      %2258 = vmatpush1.msra.mxu0 0.0
      %2259 = vmatprep.subr.mxu0 0.0
      %2260 = vmatpush1.msra.mxu0 0.0
      %2261 = vmatprep.subr.mxu0 0.0
      %2262 = vmatpush1.msra.mxu0 0.0
      %2263 = vmatprep.subr.mxu0 0.0
      %2264 = vmatpush1.msra.mxu0 0.0
      %2265 = vmatprep.subr.mxu0 0.0
      %2266 = vmatpush1.msra.mxu0 0.0
      %2267 = vmatprep.subr.mxu0 0.0
      %2268 = vmatpush1.msra.mxu0 0.0
      %2269 = vmatprep.subr.mxu0 0.0
      %2270 = vmatpush1.msra.mxu0 0.0
      %2271 = vmatprep.subr.mxu0 0.0
      %2272 = vmatpush1.msra.mxu0 0.0
      %2273 = vmatprep.subr.mxu0 0.0
      %2274 = vmatpush1.msra.mxu0 0.0
      %2275 = vmatprep.subr.mxu0 0.0
      %2276 = vmatpush1.msra.mxu0 0.0
      %2277 = vmatprep.subr.mxu0 0.0
      %2278 = vmatpush1.msra.mxu0 0.0
      %2279 = vmatprep.subr.mxu0 0.0
      %2280 = vmatpush1.msra.mxu0 0.0
      %2281 = vmatprep.subr.mxu0 0.0
      %2282 = vmatpush1.msra.mxu0 0.0
      %2283 = vmatprep.subr.mxu0 0.0
      %2284 = vmatpush1.msra.mxu0 0.0
      %2285 = vmatprep.mubr.f32.mxu0 0.0
      %2286 = vmatmul.mubr.f32.gmra.mrb[0].mxu0 %v2219
      %v2287 = vpop.f32.mrb[0].mxu0
      %v2288 = vadd.f32 %v2215, %v2287
      %v2289 = vpop.f32.mrb[0].mxu0
      %2290 = vdwg.mxu0
      %v2291 = vld [vmem:[%s22] sm:$0x1]
      %v2293 = vlaneseq
      %v2294 = vshrl.u32 %v2293, 7
      %v2295 = vsub.s32 0, %v2294
      %v2296 = vrot.slane %v2291, %v2295
      %v2298 = vadd.f32 %v2288, %v2296
      %v2299 = vld [vmem:[%s23] sm:$0x1]
      %v2301 = vlaneseq
      %v2302 = vshrl.u32 %v2301, 7
      %v2303 = vsub.s32 0, %v2302
      %v2304 = vrot.slane %v2299, %v2303
      %v2306 = vmul.f32 %v2139, %v2304
      %v2307 = vsel %vm89, %v2306, 0.0
      %2308 = vadd.xlane.f32.xlu0 %v2307
      %v2309 = vpop.xlane.xlu0 %2308
      %v2310 = vld [vmem:[%s24] sm:$0x1]
      %v2312 = vlaneseq
      %v2313 = vshrl.u32 %v2312, 7
      %v2314 = vsub.s32 0, %v2313
      %v2315 = vrot.slane %v2310, %v2314
      %v2317 = vmul.f32 %v1150, %v2315
      %v2318 = vmul.f32 %v1157, %v2315
      %v2321 = vrot.slane %v2318, 7
      %v2322 = vsel %vm1070, %v2321, %v2317
      %v2324 = vsel %vm94, %v2322, 0.0
      %2325 = vadd.xlane.f32.xlu0 %v2324
      %v2326 = vpop.xlane.xlu0 %2325
      %v2327 = vadd.f32 %v2309, %v2326
      %v2328 = vld [vmem:[#allocation9] sm:$0x1]
      %v2330 = vlaneseq
      %v2331 = vshrl.u32 %v2330, 7
      %v2332 = vsub.s32 0, %v2331
      %v2333 = vrot.slane %v2328, %v2332
      %v2335 = vadd.f32 %v2327, %v2333
      %s2336 = scalar_lea.vmem %s26, %s105
      %2337 = vst.msk [vmem:[%s2336] sm:$0x3] %vm94, %v2298
      %s2338 = scalar_lea.vmem %s27, %s105
      %vm2339 = vcmask 1024
      %2340 = vst.msk [vmem:[%s2338] sm:$0x3] %vm2339, %v2335
      %v2341 = vlaneseq
      %v2342 = vshrl.u32 %v2341, 7
      %v2343 = vsub.s32 %v1061, %v2342
      %v2344 = vrot.slane %v1135, %v2343
      %v2345 = vlaneseq
      %v2346 = vshrl.u32 %v2345, 7
      %v2347 = vsub.s32 %v1061, %v2346
      %v2348 = vrot.slane %v1140, %v2347
      %v2349 = vsel %vm1070, %v2348, %v2344
      %s2351 = scalar_lea.vmem [#allocation10], %s105
      %2352 = vst.msk [vmem:[%s2351] sm:$0x3] %vm1073, %v2349
    $region110: #{_lambda_.1} parent=1 // loop_footer
      %s104 = sadd.s32 1, %s100
    $region111: #{_lambda_.1} parent=1 // loop_footer_branch
      %99 = sbr.rel target = $region107
    $region112: #{_lambda_.1} parent=1 // loop_exit
      _
    // Predicated region
    $region113: #{_lambda_.1} parent=1 // pred_check
      _
    $region114: #{_lambda_.1} parent=1 // pred_check_branch
      %2354 = sbr.rel (0) target = $region116
    $region115: #{_lambda_.1} parent=1 // pred_region
      _
    $region116: #{_lambda_.1} parent=1 // pred_fallthru
      _
    // Predicated region
    $region117: #{_lambda_.1} parent=1 // pred_check
      _
    $region118: #{_lambda_.1} parent=1 // pred_check_branch
      %2356 = sbr.rel (0) target = $region120
    $region119: #{_lambda_.1} parent=1 // pred_region
      _
    $region120: #{_lambda_.1} parent=1 // pred_fallthru
      _
    // Predicated region
    $region121: #{_lambda_.1} parent=1 // pred_check
      _
    $region122: #{_lambda_.1} parent=1 // pred_check_branch
      %2358 = sbr.rel (0) target = $region124
    $region123: #{_lambda_.1} parent=1 // pred_region
      %s2360 = ssub.s32 192, 192
      %2361 = vsyncadd [#allocation11], %s2360
      %s2362 = sshll.u32 [#allocation10], 4
      %s2363 = int_to_ptr.vmem [resolvable:$true] %s2362
      %2368 = dma.vmem_to_hbm [thread:$0]  %s2363, 192, %s28, [#allocation11], 32, 32, 2
    $region124: #{_lambda_.1} parent=1 // pred_fallthru
      _
    // Predicated region
    $region125: #{_lambda_.1} parent=1 // pred_check
      _
    $region126: #{_lambda_.1} parent=1 // pred_check_branch
      %2370 = sbr.rel (0) target = $region128
    $region127: #{_lambda_.1} parent=1 // pred_region
      _
    $region128: #{_lambda_.1} parent=1 // pred_fallthru
      _
    // Predicated region
    $region129: #{_lambda_.1} parent=1 // pred_check
      _
    $region130: #{_lambda_.1} parent=1 // pred_check_branch
      %2372 = sbr.rel (0) target = $region132
    $region131: #{_lambda_.1} parent=1 // pred_region
      _
    $region132: #{_lambda_.1} parent=1 // pred_fallthru
      _
    // Predicated region
    $region133: #{_lambda_.1} parent=1 // pred_check
      _
    $region134: #{_lambda_.1} parent=1 // pred_check_branch
      %2374 = sbr.rel (0) target = $region136
    $region135: #{_lambda_.1} parent=1 // pred_region
      %2375 = dma.done [#allocation11], 192
    $region136: #{_lambda_.1} parent=1 // pred_fallthru
      _
    %2376 = vsyncpa [#allocation11], 1

</llo_original>
